<compile_context>
chip_gen: v7x
topology: tpu7x:2x2x1
jax: 0.10.0
libtpu: 0.0.40
codegen_flags: <defaults>
</compile_context>

<pallas_src>
import functools

import jax
import jax.numpy as jnp
from jax.experimental import pallas as pl
from jax.experimental.pallas import tpu as pltpu

BN_EPS = 1e-5
VMEM_LIMIT = 32 * 1024 * 1024   # safe on v5e/v6e (128 MiB) and v7x (64 MiB)


# ---------------------------------------------------------------------------
# Kernel 1: implicit-GEMM 3x3 conv (pad=1, stride=1) + folded BN + ReLU
#           + fused global-average-pool partial sums
# ---------------------------------------------------------------------------
def _conv_bn_relu_gap_kernel(x_ref, w_ref, s_ref, b_ref, feat_ref, sum_ref):
    """x_ref:    [1, H+2, W+2, Cin]  bf16 (spatially pre-padded image)
       w_ref:    [3, 3, Cin, Cout]   bf16
       s_ref:    [1, Cout]           f32  (folded BN scale)
       b_ref:    [1, Cout]           f32  (folded BN bias)
       feat_ref: [1, H, W, Cout]     f32
       sum_ref:  [1, 1, Cout]        f32  (per-image channel sums for GAP)
    """
    _, hp2, wp2, cin = x_ref.shape
    h, w = hp2 - 2, wp2 - 2
    cout = w_ref.shape[-1]

    xv = x_ref[0]          # [H+2, W+2, Cin], single VMEM load
    wv = w_ref[...]        # [3, 3, Cin, Cout]

    # 9-tap implicit GEMM, f32 accumulation in registers (no scratch needed).
    acc = jnp.zeros((h * w, cout), jnp.float32)
    for dy in range(3):
        for dx in range(3):
            patch = xv[dy:dy + h, dx:dx + w, :].reshape(h * w, cin)
            acc = acc + jnp.dot(patch, wv[dy, dx],
                                preferred_element_type=jnp.float32)

    # fused epilogue: folded BatchNorm affine + ReLU
    y = acc * s_ref[...] + b_ref[...]          # [H*W, Cout] * [1, Cout]
    y = jnp.maximum(y, 0.0)

    feat_ref[...] = y.reshape(1, h, w, cout)
    sum_ref[...] = jnp.sum(y, axis=0, keepdims=True).reshape(1, 1, cout)


def conv_bn_relu_gap(x_nhwc, w, scale, bias):
    """feat = relu(bn(conv3x3(x))) plus per-image channel sums.

    x_nhwc: [N, H, W, Cin] f32; w: [3, 3, Cin, Cout]; scale/bias: [Cout].
    Returns (feat [N, H, W, Cout] f32, sums [N, 1, Cout] f32).
    """
    n, h, wd, cin = x_nhwc.shape
    cout = w.shape[-1]
    assert wd % 8 == 0, "W must be a multiple of 8 for tile-friendly reshapes"

    # halo pad (conv padding=1) + bf16 GEMM operands (f32 accumulate in-kernel)
    xp = jnp.pad(x_nhwc, ((0, 0), (1, 1), (1, 1), (0, 0))).astype(jnp.bfloat16)
    wb = w.astype(jnp.bfloat16)
    s2 = scale.reshape(1, cout).astype(jnp.float32)
    b2 = bias.reshape(1, cout).astype(jnp.float32)

    feat, sums = pl.pallas_call(
        _conv_bn_relu_gap_kernel,
        out_shape=(jax.ShapeDtypeStruct((n, h, wd, cout), jnp.float32),
                   jax.ShapeDtypeStruct((n, 1, cout), jnp.float32)),
        grid_spec=pltpu.PrefetchScalarGridSpec(
            num_scalar_prefetch=0,
            grid=(n,),
            in_specs=[
                pl.BlockSpec((1, h + 2, wd + 2, cin), lambda i: (i, 0, 0, 0)),
                pl.BlockSpec((3, 3, cin, cout), lambda i: (0, 0, 0, 0)),
                pl.BlockSpec((1, cout), lambda i: (0, 0)),
                pl.BlockSpec((1, cout), lambda i: (0, 0)),
            ],
            out_specs=[
                pl.BlockSpec((1, h, wd, cout), lambda i: (i, 0, 0, 0)),
                pl.BlockSpec((1, 1, cout), lambda i: (i, 0, 0)),
            ],
        ),
        compiler_params=pltpu.CompilerParams(
            dimension_semantics=("parallel",),     # batch steps -> both v7x TCs
            vmem_limit_bytes=VMEM_LIMIT),
    )(xp, wb, s2, b2)
    return feat, sums


# ---------------------------------------------------------------------------
# Kernel 2: fused broadcast multiply  out = feat * att  (channel attention)
# ---------------------------------------------------------------------------
def _scale_by_attention_kernel(feat_ref, att_ref, o_ref):
    # feat_ref: [1, H, W, C] f32, att_ref: [1, 1, 1, C] f32
    o_ref[...] = feat_ref[...] * att_ref[...]


def scale_by_attention(feat, att):
    """feat: [N, H, W, C] f32, att: [N, C] f32 -> feat * att (broadcast)."""
    n, h, w, c = feat.shape
    att4 = att.reshape(n, 1, 1, c).astype(jnp.float32)
    return pl.pallas_call(
        _scale_by_attention_kernel,
        out_shape=jax.ShapeDtypeStruct((n, h, w, c), jnp.float32),
        grid_spec=pltpu.PrefetchScalarGridSpec(
            num_scalar_prefetch=0,
            grid=(n,),
            in_specs=[
                pl.BlockSpec((1, h, w, c), lambda i: (i, 0, 0, 0)),
                pl.BlockSpec((1, 1, 1, c), lambda i: (i, 0, 0, 0)),
            ],
            out_specs=pl.BlockSpec((1, h, w, c), lambda i: (i, 0, 0, 0)),
        ),
        compiler_params=pltpu.CompilerParams(
            dimension_semantics=("parallel",),
            vmem_limit_bytes=VMEM_LIMIT),
    )(feat, att4)


# ---------------------------------------------------------------------------
# Parameters (deterministic; eval-mode BN folded to scale/bias)
# ---------------------------------------------------------------------------
def _fold_bn(key, c):
    k1, k2, k3, k4 = jax.random.split(key, 4)
    gamma = 1.0 + 0.1 * jax.random.normal(k1, (c,), jnp.float32)
    beta = 0.1 * jax.random.normal(k2, (c,), jnp.float32)
    mean = 0.1 * jax.random.normal(k3, (c,), jnp.float32)
    var = 0.9 + 0.2 * jax.random.uniform(k4, (c,), jnp.float32)
    scale = gamma / jnp.sqrt(var + BN_EPS)
    bias = beta - mean * scale
    return scale, bias


def init_arm_params(key, in_chan, out_chan):
    k1, k2, k3, k4 = jax.random.split(key, 4)
    fan_in = 9 * in_chan
    w_conv = (jax.random.normal(k1, (3, 3, in_chan, out_chan), jnp.float32)
              / jnp.sqrt(fan_in))
    conv_scale, conv_bias = _fold_bn(k2, out_chan)
    w_att = (jax.random.normal(k3, (out_chan, out_chan), jnp.float32)
             / jnp.sqrt(out_chan))
    att_scale, att_bias = _fold_bn(k4, out_chan)
    return {"w_conv": w_conv, "conv_scale": conv_scale, "conv_bias": conv_bias,
            "w_att": w_att, "att_scale": att_scale, "att_bias": att_bias}


# ---------------------------------------------------------------------------
# AttentionRefinementModule forward (NCHW in / NCHW out, like PyTorch)
# ---------------------------------------------------------------------------
def attention_refinement_forward(params, x_nchw):
    x = jnp.transpose(x_nchw, (0, 2, 3, 1)).astype(jnp.float32)   # -> NHWC
    _, h, w, _ = x.shape

    # feat = relu(bn(conv3x3(x)))  [+ fused GAP partial sums, one Pallas kernel]
    feat, sums = conv_bn_relu_gap(x, params["w_conv"],
                                  params["conv_scale"], params["conv_bias"])

    # attention: AdaptiveAvgPool2d(1) -> 1x1 conv (bias=False) -> BN -> sigmoid
    # M = batch (tiny) -> plain jnp; a Pallas launch would be pure overhead.
    g = sums[:, 0, :] / float(h * w)                               # [N, Cout]
    att = jax.nn.sigmoid(g @ params["w_att"] * params["att_scale"]
                         + params["att_bias"])                     # [N, Cout]

    out = scale_by_attention(feat, att)                            # feat * att
    return jnp.transpose(out, (0, 3, 1, 2))                        # -> NCHW


if __name__ == "__main__":
    key = jax.random.PRNGKey(0)
    pkey, xkey = jax.random.split(key)

    BATCH, IN_CHAN, OUT_CHAN, H, W = 2, 16, 32, 16, 16
    params = init_arm_params(pkey, IN_CHAN, OUT_CHAN)
    x = jax.random.normal(xkey, (BATCH, IN_CHAN, H, W), jnp.float32)  # NCHW

    fwd = jax.jit(functools.partial(attention_refinement_forward, params))
    out = jax.block_until_ready(fwd(x))

    assert out.shape == (BATCH, OUT_CHAN, H, W), out.shape
    assert bool(jnp.isfinite(out).all())
    print("KERNEL_OK")
</pallas_src>

<mosaic_0001>
module attributes {stable_mosaic.version = 11 : i64} {
  func.func @_conv_bn_relu_gap_kernel(%arg0: i32, %arg1: memref<1x18x18x16xbf16, #tpu.memory_space<vmem>>, %arg2: memref<3x3x16x32xbf16, #tpu.memory_space<vmem>>, %arg3: memref<1x32xf32, #tpu.memory_space<vmem>>, %arg4: memref<1x32xf32, #tpu.memory_space<vmem>>, %arg5: memref<1x16x16x32xf32, #tpu.memory_space<vmem>>, %arg6: memref<1x1x32xf32, #tpu.memory_space<vmem>>) attributes {dimension_semantics = [#tpu.dimension_semantics<parallel>], iteration_bounds = array<i64: 2>, scalar_prefetch = 0 : i64, scratch_operands = 0 : i64, tpu.core_type = #tpu.core_type<tc>, window_params = [{transform_indices = @transform_0, window_bounds = array<i64: 1, 18, 18, 16>}, {pipeline_mode = #tpu.pipeline_mode<synchronous>, transform_indices = @transform_1, window_bounds = array<i64: 3, 3, 16, 32>}, {pipeline_mode = #tpu.pipeline_mode<synchronous>, transform_indices = @transform_2, window_bounds = array<i64: 1, 32>}, {pipeline_mode = #tpu.pipeline_mode<synchronous>, transform_indices = @transform_3, window_bounds = array<i64: 1, 32>}, {transform_indices = @transform_4, window_bounds = array<i64: 1, 16, 16, 32>}, {transform_indices = @transform_5, window_bounds = array<i64: 1, 1, 32>}]} {
    %c0 = arith.constant 0 : index
    %c0_0 = arith.constant 0 : index
    %c0_1 = arith.constant 0 : index
    %c0_2 = arith.constant 0 : index
    %0 = vector.load %arg1[%c0, %c0_0, %c0_1, %c0_2] : memref<1x18x18x16xbf16, #tpu.memory_space<vmem>>, vector<1x18x18x16xbf16>
    %1 = vector.shape_cast %0 : vector<1x18x18x16xbf16> to vector<18x18x16xbf16>
    %c0_3 = arith.constant 0 : index
    %c0_4 = arith.constant 0 : index
    %c0_5 = arith.constant 0 : index
    %c0_6 = arith.constant 0 : index
    %2 = vector.load %arg2[%c0_3, %c0_4, %c0_5, %c0_6] : memref<3x3x16x32xbf16, #tpu.memory_space<vmem>>, vector<3x3x16x32xbf16>
    %cst = arith.constant 0.000000e+00 : f32
    %3 = vector.broadcast %cst : f32 to vector<256x32xf32>
    %4 = vector.extract_strided_slice %1 {offsets = [0, 0, 0], sizes = [16, 16, 16], strides = [1, 1, 1]} : vector<18x18x16xbf16> to vector<16x16x16xbf16>
    %5 = vector.shape_cast %4 : vector<16x16x16xbf16> to vector<256x16xbf16>
    %6 = vector.extract_strided_slice %2 {offsets = [0, 0, 0, 0], sizes = [1, 1, 16, 32], strides = [1, 1, 1, 1]} : vector<3x3x16x32xbf16> to vector<1x1x16x32xbf16>
    %7 = vector.shape_cast %6 : vector<1x1x16x32xbf16> to vector<16x32xbf16>
    %cst_7 = arith.constant dense<0.000000e+00> : vector<256x32xf32>
    %8 = tpu.matmul %5, %7, %cst_7 {dimension_numbers = #tpu.dot_dimension_numbers<[1], [0], [0], [1], [0, 0, 1, 1], [], []>} : vector<256x16xbf16>, vector<16x32xbf16>, vector<256x32xf32> -> vector<256x32xf32>
    %9 = arith.addf %3, %8 : vector<256x32xf32>
    %10 = vector.extract_strided_slice %1 {offsets = [0, 1, 0], sizes = [16, 16, 16], strides = [1, 1, 1]} : vector<18x18x16xbf16> to vector<16x16x16xbf16>
    %11 = vector.shape_cast %10 : vector<16x16x16xbf16> to vector<256x16xbf16>
    %12 = vector.extract_strided_slice %2 {offsets = [0, 1, 0, 0], sizes = [1, 1, 16, 32], strides = [1, 1, 1, 1]} : vector<3x3x16x32xbf16> to vector<1x1x16x32xbf16>
    %13 = vector.shape_cast %12 : vector<1x1x16x32xbf16> to vector<16x32xbf16>
    %cst_8 = arith.constant dense<0.000000e+00> : vector<256x32xf32>
    %14 = tpu.matmul %11, %13, %cst_8 {dimension_numbers = #tpu.dot_dimension_numbers<[1], [0], [0], [1], [0, 0, 1, 1], [], []>} : vector<256x16xbf16>, vector<16x32xbf16>, vector<256x32xf32> -> vector<256x32xf32>
    %15 = arith.addf %9, %14 : vector<256x32xf32>
    %16 = vector.extract_strided_slice %1 {offsets = [0, 2, 0], sizes = [16, 16, 16], strides = [1, 1, 1]} : vector<18x18x16xbf16> to vector<16x16x16xbf16>
    %17 = vector.shape_cast %16 : vector<16x16x16xbf16> to vector<256x16xbf16>
    %18 = vector.extract_strided_slice %2 {offsets = [0, 2, 0, 0], sizes = [1, 1, 16, 32], strides = [1, 1, 1, 1]} : vector<3x3x16x32xbf16> to vector<1x1x16x32xbf16>
    %19 = vector.shape_cast %18 : vector<1x1x16x32xbf16> to vector<16x32xbf16>
    %cst_9 = arith.constant dense<0.000000e+00> : vector<256x32xf32>
    %20 = tpu.matmul %17, %19, %cst_9 {dimension_numbers = #tpu.dot_dimension_numbers<[1], [0], [0], [1], [0, 0, 1, 1], [], []>} : vector<256x16xbf16>, vector<16x32xbf16>, vector<256x32xf32> -> vector<256x32xf32>
    %21 = arith.addf %15, %20 : vector<256x32xf32>
    %22 = vector.extract_strided_slice %1 {offsets = [1, 0, 0], sizes = [16, 16, 16], strides = [1, 1, 1]} : vector<18x18x16xbf16> to vector<16x16x16xbf16>
    %23 = vector.shape_cast %22 : vector<16x16x16xbf16> to vector<256x16xbf16>
    %24 = vector.extract_strided_slice %2 {offsets = [1, 0, 0, 0], sizes = [1, 1, 16, 32], strides = [1, 1, 1, 1]} : vector<3x3x16x32xbf16> to vector<1x1x16x32xbf16>
    %25 = vector.shape_cast %24 : vector<1x1x16x32xbf16> to vector<16x32xbf16>
    %cst_10 = arith.constant dense<0.000000e+00> : vector<256x32xf32>
    %26 = tpu.matmul %23, %25, %cst_10 {dimension_numbers = #tpu.dot_dimension_numbers<[1], [0], [0], [1], [0, 0, 1, 1], [], []>} : vector<256x16xbf16>, vector<16x32xbf16>, vector<256x32xf32> -> vector<256x32xf32>
    %27 = arith.addf %21, %26 : vector<256x32xf32>
    %28 = vector.extract_strided_slice %1 {offsets = [1, 1, 0], sizes = [16, 16, 16], strides = [1, 1, 1]} : vector<18x18x16xbf16> to vector<16x16x16xbf16>
    %29 = vector.shape_cast %28 : vector<16x16x16xbf16> to vector<256x16xbf16>
    %30 = vector.extract_strided_slice %2 {offsets = [1, 1, 0, 0], sizes = [1, 1, 16, 32], strides = [1, 1, 1, 1]} : vector<3x3x16x32xbf16> to vector<1x1x16x32xbf16>
    %31 = vector.shape_cast %30 : vector<1x1x16x32xbf16> to vector<16x32xbf16>
    %cst_11 = arith.constant dense<0.000000e+00> : vector<256x32xf32>
    %32 = tpu.matmul %29, %31, %cst_11 {dimension_numbers = #tpu.dot_dimension_numbers<[1], [0], [0], [1], [0, 0, 1, 1], [], []>} : vector<256x16xbf16>, vector<16x32xbf16>, vector<256x32xf32> -> vector<256x32xf32>
    %33 = arith.addf %27, %32 : vector<256x32xf32>
    %34 = vector.extract_strided_slice %1 {offsets = [1, 2, 0], sizes = [16, 16, 16], strides = [1, 1, 1]} : vector<18x18x16xbf16> to vector<16x16x16xbf16>
    %35 = vector.shape_cast %34 : vector<16x16x16xbf16> to vector<256x16xbf16>
    %36 = vector.extract_strided_slice %2 {offsets = [1, 2, 0, 0], sizes = [1, 1, 16, 32], strides = [1, 1, 1, 1]} : vector<3x3x16x32xbf16> to vector<1x1x16x32xbf16>
    %37 = vector.shape_cast %36 : vector<1x1x16x32xbf16> to vector<16x32xbf16>
    %cst_12 = arith.constant dense<0.000000e+00> : vector<256x32xf32>
    %38 = tpu.matmul %35, %37, %cst_12 {dimension_numbers = #tpu.dot_dimension_numbers<[1], [0], [0], [1], [0, 0, 1, 1], [], []>} : vector<256x16xbf16>, vector<16x32xbf16>, vector<256x32xf32> -> vector<256x32xf32>
    %39 = arith.addf %33, %38 : vector<256x32xf32>
    %40 = vector.extract_strided_slice %1 {offsets = [2, 0, 0], sizes = [16, 16, 16], strides = [1, 1, 1]} : vector<18x18x16xbf16> to vector<16x16x16xbf16>
    %41 = vector.shape_cast %40 : vector<16x16x16xbf16> to vector<256x16xbf16>
    %42 = vector.extract_strided_slice %2 {offsets = [2, 0, 0, 0], sizes = [1, 1, 16, 32], strides = [1, 1, 1, 1]} : vector<3x3x16x32xbf16> to vector<1x1x16x32xbf16>
    %43 = vector.shape_cast %42 : vector<1x1x16x32xbf16> to vector<16x32xbf16>
    %cst_13 = arith.constant dense<0.000000e+00> : vector<256x32xf32>
    %44 = tpu.matmul %41, %43, %cst_13 {dimension_numbers = #tpu.dot_dimension_numbers<[1], [0], [0], [1], [0, 0, 1, 1], [], []>} : vector<256x16xbf16>, vector<16x32xbf16>, vector<256x32xf32> -> vector<256x32xf32>
    %45 = arith.addf %39, %44 : vector<256x32xf32>
    %46 = vector.extract_strided_slice %1 {offsets = [2, 1, 0], sizes = [16, 16, 16], strides = [1, 1, 1]} : vector<18x18x16xbf16> to vector<16x16x16xbf16>
    %47 = vector.shape_cast %46 : vector<16x16x16xbf16> to vector<256x16xbf16>
    %48 = vector.extract_strided_slice %2 {offsets = [2, 1, 0, 0], sizes = [1, 1, 16, 32], strides = [1, 1, 1, 1]} : vector<3x3x16x32xbf16> to vector<1x1x16x32xbf16>
    %49 = vector.shape_cast %48 : vector<1x1x16x32xbf16> to vector<16x32xbf16>
    %cst_14 = arith.constant dense<0.000000e+00> : vector<256x32xf32>
    %50 = tpu.matmul %47, %49, %cst_14 {dimension_numbers = #tpu.dot_dimension_numbers<[1], [0], [0], [1], [0, 0, 1, 1], [], []>} : vector<256x16xbf16>, vector<16x32xbf16>, vector<256x32xf32> -> vector<256x32xf32>
    %51 = arith.addf %45, %50 : vector<256x32xf32>
    %52 = vector.extract_strided_slice %1 {offsets = [2, 2, 0], sizes = [16, 16, 16], strides = [1, 1, 1]} : vector<18x18x16xbf16> to vector<16x16x16xbf16>
    %53 = vector.shape_cast %52 : vector<16x16x16xbf16> to vector<256x16xbf16>
    %54 = vector.extract_strided_slice %2 {offsets = [2, 2, 0, 0], sizes = [1, 1, 16, 32], strides = [1, 1, 1, 1]} : vector<3x3x16x32xbf16> to vector<1x1x16x32xbf16>
    %55 = vector.shape_cast %54 : vector<1x1x16x32xbf16> to vector<16x32xbf16>
    %cst_15 = arith.constant dense<0.000000e+00> : vector<256x32xf32>
    %56 = tpu.matmul %53, %55, %cst_15 {dimension_numbers = #tpu.dot_dimension_numbers<[1], [0], [0], [1], [0, 0, 1, 1], [], []>} : vector<256x16xbf16>, vector<16x32xbf16>, vector<256x32xf32> -> vector<256x32xf32>
    %57 = arith.addf %51, %56 : vector<256x32xf32>
    %c0_16 = arith.constant 0 : index
    %c0_17 = arith.constant 0 : index
    %58 = vector.load %arg3[%c0_16, %c0_17] : memref<1x32xf32, #tpu.memory_space<vmem>>, vector<1x32xf32>
    %59 = vector.broadcast %58 : vector<1x32xf32> to vector<256x32xf32>
    %60 = arith.mulf %57, %59 : vector<256x32xf32>
    %c0_18 = arith.constant 0 : index
    %c0_19 = arith.constant 0 : index
    %61 = vector.load %arg4[%c0_18, %c0_19] : memref<1x32xf32, #tpu.memory_space<vmem>>, vector<1x32xf32>
    %62 = vector.broadcast %61 : vector<1x32xf32> to vector<256x32xf32>
    %63 = arith.addf %60, %62 : vector<256x32xf32>
    %cst_20 = arith.constant 0.000000e+00 : f32
    %64 = vector.broadcast %cst_20 : f32 to vector<256x32xf32>
    %65 = arith.maximumf %63, %64 : vector<256x32xf32>
    %66 = vector.shape_cast %65 : vector<256x32xf32> to vector<1x16x16x32xf32>
    %c0_21 = arith.constant 0 : index
    %c0_22 = arith.constant 0 : index
    %c0_23 = arith.constant 0 : index
    %c0_24 = arith.constant 0 : index
    %67 = vector.load %arg5[%c0_21, %c0_22, %c0_23, %c0_24] : memref<1x16x16x32xf32, #tpu.memory_space<vmem>>, vector<1x16x16x32xf32>
    tpu.vector_store %arg5[%c0_21, %c0_22, %c0_23, %c0_24], %66 {strides = array<i32>} : memref<1x16x16x32xf32, #tpu.memory_space<vmem>>, vector<1x16x16x32xf32>,
    %cst_25 = arith.constant dense<0.000000e+00> : vector<32xf32>
    %68 = vector.multi_reduction <add>, %65, %cst_25 [0] : vector<256x32xf32> to vector<32xf32>
    %69 = vector.shape_cast %68 : vector<32xf32> to vector<1x32xf32>
    %70 = vector.shape_cast %69 : vector<1x32xf32> to vector<1x1x32xf32>
    %c0_26 = arith.constant 0 : index
    %c0_27 = arith.constant 0 : index
    %c0_28 = arith.constant 0 : index
    %71 = vector.load %arg6[%c0_26, %c0_27, %c0_28] : memref<1x1x32xf32, #tpu.memory_space<vmem>>, vector<1x1x32xf32>
    tpu.vector_store %arg6[%c0_26, %c0_27, %c0_28], %70 {strides = array<i32>} : memref<1x1x32xf32, #tpu.memory_space<vmem>>, vector<1x1x32xf32>,
    return
  }
  func.func @transform_0(%arg0: i32) -> (i32, i32, i32, i32) {
    %c0_i32 = arith.constant 0 : i32
    %c0_i32_0 = arith.constant 0 : i32
    %c0_i32_1 = arith.constant 0 : i32
    %c0_i32_2 = arith.constant 0 : i32
    return %arg0, %c0_i32, %c0_i32_0, %c0_i32_1 : i32, i32, i32, i32
  }
  func.func @transform_1(%arg0: i32) -> (i32, i32, i32, i32) {
    %c0_i32 = arith.constant 0 : i32
    %c0_i32_0 = arith.constant 0 : i32
    %c0_i32_1 = arith.constant 0 : i32
    %c0_i32_2 = arith.constant 0 : i32
    %c0_i32_3 = arith.constant 0 : i32
    return %c0_i32, %c0_i32_0, %c0_i32_1, %c0_i32_2 : i32, i32, i32, i32
  }
  func.func @transform_2(%arg0: i32) -> (i32, i32) {
    %c0_i32 = arith.constant 0 : i32
    %c0_i32_0 = arith.constant 0 : i32
    %c0_i32_1 = arith.constant 0 : i32
    return %c0_i32, %c0_i32_0 : i32, i32
  }
  func.func @transform_3(%arg0: i32) -> (i32, i32) {
    %c0_i32 = arith.constant 0 : i32
    %c0_i32_0 = arith.constant 0 : i32
    %c0_i32_1 = arith.constant 0 : i32
    return %c0_i32, %c0_i32_0 : i32, i32
  }
  func.func @transform_4(%arg0: i32) -> (i32, i32, i32, i32) {
    %c0_i32 = arith.constant 0 : i32
    %c0_i32_0 = arith.constant 0 : i32
    %c0_i32_1 = arith.constant 0 : i32
    %c0_i32_2 = arith.constant 0 : i32
    return %arg0, %c0_i32, %c0_i32_0, %c0_i32_1 : i32, i32, i32, i32
  }
  func.func @transform_5(%arg0: i32) -> (i32, i32, i32) {
    %c0_i32 = arith.constant 0 : i32
    %c0_i32_0 = arith.constant 0 : i32
    %c0_i32_1 = arith.constant 0 : i32
    return %arg0, %c0_i32, %c0_i32_0 : i32, i32, i32
  }
}

module attributes {stable_mosaic.version = 11 : i64} {
  func.func @_scale_by_attention_kernel(%arg0: i32, %arg1: memref<1x16x16x32xf32, #tpu.memory_space<vmem>>, %arg2: memref<1x1x1x32xf32, #tpu.memory_space<vmem>>, %arg3: memref<1x16x16x32xf32, #tpu.memory_space<vmem>>) attributes {dimension_semantics = [#tpu.dimension_semantics<parallel>], iteration_bounds = array<i64: 2>, scalar_prefetch = 0 : i64, scratch_operands = 0 : i64, tpu.core_type = #tpu.core_type<tc>, window_params = [{transform_indices = @transform_0, window_bounds = array<i64: 1, 16, 16, 32>}, {transform_indices = @transform_1, window_bounds = array<i64: 1, 1, 1, 32>}, {transform_indices = @transform_2, window_bounds = array<i64: 1, 16, 16, 32>}]} {
    %c0 = arith.constant 0 : index
    %c0_0 = arith.constant 0 : index
    %c0_1 = arith.constant 0 : index
    %c0_2 = arith.constant 0 : index
    %0 = vector.load %arg1[%c0, %c0_0, %c0_1, %c0_2] : memref<1x16x16x32xf32, #tpu.memory_space<vmem>>, vector<1x16x16x32xf32>
    %c0_3 = arith.constant 0 : index
    %c0_4 = arith.constant 0 : index
    %c0_5 = arith.constant 0 : index
    %c0_6 = arith.constant 0 : index
    %1 = vector.load %arg2[%c0_3, %c0_4, %c0_5, %c0_6] : memref<1x1x1x32xf32, #tpu.memory_space<vmem>>, vector<1x1x1x32xf32>
    %2 = vector.broadcast %1 : vector<1x1x1x32xf32> to vector<1x16x16x32xf32>
    %3 = arith.mulf %0, %2 : vector<1x16x16x32xf32>
    %c0_7 = arith.constant 0 : index
    %c0_8 = arith.constant 0 : index
    %c0_9 = arith.constant 0 : index
    %c0_10 = arith.constant 0 : index
    %4 = vector.load %arg3[%c0_7, %c0_8, %c0_9, %c0_10] : memref<1x16x16x32xf32, #tpu.memory_space<vmem>>, vector<1x16x16x32xf32>
    tpu.vector_store %arg3[%c0_7, %c0_8, %c0_9, %c0_10], %3 {strides = array<i32>} : memref<1x16x16x32xf32, #tpu.memory_space<vmem>>, vector<1x16x16x32xf32>,
    return
  }
  func.func @transform_0(%arg0: i32) -> (i32, i32, i32, i32) {
    %c0_i32 = arith.constant 0 : i32
    %c0_i32_0 = arith.constant 0 : i32
    %c0_i32_1 = arith.constant 0 : i32
    %c0_i32_2 = arith.constant 0 : i32
    return %arg0, %c0_i32, %c0_i32_0, %c0_i32_1 : i32, i32, i32, i32
  }
  func.func @transform_1(%arg0: i32) -> (i32, i32, i32, i32) {
    %c0_i32 = arith.constant 0 : i32
    %c0_i32_0 = arith.constant 0 : i32
    %c0_i32_1 = arith.constant 0 : i32
    %c0_i32_2 = arith.constant 0 : i32
    return %arg0, %c0_i32, %c0_i32_0, %c0_i32_1 : i32, i32, i32, i32
  }
  func.func @transform_2(%arg0: i32) -> (i32, i32, i32, i32) {
    %c0_i32 = arith.constant 0 : i32
    %c0_i32_0 = arith.constant 0 : i32
    %c0_i32_1 = arith.constant 0 : i32
    %c0_i32_2 = arith.constant 0 : i32
    return %arg0, %c0_i32, %c0_i32_0, %c0_i32_1 : i32, i32, i32, i32
  }
}

</mosaic_0001>

<llo_original>
// kernel: attention_refinement_forward.3
$region0: #{attention_refinement_forward.3}
  #allocation0 [shape = 'u32[]', space=smem, size = 0x4, offset = 0x4, fixed_abs, tag = 'smem constant byte address 0x4 - core index']
  #allocation1 [shape = 'u32[144,128]{1,0:T(1,128)}', space=vmem, size = 0x12000, scoped, tag = 'internal scratch']
  %s0 = inlined_call_operand.vmem [shape: f32[2,16,16,32], index: 0, kind: input, shape index: {}]
  %s1 = inlined_call_operand.vmem [shape: f32[2,1,1,32], index: 1, kind: input, shape index: {}]
  %s2 = inlined_call_operand.hbm [shape: f32[2,16,16,32], index: 2, kind: output, shape index: {}]
  %s3 = sld [smem:[#allocation0]]
  $region41: #{attention_refinement_forward.3} parent=0
    _
  %s5 = ssub.s32 1, %s3
  %s6 = scalar_select 0, %s5, %s3
  $region1: #{attention_refinement_forward.3} parent=0
    #allocation2 [shape = 'u8[262144]{0}', space=vmem, size = 0x40000, scoped, tag = 'output window, operand 0']
    #allocation3 [shape = 's32[2]{0}', space=sflag, size = 0x8, scoped, tag = 'scoped memory for attention_refinement_forward.3']
    %7 = vsyncpa [#allocation3], 0
    %s8 = scalar_lea.sflag [#allocation3], 1
    %9 = vsyncpa %s8, 0
    loop: start=0, step=1, limit=4
    $region2: #{attention_refinement_forward.3} parent=1 // loop_pre_header
      _
    $region3: #{attention_refinement_forward.3} parent=1 // loop_header
      %s11 = sphi 0, %s15
      %p12 = scmp.ge.s32.totalorder %s11, 4
      %s21 = sphi 0, %s23
      %s24 = sphi 0, %s21
      %s25 = sphi 0, %s24
      %s41 = sphi 0, %s25
      %s47 = sphi 0, %s49
      %s50 = sphi 0, %s47
      %s51 = sphi 0, %s50
      %s67 = sphi 0, %s51
      %s73 = sphi 0, %s75
      %s76 = sphi 0, %s73
      %s77 = sphi 0, %s76
      %s93 = sphi 0, %s77
    $region4: #{attention_refinement_forward.3} parent=1 // loop_header_branch
      %14 = sbr.rel (%p12) target = $region8
    $region5: #{attention_refinement_forward.3} parent=1 // loop_body
      %s16 = ssub.s32 %s11, 1
      %s17 = ssub.s32 %s11, 2
      %s18 = sadd.s32 %s11, 1
      %s19 = ssub.s32 %s11, %s18
      %p20 = scmp.eq.s32.totalorder %s19, 0
      %s22 = sadd.s32 %s21, 1
      %s23 = scalar_select %p20, %s21, %s22
      %p26 = pneg %p20
      %p27 = scmp.eq.s32.totalorder %s11, 1
      %p28 = por %p26, %p27
      %p29 = scmp.ne.s32.totalorder %s21, %s24
      %p30 = scmp.eq.s32.totalorder %s11, 0
      %p31 = por %p29, %p30
      %p32 = scmp.ne.s32.totalorder %s21, %s24
      %p33 = scmp.eq.s32.totalorder %s16, 1
      %p34 = por %p32, %p33
      %p35 = scmp.ne.s32.totalorder %s24, %s25
      %p36 = scmp.eq.s32.totalorder %s16, 0
      %p37 = por %p35, %p36
      %p38 = scmp.ne.s32.totalorder %s24, %s25
      %p39 = scmp.eq.s32.totalorder %s17, 1
      %p40 = por %p38, %p39
      %p42 = scmp.ne.s32.totalorder %s25, %s41
      %p43 = scmp.eq.s32.totalorder %s17, 0
      %p44 = por %p42, %p43
      %s45 = ssub.s32 %s11, %s18
      %p46 = scmp.eq.s32.totalorder %s45, 0
      %s48 = sadd.s32 %s47, 1
      %s49 = scalar_select %p46, %s47, %s48
      %p52 = pneg %p46
      %p53 = scmp.eq.s32.totalorder %s11, 1
      %p54 = por %p52, %p53
      %p55 = scmp.ne.s32.totalorder %s47, %s50
      %p56 = scmp.eq.s32.totalorder %s11, 0
      %p57 = por %p55, %p56
      %p58 = scmp.ne.s32.totalorder %s47, %s50
      %p59 = scmp.eq.s32.totalorder %s16, 1
      %p60 = por %p58, %p59
      %p61 = scmp.ne.s32.totalorder %s50, %s51
      %p62 = scmp.eq.s32.totalorder %s16, 0
      %p63 = por %p61, %p62
      %p64 = scmp.ne.s32.totalorder %s50, %s51
      %p65 = scmp.eq.s32.totalorder %s17, 1
      %p66 = por %p64, %p65
      %p68 = scmp.ne.s32.totalorder %s51, %s67
      %p69 = scmp.eq.s32.totalorder %s17, 0
      %p70 = por %p68, %p69
      %s71 = ssub.s32 %s11, %s18
      %p72 = scmp.eq.s32.totalorder %s71, 0
      %s74 = sadd.s32 %s73, 1
      %s75 = scalar_select %p72, %s73, %s74
      %p78 = pneg %p72
      %p79 = scmp.eq.s32.totalorder %s11, 1
      %p80 = por %p78, %p79
      %p81 = scmp.ne.s32.totalorder %s73, %s76
      %p82 = scmp.eq.s32.totalorder %s11, 0
      %p83 = por %p81, %p82
      %p84 = scmp.ne.s32.totalorder %s73, %s76
      %p85 = scmp.eq.s32.totalorder %s16, 1
      %p86 = por %p84, %p85
      %p87 = scmp.ne.s32.totalorder %s76, %s77
      %p88 = scmp.eq.s32.totalorder %s16, 0
      %p89 = por %p87, %p88
      %p90 = scmp.ne.s32.totalorder %s76, %s77
      %p91 = scmp.eq.s32.totalorder %s17, 1
      %p92 = por %p90, %p91
      %p94 = scmp.ne.s32.totalorder %s77, %s93
      %p95 = scmp.eq.s32.totalorder %s17, 0
      %p96 = por %p94, %p95
      %p97 = scmp.le.s32.totalorder 1, %s11
      %p98 = scmp.lt.s32.totalorder %s11, 3
      %p99 = pnand %p97, %p98
      %p100 = pneg %p99
      // Predicated region
      $region9: #{attention_refinement_forward.3} parent=5 // pred_check
        _
      $region10: #{attention_refinement_forward.3} parent=5 // pred_check_branch
        %102 = sbr.rel (%p99) target = $region12
      $region11: #{attention_refinement_forward.3} parent=5 // pred_region
        %s103 = ssub.s32 %s11, 1
      $region12: #{attention_refinement_forward.3} parent=5 // pred_fallthru
        _
      %p104 = scmp.lt.s32.totalorder %s11, 2
      // Predicated region
      $region13: #{attention_refinement_forward.3} parent=5 // pred_check
        %p105 = pneg %p104
      $region14: #{attention_refinement_forward.3} parent=5 // pred_check_branch
        %107 = sbr.rel (%p105) target = $region16
      $region15: #{attention_refinement_forward.3} parent=5 // pred_region
        // Predicated region
        $region17: #{attention_refinement_forward.3} parent=15 // pred_check
          %p108 = pneg %p31
        $region18: #{attention_refinement_forward.3} parent=15 // pred_check_branch
          %110 = sbr.rel (%p108) target = $region20
        $region19: #{attention_refinement_forward.3} parent=15 // pred_region
          %p111 = scmp.lt.s32.totalorder %s11, 1
          %s112 = scalar_select %p111, %s11, 1
          %s113 = smul.addr %s112, 32
          %s114 = smul.addr %s113, 8
          %s115 = scalar_lea.vmem %s0, %s114
        $region20: #{attention_refinement_forward.3} parent=15 // pred_fallthru
          _
        // Predicated region
        $region21: #{attention_refinement_forward.3} parent=15 // pred_check
          %p116 = pneg %p57
        $region22: #{attention_refinement_forward.3} parent=15 // pred_check_branch
          %118 = sbr.rel (%p116) target = $region24
        $region23: #{attention_refinement_forward.3} parent=15 // pred_region
          %p119 = scmp.lt.s32.totalorder %s11, 1
          %s120 = scalar_select %p119, %s11, 1
          %s121 = scalar_lea.vmem %s1, %s120
        $region24: #{attention_refinement_forward.3} parent=15 // pred_fallthru
          _
      $region16: #{attention_refinement_forward.3} parent=5 // pred_fallthru
        _
      %p122 = scmp.le.s32.totalorder 1, %s11
      %p123 = scmp.lt.s32.totalorder %s11, 3
      %p124 = pnand %p122, %p123
      %p125 = pneg %p124
      // Predicated region
      $region25: #{attention_refinement_forward.3} parent=5 // pred_check
        _
      $region26: #{attention_refinement_forward.3} parent=5 // pred_check_branch
        %127 = sbr.rel (%p124) target = $region28
      $region27: #{attention_refinement_forward.3} parent=5 // pred_region
        %s128 = ssub.s32 %s11, 1
        %p129 = scmp.lt.s32.totalorder %s16, 1
        %s130 = scalar_select %p129, %s16, 1
        %s131 = smul.addr %s130, 32
        %s132 = smul.addr %s131, 8
        %s133 = scalar_lea.vmem %s0, %s132
        %p134 = pneg %p37
        %p135 = pneg %p34
        %p136 = scmp.lt.s32.totalorder %s16, 1
        %s137 = scalar_select %p136, %s16, 1
        %s138 = scalar_lea.vmem %s1, %s137
        %p139 = pneg %p63
        %p140 = pneg %p60
        %p141 = pneg %p89
        %p142 = pneg %p86
        %s143 = sand.u32 %s76, 1
        %s144 = scalar_lea.sflag [#allocation3], %s143
        %s145 = sand.u32 %s76, 1
        %s146 = smul.addr %s145, 256
        %s147 = scalar_lea.vmem [#allocation2], %s146
        %p148 = scmp.lt.s32.totalorder %s16, 1
        %s149 = scalar_select %p148, %s16, 1
        %s150 = smul.addr %s149, 32
        %s151 = smul.addr %s150, 8
        %s152 = scalar_lea.vmem %s0, %s151
        %p153 = scmp.lt.s32.totalorder %s16, 1
        %s154 = scalar_select %p153, %s16, 1
        %s155 = scalar_lea.vmem %s1, %s154
        %v156 = vld [vmem:[%s152] sm:$0xff]
        %v157 = vld [vmem:[%s152 + $0x8] sm:$0xff]
        %v158 = vld [vmem:[%s152 + $0x10] sm:$0xff]
        %v159 = vld [vmem:[%s152 + $0x18] sm:$0xff]
        %v160 = vld [vmem:[%s152 + $0x20] sm:$0xff]
        %v161 = vld [vmem:[%s152 + $0x28] sm:$0xff]
        %v162 = vld [vmem:[%s152 + $0x30] sm:$0xff]
        %v163 = vld [vmem:[%s152 + $0x38] sm:$0xff]
        %v164 = vld [vmem:[%s152 + $0x40] sm:$0xff]
        %v165 = vld [vmem:[%s152 + $0x48] sm:$0xff]
        %v166 = vld [vmem:[%s152 + $0x50] sm:$0xff]
        %v167 = vld [vmem:[%s152 + $0x58] sm:$0xff]
        %v168 = vld [vmem:[%s152 + $0x60] sm:$0xff]
        %v169 = vld [vmem:[%s152 + $0x68] sm:$0xff]
        %v170 = vld [vmem:[%s152 + $0x70] sm:$0xff]
        %v171 = vld [vmem:[%s152 + $0x78] sm:$0xff]
        %v172 = vld [vmem:[%s152 + $0x80] sm:$0xff]
        %v173 = vld [vmem:[%s152 + $0x88] sm:$0xff]
        %v174 = vld [vmem:[%s152 + $0x90] sm:$0xff]
        %v175 = vld [vmem:[%s152 + $0x98] sm:$0xff]
        %v176 = vld [vmem:[%s152 + $0xa0] sm:$0xff]
        %v177 = vld [vmem:[%s152 + $0xa8] sm:$0xff]
        %v178 = vld [vmem:[%s152 + $0xb0] sm:$0xff]
        %v179 = vld [vmem:[%s152 + $0xb8] sm:$0xff]
        %v180 = vld [vmem:[%s152 + $0xc0] sm:$0xff]
        %v181 = vld [vmem:[%s152 + $0xc8] sm:$0xff]
        %v182 = vld [vmem:[%s152 + $0xd0] sm:$0xff]
        %v183 = vld [vmem:[%s152 + $0xd8] sm:$0xff]
        %v184 = vld [vmem:[%s152 + $0xe0] sm:$0xff]
        %v185 = vld [vmem:[%s152 + $0xe8] sm:$0xff]
        %v186 = vld [vmem:[%s152 + $0xf0] sm:$0xff]
        %v187 = vld [vmem:[%s152 + $0xf8] sm:$0xff]
        %v188 = vld [vmem:[%s155] sm:$0x1]
        %v190 = vlaneseq
        %v191 = vshrl.u32 %v190, 7
        %v192 = vsub.s32 0, %v191
        %v193 = vrot.slane %v188, %v192
        %v195 = vmul.f32 %v156, %v193
        %v196 = vmul.f32 %v157, %v193
        %v197 = vmul.f32 %v158, %v193
        %v198 = vmul.f32 %v159, %v193
        %v199 = vmul.f32 %v160, %v193
        %v200 = vmul.f32 %v161, %v193
        %v201 = vmul.f32 %v162, %v193
        %v202 = vmul.f32 %v163, %v193
        %v203 = vmul.f32 %v164, %v193
        %v204 = vmul.f32 %v165, %v193
        %v205 = vmul.f32 %v166, %v193
        %v206 = vmul.f32 %v167, %v193
        %v207 = vmul.f32 %v168, %v193
        %v208 = vmul.f32 %v169, %v193
        %v209 = vmul.f32 %v170, %v193
        %v210 = vmul.f32 %v171, %v193
        %v211 = vmul.f32 %v172, %v193
        %v212 = vmul.f32 %v173, %v193
        %v213 = vmul.f32 %v174, %v193
        %v214 = vmul.f32 %v175, %v193
        %v215 = vmul.f32 %v176, %v193
        %v216 = vmul.f32 %v177, %v193
        %v217 = vmul.f32 %v178, %v193
        %v218 = vmul.f32 %v179, %v193
        %v219 = vmul.f32 %v180, %v193
        %v220 = vmul.f32 %v181, %v193
        %v221 = vmul.f32 %v182, %v193
        %v222 = vmul.f32 %v183, %v193
        %v223 = vmul.f32 %v184, %v193
        %v224 = vmul.f32 %v185, %v193
        %v225 = vmul.f32 %v186, %v193
        %v226 = vmul.f32 %v187, %v193
        %vm227 = vcmask 261120
        %228 = vst.msk [vmem:[%s147] sm:$0xff] %vm227, %v195
        %229 = vst.msk [vmem:[%s147 + $0x8] sm:$0xff] %vm227, %v196
        %230 = vst.msk [vmem:[%s147 + $0x10] sm:$0xff] %vm227, %v197
        %231 = vst.msk [vmem:[%s147 + $0x18] sm:$0xff] %vm227, %v198
        %232 = vst.msk [vmem:[%s147 + $0x20] sm:$0xff] %vm227, %v199
        %233 = vst.msk [vmem:[%s147 + $0x28] sm:$0xff] %vm227, %v200
        %234 = vst.msk [vmem:[%s147 + $0x30] sm:$0xff] %vm227, %v201
        %235 = vst.msk [vmem:[%s147 + $0x38] sm:$0xff] %vm227, %v202
        %236 = vst.msk [vmem:[%s147 + $0x40] sm:$0xff] %vm227, %v203
        %237 = vst.msk [vmem:[%s147 + $0x48] sm:$0xff] %vm227, %v204
        %238 = vst.msk [vmem:[%s147 + $0x50] sm:$0xff] %vm227, %v205
        %239 = vst.msk [vmem:[%s147 + $0x58] sm:$0xff] %vm227, %v206
        %240 = vst.msk [vmem:[%s147 + $0x60] sm:$0xff] %vm227, %v207
        %241 = vst.msk [vmem:[%s147 + $0x68] sm:$0xff] %vm227, %v208
        %242 = vst.msk [vmem:[%s147 + $0x70] sm:$0xff] %vm227, %v209
        %243 = vst.msk [vmem:[%s147 + $0x78] sm:$0xff] %vm227, %v210
        %244 = vst.msk [vmem:[%s147 + $0x80] sm:$0xff] %vm227, %v211
        %245 = vst.msk [vmem:[%s147 + $0x88] sm:$0xff] %vm227, %v212
        %246 = vst.msk [vmem:[%s147 + $0x90] sm:$0xff] %vm227, %v213
        %247 = vst.msk [vmem:[%s147 + $0x98] sm:$0xff] %vm227, %v214
        %248 = vst.msk [vmem:[%s147 + $0xa0] sm:$0xff] %vm227, %v215
        %249 = vst.msk [vmem:[%s147 + $0xa8] sm:$0xff] %vm227, %v216
        %250 = vst.msk [vmem:[%s147 + $0xb0] sm:$0xff] %vm227, %v217
        %251 = vst.msk [vmem:[%s147 + $0xb8] sm:$0xff] %vm227, %v218
        %252 = vst.msk [vmem:[%s147 + $0xc0] sm:$0xff] %vm227, %v219
        %253 = vst.msk [vmem:[%s147 + $0xc8] sm:$0xff] %vm227, %v220
        %254 = vst.msk [vmem:[%s147 + $0xd0] sm:$0xff] %vm227, %v221
        %255 = vst.msk [vmem:[%s147 + $0xd8] sm:$0xff] %vm227, %v222
        %256 = vst.msk [vmem:[%s147 + $0xe0] sm:$0xff] %vm227, %v223
        %257 = vst.msk [vmem:[%s147 + $0xe8] sm:$0xff] %vm227, %v224
        %258 = vst.msk [vmem:[%s147 + $0xf0] sm:$0xff] %vm227, %v225
        %259 = vst.msk [vmem:[%s147 + $0xf8] sm:$0xff] %vm227, %v226
        %s260 = sand.u32 %s76, 1
        %s261 = scalar_lea.sflag [#allocation3], %s260
        %s262 = sand.u32 %s76, 1
        %s263 = smul.addr %s262, 256
        %s264 = scalar_lea.vmem [#allocation2], %s263
        // Predicated region
        $region29: #{attention_refinement_forward.3} parent=27 // pred_check
          %p265 = pneg %p86
        $region30: #{attention_refinement_forward.3} parent=27 // pred_check_branch
          %267 = sbr.rel (%p265) target = $region32
        $region31: #{attention_refinement_forward.3} parent=27 // pred_region
          %s269 = ssub.s32 4096, 4096
          %270 = vsyncadd %s261, %s269
          %s271 = smul.addr %s16, 32
          %s272 = smul.addr %s271, 128
          %s273 = scalar_lea.hbm %s2, %s272
          %s274 = sshll.u32 %s264, 4
          %s275 = int_to_ptr.vmem [resolvable:$true] %s274
          %280 = dma.vmem_to_hbm [thread:$0]  %s275, 4096, %s273, %s261, 128, 128, 8
        $region32: #{attention_refinement_forward.3} parent=27 // pred_fallthru
          _
      $region28: #{attention_refinement_forward.3} parent=5 // pred_fallthru
        _
      %p281 = scmp.le.s32.totalorder 2, %s11
      // Predicated region
      $region33: #{attention_refinement_forward.3} parent=5 // pred_check
        %p282 = pneg %p281
      $region34: #{attention_refinement_forward.3} parent=5 // pred_check_branch
        %284 = sbr.rel (%p282) target = $region36
      $region35: #{attention_refinement_forward.3} parent=5 // pred_region
        %s285 = ssub.s32 %s11, 2
        // Predicated region
        $region37: #{attention_refinement_forward.3} parent=35 // pred_check
          %p286 = pneg %p92
        $region38: #{attention_refinement_forward.3} parent=35 // pred_check_branch
          %288 = sbr.rel (%p286) target = $region40
        $region39: #{attention_refinement_forward.3} parent=35 // pred_region
          %s289 = sand.u32 %s77, 1
          %s290 = scalar_lea.sflag [#allocation3], %s289
          %s291 = sand.u32 %s77, 1
          %s292 = smul.addr %s291, 256
          %s293 = scalar_lea.vmem [#allocation2], %s292
          %294 = dma.done %s290, 4096
        $region40: #{attention_refinement_forward.3} parent=35 // pred_fallthru
          _
      $region36: #{attention_refinement_forward.3} parent=5 // pred_fallthru
        _
    $region6: #{attention_refinement_forward.3} parent=1 // loop_footer
      %s15 = sadd.s32 1, %s11
    $region7: #{attention_refinement_forward.3} parent=1 // loop_footer_branch
      %10 = sbr.rel target = $region3
    $region8: #{attention_refinement_forward.3} parent=1 // loop_exit
      _
    %295 = vsyncpa [#allocation3], 1
    %s296 = scalar_lea.sflag [#allocation3], 1
    %297 = vsyncpa %s296, 1

// kernel: attention_refinement_forward.2
$region0: #{attention_refinement_forward.2}
  #allocation0 [shape = 'u32[]', space=smem, size = 0x4, offset = 0x4, fixed_abs, tag = 'smem constant byte address 0x4 - core index']
  #allocation1 [shape = 'u32[144,128]{1,0:T(1,128)}', space=vmem, size = 0x12000, scoped, tag = 'internal scratch']
  %s0 = inlined_call_operand.vmem [shape: bf16[2,18,18,16], index: 0, kind: input, shape index: {}]
  %s1 = inlined_call_operand.vmem [shape: bf16[3,3,16,32], index: 1, kind: input, shape index: {}]
  %s2 = inlined_call_operand.vmem [shape: f32[1,32], index: 2, kind: input, shape index: {}]
  %s3 = inlined_call_operand.vmem [shape: f32[1,32], index: 3, kind: input, shape index: {}]
  %s4 = inlined_call_operand.vmem [shape: f32[2,16,16,32], index: 4, kind: output, shape index: {0}]
  %s5 = inlined_call_operand.vmem [shape: f32[2,1,32], index: 5, kind: output, shape index: {1}]
  %6 = xla_tuple %s4, %s5
  %s7 = sld [smem:[#allocation0]]
  $region57: #{attention_refinement_forward.2} parent=0
    _
  %s9 = ssub.s32 1, %s7
  %s10 = scalar_select 0, %s9, %s7
  loop: start=0, step=1, limit=4
  $region2: #{attention_refinement_forward.2} parent=0 // loop_pre_header
    _
  $region3: #{attention_refinement_forward.2} parent=0 // loop_header
    %s12 = sphi 0, %s16
    %p13 = scmp.ge.s32.totalorder %s12, 4
    %s22 = sphi 0, %s24
    %s25 = sphi 0, %s22
    %s26 = sphi 0, %s25
    %s42 = sphi 0, %s26
    %s46 = sphi 0, %s46
    %s48 = sphi 0, %s46
    %s49 = sphi 0, %s48
    %s63 = sphi 0, %s49
    %s67 = sphi 0, %s67
    %s69 = sphi 0, %s67
    %s70 = sphi 0, %s69
    %s84 = sphi 0, %s70
    %s88 = sphi 0, %s88
    %s90 = sphi 0, %s88
    %s91 = sphi 0, %s90
    %s105 = sphi 0, %s91
    %s111 = sphi 0, %s113
    %s114 = sphi 0, %s111
    %s115 = sphi 0, %s114
    %s131 = sphi 0, %s115
    %s137 = sphi 0, %s139
    %s140 = sphi 0, %s137
    %s141 = sphi 0, %s140
    %s157 = sphi 0, %s141
  $region4: #{attention_refinement_forward.2} parent=0 // loop_header_branch
    %15 = sbr.rel (%p13) target = $region8
  $region5: #{attention_refinement_forward.2} parent=0 // loop_body
    %s17 = ssub.s32 %s12, 1
    %s18 = ssub.s32 %s12, 2
    %s19 = sadd.s32 %s12, 1
    %s20 = ssub.s32 %s12, %s19
    %p21 = scmp.eq.s32.totalorder %s20, 0
    %s23 = sadd.s32 %s22, 1
    %s24 = scalar_select %p21, %s22, %s23
    %p27 = pneg %p21
    %p28 = scmp.eq.s32.totalorder %s12, 1
    %p29 = por %p27, %p28
    %p30 = scmp.ne.s32.totalorder %s22, %s25
    %p31 = scmp.eq.s32.totalorder %s12, 0
    %p32 = por %p30, %p31
    %p33 = scmp.ne.s32.totalorder %s22, %s25
    %p34 = scmp.eq.s32.totalorder %s17, 1
    %p35 = por %p33, %p34
    %p36 = scmp.ne.s32.totalorder %s25, %s26
    %p37 = scmp.eq.s32.totalorder %s17, 0
    %p38 = por %p36, %p37
    %p39 = scmp.ne.s32.totalorder %s25, %s26
    %p40 = scmp.eq.s32.totalorder %s18, 1
    %p41 = por %p39, %p40
    %p43 = scmp.ne.s32.totalorder %s26, %s42
    %p44 = scmp.eq.s32.totalorder %s18, 0
    %p45 = por %p43, %p44
    %s47 = sadd.s32 %s46, 1
    %p50 = scmp.eq.s32.totalorder %s12, 1
    %p51 = scmp.ne.s32.totalorder %s46, %s48
    %p52 = scmp.eq.s32.totalorder %s12, 0
    %p53 = por %p51, %p52
    %p54 = scmp.ne.s32.totalorder %s46, %s48
    %p55 = scmp.eq.s32.totalorder %s17, 1
    %p56 = por %p54, %p55
    %p57 = scmp.ne.s32.totalorder %s48, %s49
    %p58 = scmp.eq.s32.totalorder %s17, 0
    %p59 = por %p57, %p58
    %p60 = scmp.ne.s32.totalorder %s48, %s49
    %p61 = scmp.eq.s32.totalorder %s18, 1
    %p62 = por %p60, %p61
    %p64 = scmp.ne.s32.totalorder %s49, %s63
    %p65 = scmp.eq.s32.totalorder %s18, 0
    %p66 = por %p64, %p65
    %s68 = sadd.s32 %s67, 1
    %p71 = scmp.eq.s32.totalorder %s12, 1
    %p72 = scmp.ne.s32.totalorder %s67, %s69
    %p73 = scmp.eq.s32.totalorder %s12, 0
    %p74 = por %p72, %p73
    %p75 = scmp.ne.s32.totalorder %s67, %s69
    %p76 = scmp.eq.s32.totalorder %s17, 1
    %p77 = por %p75, %p76
    %p78 = scmp.ne.s32.totalorder %s69, %s70
    %p79 = scmp.eq.s32.totalorder %s17, 0
    %p80 = por %p78, %p79
    %p81 = scmp.ne.s32.totalorder %s69, %s70
    %p82 = scmp.eq.s32.totalorder %s18, 1
    %p83 = por %p81, %p82
    %p85 = scmp.ne.s32.totalorder %s70, %s84
    %p86 = scmp.eq.s32.totalorder %s18, 0
    %p87 = por %p85, %p86
    %s89 = sadd.s32 %s88, 1
    %p92 = scmp.eq.s32.totalorder %s12, 1
    %p93 = scmp.ne.s32.totalorder %s88, %s90
    %p94 = scmp.eq.s32.totalorder %s12, 0
    %p95 = por %p93, %p94
    %p96 = scmp.ne.s32.totalorder %s88, %s90
    %p97 = scmp.eq.s32.totalorder %s17, 1
    %p98 = por %p96, %p97
    %p99 = scmp.ne.s32.totalorder %s90, %s91
    %p100 = scmp.eq.s32.totalorder %s17, 0
    %p101 = por %p99, %p100
    %p102 = scmp.ne.s32.totalorder %s90, %s91
    %p103 = scmp.eq.s32.totalorder %s18, 1
    %p104 = por %p102, %p103
    %p106 = scmp.ne.s32.totalorder %s91, %s105
    %p107 = scmp.eq.s32.totalorder %s18, 0
    %p108 = por %p106, %p107
    %s109 = ssub.s32 %s12, %s19
    %p110 = scmp.eq.s32.totalorder %s109, 0
    %s112 = sadd.s32 %s111, 1
    %s113 = scalar_select %p110, %s111, %s112
    %p116 = pneg %p110
    %p117 = scmp.eq.s32.totalorder %s12, 1
    %p118 = por %p116, %p117
    %p119 = scmp.ne.s32.totalorder %s111, %s114
    %p120 = scmp.eq.s32.totalorder %s12, 0
    %p121 = por %p119, %p120
    %p122 = scmp.ne.s32.totalorder %s111, %s114
    %p123 = scmp.eq.s32.totalorder %s17, 1
    %p124 = por %p122, %p123
    %p125 = scmp.ne.s32.totalorder %s114, %s115
    %p126 = scmp.eq.s32.totalorder %s17, 0
    %p127 = por %p125, %p126
    %p128 = scmp.ne.s32.totalorder %s114, %s115
    %p129 = scmp.eq.s32.totalorder %s18, 1
    %p130 = por %p128, %p129
    %p132 = scmp.ne.s32.totalorder %s115, %s131
    %p133 = scmp.eq.s32.totalorder %s18, 0
    %p134 = por %p132, %p133
    %s135 = ssub.s32 %s12, %s19
    %p136 = scmp.eq.s32.totalorder %s135, 0
    %s138 = sadd.s32 %s137, 1
    %s139 = scalar_select %p136, %s137, %s138
    %p142 = pneg %p136
    %p143 = scmp.eq.s32.totalorder %s12, 1
    %p144 = por %p142, %p143
    %p145 = scmp.ne.s32.totalorder %s137, %s140
    %p146 = scmp.eq.s32.totalorder %s12, 0
    %p147 = por %p145, %p146
    %p148 = scmp.ne.s32.totalorder %s137, %s140
    %p149 = scmp.eq.s32.totalorder %s17, 1
    %p150 = por %p148, %p149
    %p151 = scmp.ne.s32.totalorder %s140, %s141
    %p152 = scmp.eq.s32.totalorder %s17, 0
    %p153 = por %p151, %p152
    %p154 = scmp.ne.s32.totalorder %s140, %s141
    %p155 = scmp.eq.s32.totalorder %s18, 1
    %p156 = por %p154, %p155
    %p158 = scmp.ne.s32.totalorder %s141, %s157
    %p159 = scmp.eq.s32.totalorder %s18, 0
    %p160 = por %p158, %p159
    %p161 = scmp.le.s32.totalorder 1, %s12
    %p162 = scmp.lt.s32.totalorder %s12, 3
    %p163 = pnand %p161, %p162
    %p164 = pneg %p163
    // Predicated region
    $region9: #{attention_refinement_forward.2} parent=5 // pred_check
      _
    $region10: #{attention_refinement_forward.2} parent=5 // pred_check_branch
      %166 = sbr.rel (%p163) target = $region12
    $region11: #{attention_refinement_forward.2} parent=5 // pred_region
      %s167 = ssub.s32 %s12, 1
      // Predicated region
      $region13: #{attention_refinement_forward.2} parent=11 // pred_check
        %p168 = pneg %p59
      $region14: #{attention_refinement_forward.2} parent=11 // pred_check_branch
        %170 = sbr.rel (%p168) target = $region16
      $region15: #{attention_refinement_forward.2} parent=11 // pred_region
        _
      $region16: #{attention_refinement_forward.2} parent=11 // pred_fallthru
        _
      // Predicated region
      $region17: #{attention_refinement_forward.2} parent=11 // pred_check
        %p171 = pneg %p80
      $region18: #{attention_refinement_forward.2} parent=11 // pred_check_branch
        %173 = sbr.rel (%p171) target = $region20
      $region19: #{attention_refinement_forward.2} parent=11 // pred_region
        _
      $region20: #{attention_refinement_forward.2} parent=11 // pred_fallthru
        _
      // Predicated region
      $region21: #{attention_refinement_forward.2} parent=11 // pred_check
        %p174 = pneg %p101
      $region22: #{attention_refinement_forward.2} parent=11 // pred_check_branch
        %176 = sbr.rel (%p174) target = $region24
      $region23: #{attention_refinement_forward.2} parent=11 // pred_region
        _
      $region24: #{attention_refinement_forward.2} parent=11 // pred_fallthru
        _
    $region12: #{attention_refinement_forward.2} parent=5 // pred_fallthru
      _
    %p177 = scmp.lt.s32.totalorder %s12, 2
    // Predicated region
    $region25: #{attention_refinement_forward.2} parent=5 // pred_check
      %p178 = pneg %p177
    $region26: #{attention_refinement_forward.2} parent=5 // pred_check_branch
      %180 = sbr.rel (%p178) target = $region28
    $region27: #{attention_refinement_forward.2} parent=5 // pred_region
      // Predicated region
      $region29: #{attention_refinement_forward.2} parent=27 // pred_check
        %p181 = pneg %p32
      $region30: #{attention_refinement_forward.2} parent=27 // pred_check_branch
        %183 = sbr.rel (%p181) target = $region32
      $region31: #{attention_refinement_forward.2} parent=27 // pred_region
        %p184 = scmp.lt.s32.totalorder %s12, 1
        %s185 = scalar_select %p184, %s12, 1
        %s186 = smul.addr %s185, 54
        %s187 = smul.addr %s186, 4
        %s188 = scalar_lea.vmem %s0, %s187
      $region32: #{attention_refinement_forward.2} parent=27 // pred_fallthru
        _
    $region28: #{attention_refinement_forward.2} parent=5 // pred_fallthru
      _
    %p189 = scmp.le.s32.totalorder 1, %s12
    %p190 = scmp.lt.s32.totalorder %s12, 3
    %p191 = pnand %p189, %p190
    %p192 = pneg %p191
    // Predicated region
    $region33: #{attention_refinement_forward.2} parent=5 // pred_check
      _
    $region34: #{attention_refinement_forward.2} parent=5 // pred_check_branch
      %194 = sbr.rel (%p191) target = $region36
    $region35: #{attention_refinement_forward.2} parent=5 // pred_region
      %s195 = ssub.s32 %s12, 1
      %p196 = scmp.lt.s32.totalorder %s17, 1
      %s197 = scalar_select %p196, %s17, 1
      %s198 = smul.addr %s197, 54
      %s199 = smul.addr %s198, 4
      %s200 = scalar_lea.vmem %s0, %s199
      %p201 = pneg %p38
      %p202 = pneg %p35
      %p203 = pneg %p59
      %p204 = pneg %p56
      %p205 = pneg %p80
      %p206 = pneg %p77
      %p207 = pneg %p101
      %p208 = pneg %p98
      %p209 = pneg %p127
      %p210 = pneg %p124
      %p211 = scmp.lt.s32.totalorder %s17, 1
      %s212 = scalar_select %p211, %s17, 1
      %s213 = smul.addr %s212, 32
      %s214 = smul.addr %s213, 8
      %s215 = scalar_lea.vmem %s4, %s214
      %p216 = pneg %p153
      %p217 = pneg %p150
      %p218 = scmp.lt.s32.totalorder %s17, 1
      %s219 = scalar_select %p218, %s17, 1
      %s220 = scalar_lea.vmem %s5, %s219
      %p221 = scmp.lt.s32.totalorder %s17, 1
      %s222 = scalar_select %p221, %s17, 1
      %s223 = smul.addr %s222, 54
      %s224 = smul.addr %s223, 4
      %s225 = scalar_lea.vmem %s0, %s224
      %p226 = scmp.lt.s32.totalorder %s17, 1
      %s227 = scalar_select %p226, %s17, 1
      %s228 = smul.addr %s227, 32
      %s229 = smul.addr %s228, 8
      %s230 = scalar_lea.vmem %s4, %s229
      %p231 = scmp.lt.s32.totalorder %s17, 1
      %s232 = scalar_select %p231, %s17, 1
      %s233 = scalar_lea.vmem %s5, %s232
      %v235 = vld [vmem:[%s225] sm:$0xf]
      %v236 = vld [vmem:[%s225 + $0x4] sm:$0xf]
      %v237 = vld [vmem:[%s225 + $0x8] sm:$0x1]
      %v238 = vld [vmem:[%s225 + $0xc] sm:$0xf]
      %v239 = vld [vmem:[%s225 + $0x10] sm:$0xf]
      %v240 = vld [vmem:[%s225 + $0x14] sm:$0x1]
      %v241 = vld [vmem:[%s225 + $0x18] sm:$0xf]
      %v242 = vld [vmem:[%s225 + $0x1c] sm:$0xf]
      %v243 = vld [vmem:[%s225 + $0x20] sm:$0x1]
      %v244 = vld [vmem:[%s225 + $0x24] sm:$0xf]
      %v245 = vld [vmem:[%s225 + $0x28] sm:$0xf]
      %v246 = vld [vmem:[%s225 + $0x2c] sm:$0x1]
      %v247 = vld [vmem:[%s225 + $0x30] sm:$0xf]
      %v248 = vld [vmem:[%s225 + $0x34] sm:$0xf]
      %v249 = vld [vmem:[%s225 + $0x38] sm:$0x1]
      %v250 = vld [vmem:[%s225 + $0x3c] sm:$0xf]
      %v251 = vld [vmem:[%s225 + $0x40] sm:$0xf]
      %v252 = vld [vmem:[%s225 + $0x44] sm:$0x1]
      %v253 = vld [vmem:[%s225 + $0x48] sm:$0xf]
      %v254 = vld [vmem:[%s225 + $0x4c] sm:$0xf]
      %v255 = vld [vmem:[%s225 + $0x50] sm:$0x1]
      %v256 = vld [vmem:[%s225 + $0x54] sm:$0xf]
      %v257 = vld [vmem:[%s225 + $0x58] sm:$0xf]
      %v258 = vld [vmem:[%s225 + $0x5c] sm:$0x1]
      %v259 = vld [vmem:[%s225 + $0x60] sm:$0xf]
      %v260 = vld [vmem:[%s225 + $0x64] sm:$0xf]
      %v261 = vld [vmem:[%s225 + $0x68] sm:$0x1]
      %v262 = vld [vmem:[%s225 + $0x6c] sm:$0xf]
      %v263 = vld [vmem:[%s225 + $0x70] sm:$0xf]
      %v264 = vld [vmem:[%s225 + $0x74] sm:$0x1]
      %v265 = vld [vmem:[%s225 + $0x78] sm:$0xf]
      %v266 = vld [vmem:[%s225 + $0x7c] sm:$0xf]
      %v267 = vld [vmem:[%s225 + $0x80] sm:$0x1]
      %v268 = vld [vmem:[%s225 + $0x84] sm:$0xf]
      %v269 = vld [vmem:[%s225 + $0x88] sm:$0xf]
      %v270 = vld [vmem:[%s225 + $0x8c] sm:$0x1]
      %v271 = vld [vmem:[%s225 + $0x90] sm:$0xf]
      %v272 = vld [vmem:[%s225 + $0x94] sm:$0xf]
      %v273 = vld [vmem:[%s225 + $0x98] sm:$0x1]
      %v274 = vld [vmem:[%s225 + $0x9c] sm:$0xf]
      %v275 = vld [vmem:[%s225 + $0xa0] sm:$0xf]
      %v276 = vld [vmem:[%s225 + $0xa4] sm:$0x1]
      %v277 = vld [vmem:[%s225 + $0xa8] sm:$0xf]
      %v278 = vld [vmem:[%s225 + $0xac] sm:$0xf]
      %v279 = vld [vmem:[%s225 + $0xb0] sm:$0x1]
      %v280 = vld [vmem:[%s225 + $0xb4] sm:$0xf]
      %v281 = vld [vmem:[%s225 + $0xb8] sm:$0xf]
      %v282 = vld [vmem:[%s225 + $0xbc] sm:$0x1]
      %v283 = vld [vmem:[%s225 + $0xc0] sm:$0xf]
      %v284 = vld [vmem:[%s225 + $0xc4] sm:$0xf]
      %v285 = vld [vmem:[%s225 + $0xc8] sm:$0x1]
      %v286 = vld [vmem:[%s225 + $0xcc] sm:$0xf]
      %v287 = vld [vmem:[%s225 + $0xd0] sm:$0xf]
      %v288 = vld [vmem:[%s225 + $0xd4] sm:$0x1]
      %v289 = vld [vmem:[%s1] sm:$0xf]
      %v290 = vld [vmem:[%s1 + $0x4] sm:$0xf]
      %v291 = vld [vmem:[%s1 + $0x8] sm:$0xf]
      %v292 = vld [vmem:[%s1 + $0xc] sm:$0xf]
      %v293 = vld [vmem:[%s1 + $0x10] sm:$0xf]
      %v294 = vld [vmem:[%s1 + $0x14] sm:$0xf]
      %v295 = vld [vmem:[%s1 + $0x18] sm:$0xf]
      %v296 = vld [vmem:[%s1 + $0x1c] sm:$0xf]
      %v297 = vld [vmem:[%s1 + $0x20] sm:$0xf]
      %v298 = vld [vmem:[%s1 + $0x24] sm:$0xf]
      %v299 = vld [vmem:[%s1 + $0x28] sm:$0xf]
      %v300 = vld [vmem:[%s1 + $0x2c] sm:$0xf]
      %v301 = vld [vmem:[%s1 + $0x30] sm:$0xf]
      %v302 = vld [vmem:[%s1 + $0x34] sm:$0xf]
      %v303 = vld [vmem:[%s1 + $0x38] sm:$0xf]
      %v304 = vld [vmem:[%s1 + $0x3c] sm:$0xf]
      %v305 = vld [vmem:[%s1 + $0x40] sm:$0xf]
      %v306 = vld [vmem:[%s1 + $0x44] sm:$0xf]
      %vm307 = vsmask.f32 3328
      %vm308 = vsmask.f32 7440
      %vm309 = vmor %vm307, %vm308
      %v311 = vshrl.u32 %v235, 16
      %v313 = vrot.slane %v311, 4
      %v314 = vshll.u32 %v235, 16
      %v316 = vrot.slane %v314, 5
      %v317 = vor.u32 %v313, %v316
      %v318 = vrot.slane %v317, 4
      %v320 = vshll.u32 %v236, 16
      %v322 = vrot.slane %v320, 5
      %v323 = vsel %vm309, %v318, %v322
      %v324 = vshrl.u32 %v236, 16
      %v326 = vrot.slane %v324, 4
      %v327 = vor.u32 %v326, %v322
      %v328 = vrot.slane %v327, 4
      %v330 = vshll.u32 %v237, 16
      %v332 = vrot.slane %v330, 5
      %v333 = vsel %vm309, %v328, %v332
      %v335 = vshrl.u32 %v238, 16
      %v337 = vrot.slane %v335, 4
      %v338 = vshll.u32 %v238, 16
      %v340 = vrot.slane %v338, 5
      %v341 = vor.u32 %v337, %v340
      %v342 = vrot.slane %v341, 4
      %v344 = vshll.u32 %v239, 16
      %v346 = vrot.slane %v344, 5
      %v347 = vsel %vm309, %v342, %v346
      %v348 = vshrl.u32 %v239, 16
      %v350 = vrot.slane %v348, 4
      %v351 = vor.u32 %v350, %v346
      %v352 = vrot.slane %v351, 4
      %v354 = vshll.u32 %v240, 16
      %v356 = vrot.slane %v354, 5
      %v357 = vsel %vm309, %v352, %v356
      %v359 = vshrl.u32 %v241, 16
      %v361 = vrot.slane %v359, 4
      %v362 = vshll.u32 %v241, 16
      %v364 = vrot.slane %v362, 5
      %v365 = vor.u32 %v361, %v364
      %v366 = vrot.slane %v365, 4
      %v368 = vshll.u32 %v242, 16
      %v370 = vrot.slane %v368, 5
      %v371 = vsel %vm309, %v366, %v370
      %v372 = vshrl.u32 %v242, 16
      %v374 = vrot.slane %v372, 4
      %v375 = vor.u32 %v374, %v370
      %v376 = vrot.slane %v375, 4
      %v378 = vshll.u32 %v243, 16
      %v380 = vrot.slane %v378, 5
      %v381 = vsel %vm309, %v376, %v380
      %v383 = vshrl.u32 %v244, 16
      %v385 = vrot.slane %v383, 4
      %v386 = vshll.u32 %v244, 16
      %v388 = vrot.slane %v386, 5
      %v389 = vor.u32 %v385, %v388
      %v390 = vrot.slane %v389, 4
      %v392 = vshll.u32 %v245, 16
      %v394 = vrot.slane %v392, 5
      %v395 = vsel %vm309, %v390, %v394
      %v396 = vshrl.u32 %v245, 16
      %v398 = vrot.slane %v396, 4
      %v399 = vor.u32 %v398, %v394
      %v400 = vrot.slane %v399, 4
      %v402 = vshll.u32 %v246, 16
      %v404 = vrot.slane %v402, 5
      %v405 = vsel %vm309, %v400, %v404
      %v407 = vshrl.u32 %v247, 16
      %v409 = vrot.slane %v407, 4
      %v410 = vshll.u32 %v247, 16
      %v412 = vrot.slane %v410, 5
      %v413 = vor.u32 %v409, %v412
      %v414 = vrot.slane %v413, 4
      %v416 = vshll.u32 %v248, 16
      %v418 = vrot.slane %v416, 5
      %v419 = vsel %vm309, %v414, %v418
      %v420 = vshrl.u32 %v248, 16
      %v422 = vrot.slane %v420, 4
      %v423 = vor.u32 %v422, %v418
      %v424 = vrot.slane %v423, 4
      %v426 = vshll.u32 %v249, 16
      %v428 = vrot.slane %v426, 5
      %v429 = vsel %vm309, %v424, %v428
      %v431 = vshrl.u32 %v250, 16
      %v433 = vrot.slane %v431, 4
      %v434 = vshll.u32 %v250, 16
      %v436 = vrot.slane %v434, 5
      %v437 = vor.u32 %v433, %v436
      %v438 = vrot.slane %v437, 4
      %v440 = vshll.u32 %v251, 16
      %v442 = vrot.slane %v440, 5
      %v443 = vsel %vm309, %v438, %v442
      %v444 = vshrl.u32 %v251, 16
      %v446 = vrot.slane %v444, 4
      %v447 = vor.u32 %v446, %v442
      %v448 = vrot.slane %v447, 4
      %v450 = vshll.u32 %v252, 16
      %v452 = vrot.slane %v450, 5
      %v453 = vsel %vm309, %v448, %v452
      %v455 = vshrl.u32 %v253, 16
      %v457 = vrot.slane %v455, 4
      %v458 = vshll.u32 %v253, 16
      %v460 = vrot.slane %v458, 5
      %v461 = vor.u32 %v457, %v460
      %v462 = vrot.slane %v461, 4
      %v464 = vshll.u32 %v254, 16
      %v466 = vrot.slane %v464, 5
      %v467 = vsel %vm309, %v462, %v466
      %v468 = vshrl.u32 %v254, 16
      %v470 = vrot.slane %v468, 4
      %v471 = vor.u32 %v470, %v466
      %v472 = vrot.slane %v471, 4
      %v474 = vshll.u32 %v255, 16
      %v476 = vrot.slane %v474, 5
      %v477 = vsel %vm309, %v472, %v476
      %v479 = vshrl.u32 %v256, 16
      %v481 = vrot.slane %v479, 4
      %v482 = vshll.u32 %v256, 16
      %v484 = vrot.slane %v482, 5
      %v485 = vor.u32 %v481, %v484
      %v486 = vrot.slane %v485, 4
      %v488 = vshll.u32 %v257, 16
      %v490 = vrot.slane %v488, 5
      %v491 = vsel %vm309, %v486, %v490
      %v492 = vshrl.u32 %v257, 16
      %v494 = vrot.slane %v492, 4
      %v495 = vor.u32 %v494, %v490
      %v496 = vrot.slane %v495, 4
      %v498 = vshll.u32 %v258, 16
      %v500 = vrot.slane %v498, 5
      %v501 = vsel %vm309, %v496, %v500
      %v503 = vshrl.u32 %v259, 16
      %v505 = vrot.slane %v503, 4
      %v506 = vshll.u32 %v259, 16
      %v508 = vrot.slane %v506, 5
      %v509 = vor.u32 %v505, %v508
      %v510 = vrot.slane %v509, 4
      %v512 = vshll.u32 %v260, 16
      %v514 = vrot.slane %v512, 5
      %v515 = vsel %vm309, %v510, %v514
      %v516 = vshrl.u32 %v260, 16
      %v518 = vrot.slane %v516, 4
      %v519 = vor.u32 %v518, %v514
      %v520 = vrot.slane %v519, 4
      %v522 = vshll.u32 %v261, 16
      %v524 = vrot.slane %v522, 5
      %v525 = vsel %vm309, %v520, %v524
      %v527 = vshrl.u32 %v262, 16
      %v529 = vrot.slane %v527, 4
      %v530 = vshll.u32 %v262, 16
      %v532 = vrot.slane %v530, 5
      %v533 = vor.u32 %v529, %v532
      %v534 = vrot.slane %v533, 4
      %v536 = vshll.u32 %v263, 16
      %v538 = vrot.slane %v536, 5
      %v539 = vsel %vm309, %v534, %v538
      %v540 = vshrl.u32 %v263, 16
      %v542 = vrot.slane %v540, 4
      %v543 = vor.u32 %v542, %v538
      %v544 = vrot.slane %v543, 4
      %v546 = vshll.u32 %v264, 16
      %v548 = vrot.slane %v546, 5
      %v549 = vsel %vm309, %v544, %v548
      %v551 = vshrl.u32 %v265, 16
      %v553 = vrot.slane %v551, 4
      %v554 = vshll.u32 %v265, 16
      %v556 = vrot.slane %v554, 5
      %v557 = vor.u32 %v553, %v556
      %v558 = vrot.slane %v557, 4
      %v560 = vshll.u32 %v266, 16
      %v562 = vrot.slane %v560, 5
      %v563 = vsel %vm309, %v558, %v562
      %v564 = vshrl.u32 %v266, 16
      %v566 = vrot.slane %v564, 4
      %v567 = vor.u32 %v566, %v562
      %v568 = vrot.slane %v567, 4
      %v570 = vshll.u32 %v267, 16
      %v572 = vrot.slane %v570, 5
      %v573 = vsel %vm309, %v568, %v572
      %v575 = vshrl.u32 %v268, 16
      %v577 = vrot.slane %v575, 4
      %v578 = vshll.u32 %v268, 16
      %v580 = vrot.slane %v578, 5
      %v581 = vor.u32 %v577, %v580
      %v582 = vrot.slane %v581, 4
      %v584 = vshll.u32 %v269, 16
      %v586 = vrot.slane %v584, 5
      %v587 = vsel %vm309, %v582, %v586
      %v588 = vshrl.u32 %v269, 16
      %v590 = vrot.slane %v588, 4
      %v591 = vor.u32 %v590, %v586
      %v592 = vrot.slane %v591, 4
      %v594 = vshll.u32 %v270, 16
      %v596 = vrot.slane %v594, 5
      %v597 = vsel %vm309, %v592, %v596
      %v599 = vshrl.u32 %v271, 16
      %v601 = vrot.slane %v599, 4
      %v602 = vshll.u32 %v271, 16
      %v604 = vrot.slane %v602, 5
      %v605 = vor.u32 %v601, %v604
      %v606 = vrot.slane %v605, 4
      %v608 = vshll.u32 %v272, 16
      %v610 = vrot.slane %v608, 5
      %v611 = vsel %vm309, %v606, %v610
      %v612 = vshrl.u32 %v272, 16
      %v614 = vrot.slane %v612, 4
      %v615 = vor.u32 %v614, %v610
      %v616 = vrot.slane %v615, 4
      %v618 = vshll.u32 %v273, 16
      %v620 = vrot.slane %v618, 5
      %v621 = vsel %vm309, %v616, %v620
      %v623 = vshrl.u32 %v274, 16
      %v625 = vrot.slane %v623, 4
      %v626 = vshll.u32 %v274, 16
      %v628 = vrot.slane %v626, 5
      %v629 = vor.u32 %v625, %v628
      %v630 = vrot.slane %v629, 4
      %v632 = vshll.u32 %v275, 16
      %v634 = vrot.slane %v632, 5
      %v635 = vsel %vm309, %v630, %v634
      %v636 = vshrl.u32 %v275, 16
      %v638 = vrot.slane %v636, 4
      %v639 = vor.u32 %v638, %v634
      %v640 = vrot.slane %v639, 4
      %v642 = vshll.u32 %v276, 16
      %v644 = vrot.slane %v642, 5
      %v645 = vsel %vm309, %v640, %v644
      %v647 = vshrl.u32 %v277, 16
      %v649 = vrot.slane %v647, 4
      %v650 = vshll.u32 %v277, 16
      %v652 = vrot.slane %v650, 5
      %v653 = vor.u32 %v649, %v652
      %v654 = vrot.slane %v653, 4
      %v656 = vshll.u32 %v278, 16
      %v658 = vrot.slane %v656, 5
      %v659 = vsel %vm309, %v654, %v658
      %v660 = vshrl.u32 %v278, 16
      %v662 = vrot.slane %v660, 4
      %v663 = vor.u32 %v662, %v658
      %v664 = vrot.slane %v663, 4
      %v666 = vshll.u32 %v279, 16
      %v668 = vrot.slane %v666, 5
      %v669 = vsel %vm309, %v664, %v668
      %v671 = vshrl.u32 %v280, 16
      %v673 = vrot.slane %v671, 4
      %v674 = vshll.u32 %v280, 16
      %v676 = vrot.slane %v674, 5
      %v677 = vor.u32 %v673, %v676
      %v678 = vrot.slane %v677, 4
      %v680 = vshll.u32 %v281, 16
      %v682 = vrot.slane %v680, 5
      %v683 = vsel %vm309, %v678, %v682
      %v684 = vshrl.u32 %v281, 16
      %v686 = vrot.slane %v684, 4
      %v687 = vor.u32 %v686, %v682
      %v688 = vrot.slane %v687, 4
      %v690 = vshll.u32 %v282, 16
      %v692 = vrot.slane %v690, 5
      %v693 = vsel %vm309, %v688, %v692
      %v694 = vunpack.c.l.b16 %v323
      %v695 = vunpack.c.l.b16 %v333
      %v696 = vunpack.c.l.b16 %v347
      %v697 = vunpack.c.l.b16 %v357
      %v698 = vunpack.c.l.b16 %v371
      %v699 = vunpack.c.l.b16 %v381
      %v700 = vunpack.c.l.b16 %v395
      %v701 = vunpack.c.l.b16 %v405
      %v702 = vunpack.c.l.b16 %v419
      %v703 = vunpack.c.l.b16 %v429
      %v704 = vunpack.c.l.b16 %v443
      %v705 = vunpack.c.l.b16 %v453
      %v706 = vunpack.c.l.b16 %v467
      %v707 = vunpack.c.l.b16 %v477
      %v708 = vunpack.c.l.b16 %v491
      %v709 = vunpack.c.l.b16 %v501
      %v710 = vunpack.c.l.b16 %v515
      %v711 = vunpack.c.l.b16 %v525
      %v712 = vunpack.c.l.b16 %v539
      %v713 = vunpack.c.l.b16 %v549
      %v714 = vunpack.c.l.b16 %v563
      %v715 = vunpack.c.l.b16 %v573
      %v716 = vunpack.c.l.b16 %v587
      %v717 = vunpack.c.l.b16 %v597
      %v718 = vunpack.c.l.b16 %v611
      %v719 = vunpack.c.l.b16 %v621
      %v720 = vunpack.c.l.b16 %v635
      %v721 = vunpack.c.l.b16 %v645
      %v722 = vunpack.c.l.b16 %v659
      %v723 = vunpack.c.l.b16 %v669
      %v724 = vunpack.c.l.b16 %v683
      %v725 = vunpack.c.l.b16 %v693
      %v726 = vpack.c.b16 %v695, %v694
      %v727 = vpack.c.b16 %v697, %v696
      %v728 = vpack.c.b16 %v699, %v698
      %v729 = vpack.c.b16 %v701, %v700
      %v730 = vpack.c.b16 %v703, %v702
      %v731 = vpack.c.b16 %v705, %v704
      %v732 = vpack.c.b16 %v707, %v706
      %v733 = vpack.c.b16 %v709, %v708
      %v734 = vpack.c.b16 %v711, %v710
      %v735 = vpack.c.b16 %v713, %v712
      %v736 = vpack.c.b16 %v715, %v714
      %v737 = vpack.c.b16 %v717, %v716
      %v738 = vpack.c.b16 %v719, %v718
      %v739 = vpack.c.b16 %v721, %v720
      %v740 = vpack.c.b16 %v723, %v722
      %v741 = vpack.c.b16 %v725, %v724
      %v744 = vunpack.c.l.b16 %v291
      %v745 = vunpack.c.l.b16 %v292
      %v746 = vpack.c.b16 %v745, %v744
      %vm748 = vcmask 130048
      %v750 = vsel %vm748, %v726, 0
      %v753 = vsel %vm748, %v727, 0
      %v756 = vsel %vm748, %v728, 0
      %v759 = vsel %vm748, %v729, 0
      %v762 = vsel %vm748, %v730, 0
      %v765 = vsel %vm748, %v731, 0
      %v768 = vsel %vm748, %v732, 0
      %v771 = vsel %vm748, %v733, 0
      %v774 = vsel %vm748, %v734, 0
      %v777 = vsel %vm748, %v735, 0
      %v780 = vsel %vm748, %v736, 0
      %v783 = vsel %vm748, %v737, 0
      %v786 = vsel %vm748, %v738, 0
      %v789 = vsel %vm748, %v739, 0
      %v792 = vsel %vm748, %v740, 0
      %v795 = vsel %vm748, %v741, 0
      %797 = vmatprep.subr.bf16.mxu0 0
      %798 = vmatpush1.bf16.msra.mxu0 %v746
      %799 = vmatprep.subr.bf16.mxu0 0
      %800 = vmatpush1.bf16.msra.mxu0 0
      %801 = vmatprep.subr.bf16.mxu0 0
      %802 = vmatpush1.bf16.msra.mxu0 0
      %803 = vmatprep.subr.bf16.mxu0 0
      %804 = vmatpush1.bf16.msra.mxu0 0
      %805 = vmatprep.subr.bf16.mxu0 0
      %806 = vmatpush1.bf16.msra.mxu0 0
      %807 = vmatprep.subr.bf16.mxu0 0
      %808 = vmatpush1.bf16.msra.mxu0 0
      %809 = vmatprep.subr.bf16.mxu0 0
      %810 = vmatpush1.bf16.msra.mxu0 0
      %811 = vmatprep.subr.bf16.mxu0 0
      %812 = vmatpush1.bf16.msra.mxu0 0
      %813 = vmatprep.subr.bf16.mxu0 0
      %814 = vmatpush1.bf16.msra.mxu0 0
      %815 = vmatprep.subr.bf16.mxu0 0
      %816 = vmatpush1.bf16.msra.mxu0 0
      %817 = vmatprep.subr.bf16.mxu0 0
      %818 = vmatpush1.bf16.msra.mxu0 0
      %819 = vmatprep.subr.bf16.mxu0 0
      %820 = vmatpush1.bf16.msra.mxu0 0
      %821 = vmatprep.subr.bf16.mxu0 0
      %822 = vmatpush1.bf16.msra.mxu0 0
      %823 = vmatprep.subr.bf16.mxu0 0
      %824 = vmatpush1.bf16.msra.mxu0 0
      %825 = vmatprep.subr.bf16.mxu0 0
      %826 = vmatpush1.bf16.msra.mxu0 0
      %827 = vmatprep.subr.bf16.mxu0 0
      %828 = vmatpush1.bf16.msra.mxu0 0
      %829 = vmatprep.mubr.bf16.mxu0 0
      %830 = vmatmul.mubr.bf16.gmra.mrb[0].mxu0 %v750
      %v831 = vpop.f32.mrb[0].mxu0
      %v832 = vadd.f32 0.0, %v831
      %v833 = vpop.f32.mrb[0].mxu0
      %v834 = vpop.f32.mrb[0].mxu0
      %v835 = vadd.f32 0.0, %v834
      %v836 = vpop.f32.mrb[0].mxu0
      %837 = vmatprep.mubr.bf16.mxu0 0
      %838 = vmatmul.mubr.bf16.gmra.mrb[0].mxu0 %v753
      %v839 = vpop.f32.mrb[0].mxu0
      %v840 = vadd.f32 0.0, %v839
      %v841 = vpop.f32.mrb[0].mxu0
      %v842 = vpop.f32.mrb[0].mxu0
      %v843 = vadd.f32 0.0, %v842
      %v844 = vpop.f32.mrb[0].mxu0
      %845 = vmatprep.mubr.bf16.mxu0 0
      %846 = vmatmul.mubr.bf16.gmra.mrb[0].mxu0 %v756
      %v847 = vpop.f32.mrb[0].mxu0
      %v848 = vadd.f32 0.0, %v847
      %v849 = vpop.f32.mrb[0].mxu0
      %v850 = vpop.f32.mrb[0].mxu0
      %v851 = vadd.f32 0.0, %v850
      %v852 = vpop.f32.mrb[0].mxu0
      %853 = vmatprep.mubr.bf16.mxu0 0
      %854 = vmatmul.mubr.bf16.gmra.mrb[0].mxu0 %v759
      %v855 = vpop.f32.mrb[0].mxu0
      %v856 = vadd.f32 0.0, %v855
      %v857 = vpop.f32.mrb[0].mxu0
      %v858 = vpop.f32.mrb[0].mxu0
      %v859 = vadd.f32 0.0, %v858
      %v860 = vpop.f32.mrb[0].mxu0
      %861 = vmatprep.mubr.bf16.mxu0 0
      %862 = vmatmul.mubr.bf16.gmra.mrb[0].mxu0 %v762
      %v863 = vpop.f32.mrb[0].mxu0
      %v864 = vadd.f32 0.0, %v863
      %v865 = vpop.f32.mrb[0].mxu0
      %v866 = vpop.f32.mrb[0].mxu0
      %v867 = vadd.f32 0.0, %v866
      %v868 = vpop.f32.mrb[0].mxu0
      %869 = vmatprep.mubr.bf16.mxu0 0
      %870 = vmatmul.mubr.bf16.gmra.mrb[0].mxu0 %v765
      %v871 = vpop.f32.mrb[0].mxu0
      %v872 = vadd.f32 0.0, %v871
      %v873 = vpop.f32.mrb[0].mxu0
      %v874 = vpop.f32.mrb[0].mxu0
      %v875 = vadd.f32 0.0, %v874
      %v876 = vpop.f32.mrb[0].mxu0
      %877 = vmatprep.mubr.bf16.mxu0 0
      %878 = vmatmul.mubr.bf16.gmra.mrb[0].mxu0 %v768
      %v879 = vpop.f32.mrb[0].mxu0
      %v880 = vadd.f32 0.0, %v879
      %v881 = vpop.f32.mrb[0].mxu0
      %v882 = vpop.f32.mrb[0].mxu0
      %v883 = vadd.f32 0.0, %v882
      %v884 = vpop.f32.mrb[0].mxu0
      %885 = vmatprep.mubr.bf16.mxu0 0
      %886 = vmatmul.mubr.bf16.gmra.mrb[0].mxu0 %v771
      %v887 = vpop.f32.mrb[0].mxu0
      %v888 = vadd.f32 0.0, %v887
      %v889 = vpop.f32.mrb[0].mxu0
      %v890 = vpop.f32.mrb[0].mxu0
      %v891 = vadd.f32 0.0, %v890
      %v892 = vpop.f32.mrb[0].mxu0
      %893 = vmatprep.mubr.bf16.mxu0 0
      %894 = vmatmul.mubr.bf16.gmra.mrb[0].mxu0 %v774
      %v895 = vpop.f32.mrb[0].mxu0
      %v896 = vadd.f32 0.0, %v895
      %v897 = vpop.f32.mrb[0].mxu0
      %v898 = vpop.f32.mrb[0].mxu0
      %v899 = vadd.f32 0.0, %v898
      %v900 = vpop.f32.mrb[0].mxu0
      %901 = vmatprep.mubr.bf16.mxu0 0
      %902 = vmatmul.mubr.bf16.gmra.mrb[0].mxu0 %v777
      %v903 = vpop.f32.mrb[0].mxu0
      %v904 = vadd.f32 0.0, %v903
      %v905 = vpop.f32.mrb[0].mxu0
      %v906 = vpop.f32.mrb[0].mxu0
      %v907 = vadd.f32 0.0, %v906
      %v908 = vpop.f32.mrb[0].mxu0
      %909 = vmatprep.mubr.bf16.mxu0 0
      %910 = vmatmul.mubr.bf16.gmra.mrb[0].mxu0 %v780
      %v911 = vpop.f32.mrb[0].mxu0
      %v912 = vadd.f32 0.0, %v911
      %v913 = vpop.f32.mrb[0].mxu0
      %v914 = vpop.f32.mrb[0].mxu0
      %v915 = vadd.f32 0.0, %v914
      %v916 = vpop.f32.mrb[0].mxu0
      %917 = vmatprep.mubr.bf16.mxu0 0
      %918 = vmatmul.mubr.bf16.gmra.mrb[0].mxu0 %v783
      %v919 = vpop.f32.mrb[0].mxu0
      %v920 = vadd.f32 0.0, %v919
      %v921 = vpop.f32.mrb[0].mxu0
      %v922 = vpop.f32.mrb[0].mxu0
      %v923 = vadd.f32 0.0, %v922
      %v924 = vpop.f32.mrb[0].mxu0
      %925 = vmatprep.mubr.bf16.mxu0 0
      %926 = vmatmul.mubr.bf16.gmra.mrb[0].mxu0 %v786
      %v927 = vpop.f32.mrb[0].mxu0
      %v928 = vadd.f32 0.0, %v927
      %v929 = vpop.f32.mrb[0].mxu0
      %v930 = vpop.f32.mrb[0].mxu0
      %v931 = vadd.f32 0.0, %v930
      %v932 = vpop.f32.mrb[0].mxu0
      %933 = vmatprep.mubr.bf16.mxu0 0
      %934 = vmatmul.mubr.bf16.gmra.mrb[0].mxu0 %v789
      %v935 = vpop.f32.mrb[0].mxu0
      %v936 = vadd.f32 0.0, %v935
      %v937 = vpop.f32.mrb[0].mxu0
      %v938 = vpop.f32.mrb[0].mxu0
      %v939 = vadd.f32 0.0, %v938
      %v940 = vpop.f32.mrb[0].mxu0
      %941 = vmatprep.mubr.bf16.mxu0 0
      %942 = vmatmul.mubr.bf16.gmra.mrb[0].mxu0 %v792
      %v943 = vpop.f32.mrb[0].mxu0
      %v944 = vadd.f32 0.0, %v943
      %v945 = vpop.f32.mrb[0].mxu0
      %v946 = vpop.f32.mrb[0].mxu0
      %v947 = vadd.f32 0.0, %v946
      %v948 = vpop.f32.mrb[0].mxu0
      %949 = vmatprep.mubr.bf16.mxu0 0
      %950 = vmatmul.mubr.bf16.gmra.mrb[0].mxu0 %v795
      %v951 = vpop.f32.mrb[0].mxu0
      %v952 = vadd.f32 0.0, %v951
      %v953 = vpop.f32.mrb[0].mxu0
      %v954 = vpop.f32.mrb[0].mxu0
      %v955 = vadd.f32 0.0, %v954
      %v956 = vpop.f32.mrb[0].mxu0
      %957 = vdwg.mxu0
      %v990 = vunpack.c.l.b16 %v235
      %v991 = vunpack.c.l.b16 %v236
      %v992 = vunpack.c.l.b16 %v238
      %v993 = vunpack.c.l.b16 %v239
      %v994 = vunpack.c.l.b16 %v241
      %v995 = vunpack.c.l.b16 %v242
      %v996 = vunpack.c.l.b16 %v244
      %v997 = vunpack.c.l.b16 %v245
      %v998 = vunpack.c.l.b16 %v247
      %v999 = vunpack.c.l.b16 %v248
      %v1000 = vunpack.c.l.b16 %v250
      %v1001 = vunpack.c.l.b16 %v251
      %v1002 = vunpack.c.l.b16 %v253
      %v1003 = vunpack.c.l.b16 %v254
      %v1004 = vunpack.c.l.b16 %v256
      %v1005 = vunpack.c.l.b16 %v257
      %v1006 = vunpack.c.l.b16 %v259
      %v1007 = vunpack.c.l.b16 %v260
      %v1008 = vunpack.c.l.b16 %v262
      %v1009 = vunpack.c.l.b16 %v263
      %v1010 = vunpack.c.l.b16 %v265
      %v1011 = vunpack.c.l.b16 %v266
      %v1012 = vunpack.c.l.b16 %v268
      %v1013 = vunpack.c.l.b16 %v269
      %v1014 = vunpack.c.l.b16 %v271
      %v1015 = vunpack.c.l.b16 %v272
      %v1016 = vunpack.c.l.b16 %v274
      %v1017 = vunpack.c.l.b16 %v275
      %v1018 = vunpack.c.l.b16 %v277
      %v1019 = vunpack.c.l.b16 %v278
      %v1020 = vunpack.c.l.b16 %v280
      %v1021 = vunpack.c.l.b16 %v281
      %v1022 = vpack.c.b16 %v991, %v990
      %v1023 = vpack.c.b16 %v993, %v992
      %v1024 = vpack.c.b16 %v995, %v994
      %v1025 = vpack.c.b16 %v997, %v996
      %v1026 = vpack.c.b16 %v999, %v998
      %v1027 = vpack.c.b16 %v1001, %v1000
      %v1028 = vpack.c.b16 %v1003, %v1002
      %v1029 = vpack.c.b16 %v1005, %v1004
      %v1030 = vpack.c.b16 %v1007, %v1006
      %v1031 = vpack.c.b16 %v1009, %v1008
      %v1032 = vpack.c.b16 %v1011, %v1010
      %v1033 = vpack.c.b16 %v1013, %v1012
      %v1034 = vpack.c.b16 %v1015, %v1014
      %v1035 = vpack.c.b16 %v1017, %v1016
      %v1036 = vpack.c.b16 %v1019, %v1018
      %v1037 = vpack.c.b16 %v1021, %v1020
      %v1040 = vunpack.c.l.b16 %v289
      %v1041 = vunpack.c.l.b16 %v290
      %v1042 = vpack.c.b16 %v1041, %v1040
      %v1045 = vsel %vm748, %v1022, 0
      %v1048 = vsel %vm748, %v1023, 0
      %v1051 = vsel %vm748, %v1024, 0
      %v1054 = vsel %vm748, %v1025, 0
      %v1057 = vsel %vm748, %v1026, 0
      %v1060 = vsel %vm748, %v1027, 0
      %v1063 = vsel %vm748, %v1028, 0
      %v1066 = vsel %vm748, %v1029, 0
      %v1069 = vsel %vm748, %v1030, 0
      %v1072 = vsel %vm748, %v1031, 0
      %v1075 = vsel %vm748, %v1032, 0
      %v1078 = vsel %vm748, %v1033, 0
      %v1081 = vsel %vm748, %v1034, 0
      %v1084 = vsel %vm748, %v1035, 0
      %v1087 = vsel %vm748, %v1036, 0
      %v1090 = vsel %vm748, %v1037, 0
      %1092 = vmatprep.subr.bf16.mxu0 0
      %1093 = vmatpush1.bf16.msra.mxu0 %v1042
      %1094 = vmatprep.subr.bf16.mxu0 0
      %1095 = vmatpush1.bf16.msra.mxu0 0
      %1096 = vmatprep.subr.bf16.mxu0 0
      %1097 = vmatpush1.bf16.msra.mxu0 0
      %1098 = vmatprep.subr.bf16.mxu0 0
      %1099 = vmatpush1.bf16.msra.mxu0 0
      %1100 = vmatprep.subr.bf16.mxu0 0
      %1101 = vmatpush1.bf16.msra.mxu0 0
      %1102 = vmatprep.subr.bf16.mxu0 0
      %1103 = vmatpush1.bf16.msra.mxu0 0
      %1104 = vmatprep.subr.bf16.mxu0 0
      %1105 = vmatpush1.bf16.msra.mxu0 0
      %1106 = vmatprep.subr.bf16.mxu0 0
      %1107 = vmatpush1.bf16.msra.mxu0 0
      %1108 = vmatprep.subr.bf16.mxu0 0
      %1109 = vmatpush1.bf16.msra.mxu0 0
      %1110 = vmatprep.subr.bf16.mxu0 0
      %1111 = vmatpush1.bf16.msra.mxu0 0
      %1112 = vmatprep.subr.bf16.mxu0 0
      %1113 = vmatpush1.bf16.msra.mxu0 0
      %1114 = vmatprep.subr.bf16.mxu0 0
      %1115 = vmatpush1.bf16.msra.mxu0 0
      %1116 = vmatprep.subr.bf16.mxu0 0
      %1117 = vmatpush1.bf16.msra.mxu0 0
      %1118 = vmatprep.subr.bf16.mxu0 0
      %1119 = vmatpush1.bf16.msra.mxu0 0
      %1120 = vmatprep.subr.bf16.mxu0 0
      %1121 = vmatpush1.bf16.msra.mxu0 0
      %1122 = vmatprep.subr.bf16.mxu0 0
      %1123 = vmatpush1.bf16.msra.mxu0 0
      %1124 = vmatprep.mubr.bf16.mxu0 0
      %1125 = vmatmul.mubr.bf16.gmra.mrb[0].mxu0 %v1045
      %v1126 = vpop.f32.mrb[0].mxu0
      %v1127 = vadd.f32 %v832, %v1126
      %v1128 = vpop.f32.mrb[0].mxu0
      %v1129 = vpop.f32.mrb[0].mxu0
      %v1130 = vadd.f32 %v835, %v1129
      %v1131 = vpop.f32.mrb[0].mxu0
      %1132 = vmatprep.mubr.bf16.mxu0 0
      %1133 = vmatmul.mubr.bf16.gmra.mrb[0].mxu0 %v1048
      %v1134 = vpop.f32.mrb[0].mxu0
      %v1135 = vadd.f32 %v840, %v1134
      %v1136 = vpop.f32.mrb[0].mxu0
      %v1137 = vpop.f32.mrb[0].mxu0
      %v1138 = vadd.f32 %v843, %v1137
      %v1139 = vpop.f32.mrb[0].mxu0
      %1140 = vmatprep.mubr.bf16.mxu0 0
      %1141 = vmatmul.mubr.bf16.gmra.mrb[0].mxu0 %v1051
      %v1142 = vpop.f32.mrb[0].mxu0
      %v1143 = vadd.f32 %v848, %v1142
      %v1144 = vpop.f32.mrb[0].mxu0
      %v1145 = vpop.f32.mrb[0].mxu0
      %v1146 = vadd.f32 %v851, %v1145
      %v1147 = vpop.f32.mrb[0].mxu0
      %1148 = vmatprep.mubr.bf16.mxu0 0
      %1149 = vmatmul.mubr.bf16.gmra.mrb[0].mxu0 %v1054
      %v1150 = vpop.f32.mrb[0].mxu0
      %v1151 = vadd.f32 %v856, %v1150
      %v1152 = vpop.f32.mrb[0].mxu0
      %v1153 = vpop.f32.mrb[0].mxu0
      %v1154 = vadd.f32 %v859, %v1153
      %v1155 = vpop.f32.mrb[0].mxu0
      %1156 = vmatprep.mubr.bf16.mxu0 0
      %1157 = vmatmul.mubr.bf16.gmra.mrb[0].mxu0 %v1057
      %v1158 = vpop.f32.mrb[0].mxu0
      %v1159 = vadd.f32 %v864, %v1158
      %v1160 = vpop.f32.mrb[0].mxu0
      %v1161 = vpop.f32.mrb[0].mxu0
      %v1162 = vadd.f32 %v867, %v1161
      %v1163 = vpop.f32.mrb[0].mxu0
      %1164 = vmatprep.mubr.bf16.mxu0 0
      %1165 = vmatmul.mubr.bf16.gmra.mrb[0].mxu0 %v1060
      %v1166 = vpop.f32.mrb[0].mxu0
      %v1167 = vadd.f32 %v872, %v1166
      %v1168 = vpop.f32.mrb[0].mxu0
      %v1169 = vpop.f32.mrb[0].mxu0
      %v1170 = vadd.f32 %v875, %v1169
      %v1171 = vpop.f32.mrb[0].mxu0
      %1172 = vmatprep.mubr.bf16.mxu0 0
      %1173 = vmatmul.mubr.bf16.gmra.mrb[0].mxu0 %v1063
      %v1174 = vpop.f32.mrb[0].mxu0
      %v1175 = vadd.f32 %v880, %v1174
      %v1176 = vpop.f32.mrb[0].mxu0
      %v1177 = vpop.f32.mrb[0].mxu0
      %v1178 = vadd.f32 %v883, %v1177
      %v1179 = vpop.f32.mrb[0].mxu0
      %1180 = vmatprep.mubr.bf16.mxu0 0
      %1181 = vmatmul.mubr.bf16.gmra.mrb[0].mxu0 %v1066
      %v1182 = vpop.f32.mrb[0].mxu0
      %v1183 = vadd.f32 %v888, %v1182
      %v1184 = vpop.f32.mrb[0].mxu0
      %v1185 = vpop.f32.mrb[0].mxu0
      %v1186 = vadd.f32 %v891, %v1185
      %v1187 = vpop.f32.mrb[0].mxu0
      %1188 = vmatprep.mubr.bf16.mxu0 0
      %1189 = vmatmul.mubr.bf16.gmra.mrb[0].mxu0 %v1069
      %v1190 = vpop.f32.mrb[0].mxu0
      %v1191 = vadd.f32 %v896, %v1190
      %v1192 = vpop.f32.mrb[0].mxu0
      %v1193 = vpop.f32.mrb[0].mxu0
      %v1194 = vadd.f32 %v899, %v1193
      %v1195 = vpop.f32.mrb[0].mxu0
      %1196 = vmatprep.mubr.bf16.mxu0 0
      %1197 = vmatmul.mubr.bf16.gmra.mrb[0].mxu0 %v1072
      %v1198 = vpop.f32.mrb[0].mxu0
      %v1199 = vadd.f32 %v904, %v1198
      %v1200 = vpop.f32.mrb[0].mxu0
      %v1201 = vpop.f32.mrb[0].mxu0
      %v1202 = vadd.f32 %v907, %v1201
      %v1203 = vpop.f32.mrb[0].mxu0
      %1204 = vmatprep.mubr.bf16.mxu0 0
      %1205 = vmatmul.mubr.bf16.gmra.mrb[0].mxu0 %v1075
      %v1206 = vpop.f32.mrb[0].mxu0
      %v1207 = vadd.f32 %v912, %v1206
      %v1208 = vpop.f32.mrb[0].mxu0
      %v1209 = vpop.f32.mrb[0].mxu0
      %v1210 = vadd.f32 %v915, %v1209
      %v1211 = vpop.f32.mrb[0].mxu0
      %1212 = vmatprep.mubr.bf16.mxu0 0
      %1213 = vmatmul.mubr.bf16.gmra.mrb[0].mxu0 %v1078
      %v1214 = vpop.f32.mrb[0].mxu0
      %v1215 = vadd.f32 %v920, %v1214
      %v1216 = vpop.f32.mrb[0].mxu0
      %v1217 = vpop.f32.mrb[0].mxu0
      %v1218 = vadd.f32 %v923, %v1217
      %v1219 = vpop.f32.mrb[0].mxu0
      %1220 = vmatprep.mubr.bf16.mxu0 0
      %1221 = vmatmul.mubr.bf16.gmra.mrb[0].mxu0 %v1081
      %v1222 = vpop.f32.mrb[0].mxu0
      %v1223 = vadd.f32 %v928, %v1222
      %v1224 = vpop.f32.mrb[0].mxu0
      %v1225 = vpop.f32.mrb[0].mxu0
      %v1226 = vadd.f32 %v931, %v1225
      %v1227 = vpop.f32.mrb[0].mxu0
      %1228 = vmatprep.mubr.bf16.mxu0 0
      %1229 = vmatmul.mubr.bf16.gmra.mrb[0].mxu0 %v1084
      %v1230 = vpop.f32.mrb[0].mxu0
      %v1231 = vadd.f32 %v936, %v1230
      %v1232 = vpop.f32.mrb[0].mxu0
      %v1233 = vpop.f32.mrb[0].mxu0
      %v1234 = vadd.f32 %v939, %v1233
      %v1235 = vpop.f32.mrb[0].mxu0
      %1236 = vmatprep.mubr.bf16.mxu0 0
      %1237 = vmatmul.mubr.bf16.gmra.mrb[0].mxu0 %v1087
      %v1238 = vpop.f32.mrb[0].mxu0
      %v1239 = vadd.f32 %v944, %v1238
      %v1240 = vpop.f32.mrb[0].mxu0
      %v1241 = vpop.f32.mrb[0].mxu0
      %v1242 = vadd.f32 %v947, %v1241
      %v1243 = vpop.f32.mrb[0].mxu0
      %1244 = vmatprep.mubr.bf16.mxu0 0
      %1245 = vmatmul.mubr.bf16.gmra.mrb[0].mxu0 %v1090
      %v1246 = vpop.f32.mrb[0].mxu0
      %v1247 = vadd.f32 %v952, %v1246
      %v1248 = vpop.f32.mrb[0].mxu0
      %v1249 = vpop.f32.mrb[0].mxu0
      %v1250 = vadd.f32 %v955, %v1249
      %v1251 = vpop.f32.mrb[0].mxu0
      %1252 = vdwg.mxu0
      %vm1269 = vcmask 1042432
      %vm1270 = vcmask 1046532
      %vm1271 = vmor %vm1269, %vm1270
      %v1272 = vrot.slane %v235, 5
      %v1273 = vrot.slane %v1272, 4
      %v1274 = vrot.slane %v236, 5
      %v1275 = vsel %vm1271, %v1273, %v1274
      %v1276 = vrot.slane %v1274, 4
      %v1277 = vrot.slane %v237, 5
      %v1278 = vsel %vm1271, %v1276, %v1277
      %v1279 = vrot.slane %v238, 5
      %v1280 = vrot.slane %v1279, 4
      %v1281 = vrot.slane %v239, 5
      %v1282 = vsel %vm1271, %v1280, %v1281
      %v1283 = vrot.slane %v1281, 4
      %v1284 = vrot.slane %v240, 5
      %v1285 = vsel %vm1271, %v1283, %v1284
      %v1286 = vrot.slane %v241, 5
      %v1287 = vrot.slane %v1286, 4
      %v1288 = vrot.slane %v242, 5
      %v1289 = vsel %vm1271, %v1287, %v1288
      %v1290 = vrot.slane %v1288, 4
      %v1291 = vrot.slane %v243, 5
      %v1292 = vsel %vm1271, %v1290, %v1291
      %v1293 = vrot.slane %v244, 5
      %v1294 = vrot.slane %v1293, 4
      %v1295 = vrot.slane %v245, 5
      %v1296 = vsel %vm1271, %v1294, %v1295
      %v1297 = vrot.slane %v1295, 4
      %v1298 = vrot.slane %v246, 5
      %v1299 = vsel %vm1271, %v1297, %v1298
      %v1300 = vrot.slane %v247, 5
      %v1301 = vrot.slane %v1300, 4
      %v1302 = vrot.slane %v248, 5
      %v1303 = vsel %vm1271, %v1301, %v1302
      %v1304 = vrot.slane %v1302, 4
      %v1305 = vrot.slane %v249, 5
      %v1306 = vsel %vm1271, %v1304, %v1305
      %v1307 = vrot.slane %v250, 5
      %v1308 = vrot.slane %v1307, 4
      %v1309 = vrot.slane %v251, 5
      %v1310 = vsel %vm1271, %v1308, %v1309
      %v1311 = vrot.slane %v1309, 4
      %v1312 = vrot.slane %v252, 5
      %v1313 = vsel %vm1271, %v1311, %v1312
      %v1314 = vrot.slane %v253, 5
      %v1315 = vrot.slane %v1314, 4
      %v1316 = vrot.slane %v254, 5
      %v1317 = vsel %vm1271, %v1315, %v1316
      %v1318 = vrot.slane %v1316, 4
      %v1319 = vrot.slane %v255, 5
      %v1320 = vsel %vm1271, %v1318, %v1319
      %v1321 = vrot.slane %v256, 5
      %v1322 = vrot.slane %v1321, 4
      %v1323 = vrot.slane %v257, 5
      %v1324 = vsel %vm1271, %v1322, %v1323
      %v1325 = vrot.slane %v1323, 4
      %v1326 = vrot.slane %v258, 5
      %v1327 = vsel %vm1271, %v1325, %v1326
      %v1328 = vrot.slane %v259, 5
      %v1329 = vrot.slane %v1328, 4
      %v1330 = vrot.slane %v260, 5
      %v1331 = vsel %vm1271, %v1329, %v1330
      %v1332 = vrot.slane %v1330, 4
      %v1333 = vrot.slane %v261, 5
      %v1334 = vsel %vm1271, %v1332, %v1333
      %v1335 = vrot.slane %v262, 5
      %v1336 = vrot.slane %v1335, 4
      %v1337 = vrot.slane %v263, 5
      %v1338 = vsel %vm1271, %v1336, %v1337
      %v1339 = vrot.slane %v1337, 4
      %v1340 = vrot.slane %v264, 5
      %v1341 = vsel %vm1271, %v1339, %v1340
      %v1342 = vrot.slane %v265, 5
      %v1343 = vrot.slane %v1342, 4
      %v1344 = vrot.slane %v266, 5
      %v1345 = vsel %vm1271, %v1343, %v1344
      %v1346 = vrot.slane %v1344, 4
      %v1347 = vrot.slane %v267, 5
      %v1348 = vsel %vm1271, %v1346, %v1347
      %v1349 = vrot.slane %v268, 5
      %v1350 = vrot.slane %v1349, 4
      %v1351 = vrot.slane %v269, 5
      %v1352 = vsel %vm1271, %v1350, %v1351
      %v1353 = vrot.slane %v1351, 4
      %v1354 = vrot.slane %v270, 5
      %v1355 = vsel %vm1271, %v1353, %v1354
      %v1356 = vrot.slane %v271, 5
      %v1357 = vrot.slane %v1356, 4
      %v1358 = vrot.slane %v272, 5
      %v1359 = vsel %vm1271, %v1357, %v1358
      %v1360 = vrot.slane %v1358, 4
      %v1361 = vrot.slane %v273, 5
      %v1362 = vsel %vm1271, %v1360, %v1361
      %v1363 = vrot.slane %v274, 5
      %v1364 = vrot.slane %v1363, 4
      %v1365 = vrot.slane %v275, 5
      %v1366 = vsel %vm1271, %v1364, %v1365
      %v1367 = vrot.slane %v1365, 4
      %v1368 = vrot.slane %v276, 5
      %v1369 = vsel %vm1271, %v1367, %v1368
      %v1370 = vrot.slane %v277, 5
      %v1371 = vrot.slane %v1370, 4
      %v1372 = vrot.slane %v278, 5
      %v1373 = vsel %vm1271, %v1371, %v1372
      %v1374 = vrot.slane %v1372, 4
      %v1375 = vrot.slane %v279, 5
      %v1376 = vsel %vm1271, %v1374, %v1375
      %v1377 = vrot.slane %v280, 5
      %v1378 = vrot.slane %v1377, 4
      %v1379 = vrot.slane %v281, 5
      %v1380 = vsel %vm1271, %v1378, %v1379
      %v1381 = vrot.slane %v1379, 4
      %v1382 = vrot.slane %v282, 5
      %v1383 = vsel %vm1271, %v1381, %v1382
      %v1384 = vunpack.c.l.b16 %v1275
      %v1385 = vunpack.c.l.b16 %v1278
      %v1386 = vunpack.c.l.b16 %v1282
      %v1387 = vunpack.c.l.b16 %v1285
      %v1388 = vunpack.c.l.b16 %v1289
      %v1389 = vunpack.c.l.b16 %v1292
      %v1390 = vunpack.c.l.b16 %v1296
      %v1391 = vunpack.c.l.b16 %v1299
      %v1392 = vunpack.c.l.b16 %v1303
      %v1393 = vunpack.c.l.b16 %v1306
      %v1394 = vunpack.c.l.b16 %v1310
      %v1395 = vunpack.c.l.b16 %v1313
      %v1396 = vunpack.c.l.b16 %v1317
      %v1397 = vunpack.c.l.b16 %v1320
      %v1398 = vunpack.c.l.b16 %v1324
      %v1399 = vunpack.c.l.b16 %v1327
      %v1400 = vunpack.c.l.b16 %v1331
      %v1401 = vunpack.c.l.b16 %v1334
      %v1402 = vunpack.c.l.b16 %v1338
      %v1403 = vunpack.c.l.b16 %v1341
      %v1404 = vunpack.c.l.b16 %v1345
      %v1405 = vunpack.c.l.b16 %v1348
      %v1406 = vunpack.c.l.b16 %v1352
      %v1407 = vunpack.c.l.b16 %v1355
      %v1408 = vunpack.c.l.b16 %v1359
      %v1409 = vunpack.c.l.b16 %v1362
      %v1410 = vunpack.c.l.b16 %v1366
      %v1411 = vunpack.c.l.b16 %v1369
      %v1412 = vunpack.c.l.b16 %v1373
      %v1413 = vunpack.c.l.b16 %v1376
      %v1414 = vunpack.c.l.b16 %v1380
      %v1415 = vunpack.c.l.b16 %v1383
      %v1416 = vpack.c.b16 %v1385, %v1384
      %v1417 = vpack.c.b16 %v1387, %v1386
      %v1418 = vpack.c.b16 %v1389, %v1388
      %v1419 = vpack.c.b16 %v1391, %v1390
      %v1420 = vpack.c.b16 %v1393, %v1392
      %v1421 = vpack.c.b16 %v1395, %v1394
      %v1422 = vpack.c.b16 %v1397, %v1396
      %v1423 = vpack.c.b16 %v1399, %v1398
      %v1424 = vpack.c.b16 %v1401, %v1400
      %v1425 = vpack.c.b16 %v1403, %v1402
      %v1426 = vpack.c.b16 %v1405, %v1404
      %v1427 = vpack.c.b16 %v1407, %v1406
      %v1428 = vpack.c.b16 %v1409, %v1408
      %v1429 = vpack.c.b16 %v1411, %v1410
      %v1430 = vpack.c.b16 %v1413, %v1412
      %v1431 = vpack.c.b16 %v1415, %v1414
      %v1434 = vunpack.c.l.b16 %v293
      %v1435 = vunpack.c.l.b16 %v294
      %v1436 = vpack.c.b16 %v1435, %v1434
      %v1439 = vsel %vm748, %v1416, 0
      %v1442 = vsel %vm748, %v1417, 0
      %v1445 = vsel %vm748, %v1418, 0
      %v1448 = vsel %vm748, %v1419, 0
      %v1451 = vsel %vm748, %v1420, 0
      %v1454 = vsel %vm748, %v1421, 0
      %v1457 = vsel %vm748, %v1422, 0
      %v1460 = vsel %vm748, %v1423, 0
      %v1463 = vsel %vm748, %v1424, 0
      %v1466 = vsel %vm748, %v1425, 0
      %v1469 = vsel %vm748, %v1426, 0
      %v1472 = vsel %vm748, %v1427, 0
      %v1475 = vsel %vm748, %v1428, 0
      %v1478 = vsel %vm748, %v1429, 0
      %v1481 = vsel %vm748, %v1430, 0
      %v1484 = vsel %vm748, %v1431, 0
      %1486 = vmatprep.subr.bf16.mxu0 0
      %1487 = vmatpush1.bf16.msra.mxu0 %v1436
      %1488 = vmatprep.subr.bf16.mxu0 0
      %1489 = vmatpush1.bf16.msra.mxu0 0
      %1490 = vmatprep.subr.bf16.mxu0 0
      %1491 = vmatpush1.bf16.msra.mxu0 0
      %1492 = vmatprep.subr.bf16.mxu0 0
      %1493 = vmatpush1.bf16.msra.mxu0 0
      %1494 = vmatprep.subr.bf16.mxu0 0
      %1495 = vmatpush1.bf16.msra.mxu0 0
      %1496 = vmatprep.subr.bf16.mxu0 0
      %1497 = vmatpush1.bf16.msra.mxu0 0
      %1498 = vmatprep.subr.bf16.mxu0 0
      %1499 = vmatpush1.bf16.msra.mxu0 0
      %1500 = vmatprep.subr.bf16.mxu0 0
      %1501 = vmatpush1.bf16.msra.mxu0 0
      %1502 = vmatprep.subr.bf16.mxu0 0
      %1503 = vmatpush1.bf16.msra.mxu0 0
      %1504 = vmatprep.subr.bf16.mxu0 0
      %1505 = vmatpush1.bf16.msra.mxu0 0
      %1506 = vmatprep.subr.bf16.mxu0 0
      %1507 = vmatpush1.bf16.msra.mxu0 0
      %1508 = vmatprep.subr.bf16.mxu0 0
      %1509 = vmatpush1.bf16.msra.mxu0 0
      %1510 = vmatprep.subr.bf16.mxu0 0
      %1511 = vmatpush1.bf16.msra.mxu0 0
      %1512 = vmatprep.subr.bf16.mxu0 0
      %1513 = vmatpush1.bf16.msra.mxu0 0
      %1514 = vmatprep.subr.bf16.mxu0 0
      %1515 = vmatpush1.bf16.msra.mxu0 0
      %1516 = vmatprep.subr.bf16.mxu0 0
      %1517 = vmatpush1.bf16.msra.mxu0 0
      %1518 = vmatprep.mubr.bf16.mxu0 0
      %1519 = vmatmul.mubr.bf16.gmra.mrb[0].mxu0 %v1439
      %v1520 = vpop.f32.mrb[0].mxu0
      %v1521 = vadd.f32 0.0, %v1520
      %v1522 = vpop.f32.mrb[0].mxu0
      %v1523 = vpop.f32.mrb[0].mxu0
      %v1524 = vadd.f32 0.0, %v1523
      %v1525 = vpop.f32.mrb[0].mxu0
      %1526 = vmatprep.mubr.bf16.mxu0 0
      %1527 = vmatmul.mubr.bf16.gmra.mrb[0].mxu0 %v1442
      %v1528 = vpop.f32.mrb[0].mxu0
      %v1529 = vadd.f32 0.0, %v1528
      %v1530 = vpop.f32.mrb[0].mxu0
      %v1531 = vpop.f32.mrb[0].mxu0
      %v1532 = vadd.f32 0.0, %v1531
      %v1533 = vpop.f32.mrb[0].mxu0
      %1534 = vmatprep.mubr.bf16.mxu0 0
      %1535 = vmatmul.mubr.bf16.gmra.mrb[0].mxu0 %v1445
      %v1536 = vpop.f32.mrb[0].mxu0
      %v1537 = vadd.f32 0.0, %v1536
      %v1538 = vpop.f32.mrb[0].mxu0
      %v1539 = vpop.f32.mrb[0].mxu0
      %v1540 = vadd.f32 0.0, %v1539
      %v1541 = vpop.f32.mrb[0].mxu0
      %1542 = vmatprep.mubr.bf16.mxu0 0
      %1543 = vmatmul.mubr.bf16.gmra.mrb[0].mxu0 %v1448
      %v1544 = vpop.f32.mrb[0].mxu0
      %v1545 = vadd.f32 0.0, %v1544
      %v1546 = vpop.f32.mrb[0].mxu0
      %v1547 = vpop.f32.mrb[0].mxu0
      %v1548 = vadd.f32 0.0, %v1547
      %v1549 = vpop.f32.mrb[0].mxu0
      %1550 = vmatprep.mubr.bf16.mxu0 0
      %1551 = vmatmul.mubr.bf16.gmra.mrb[0].mxu0 %v1451
      %v1552 = vpop.f32.mrb[0].mxu0
      %v1553 = vadd.f32 0.0, %v1552
      %v1554 = vpop.f32.mrb[0].mxu0
      %v1555 = vpop.f32.mrb[0].mxu0
      %v1556 = vadd.f32 0.0, %v1555
      %v1557 = vpop.f32.mrb[0].mxu0
      %1558 = vmatprep.mubr.bf16.mxu0 0
      %1559 = vmatmul.mubr.bf16.gmra.mrb[0].mxu0 %v1454
      %v1560 = vpop.f32.mrb[0].mxu0
      %v1561 = vadd.f32 0.0, %v1560
      %v1562 = vpop.f32.mrb[0].mxu0
      %v1563 = vpop.f32.mrb[0].mxu0
      %v1564 = vadd.f32 0.0, %v1563
      %v1565 = vpop.f32.mrb[0].mxu0
      %1566 = vmatprep.mubr.bf16.mxu0 0
      %1567 = vmatmul.mubr.bf16.gmra.mrb[0].mxu0 %v1457
      %v1568 = vpop.f32.mrb[0].mxu0
      %v1569 = vadd.f32 0.0, %v1568
      %v1570 = vpop.f32.mrb[0].mxu0
      %v1571 = vpop.f32.mrb[0].mxu0
      %v1572 = vadd.f32 0.0, %v1571
      %v1573 = vpop.f32.mrb[0].mxu0
      %1574 = vmatprep.mubr.bf16.mxu0 0
      %1575 = vmatmul.mubr.bf16.gmra.mrb[0].mxu0 %v1460
      %v1576 = vpop.f32.mrb[0].mxu0
      %v1577 = vadd.f32 0.0, %v1576
      %v1578 = vpop.f32.mrb[0].mxu0
      %v1579 = vpop.f32.mrb[0].mxu0
      %v1580 = vadd.f32 0.0, %v1579
      %v1581 = vpop.f32.mrb[0].mxu0
      %1582 = vmatprep.mubr.bf16.mxu0 0
      %1583 = vmatmul.mubr.bf16.gmra.mrb[0].mxu0 %v1463
      %v1584 = vpop.f32.mrb[0].mxu0
      %v1585 = vadd.f32 0.0, %v1584
      %v1586 = vpop.f32.mrb[0].mxu0
      %v1587 = vpop.f32.mrb[0].mxu0
      %v1588 = vadd.f32 0.0, %v1587
      %v1589 = vpop.f32.mrb[0].mxu0
      %1590 = vmatprep.mubr.bf16.mxu0 0
      %1591 = vmatmul.mubr.bf16.gmra.mrb[0].mxu0 %v1466
      %v1592 = vpop.f32.mrb[0].mxu0
      %v1593 = vadd.f32 0.0, %v1592
      %v1594 = vpop.f32.mrb[0].mxu0
      %v1595 = vpop.f32.mrb[0].mxu0
      %v1596 = vadd.f32 0.0, %v1595
      %v1597 = vpop.f32.mrb[0].mxu0
      %1598 = vmatprep.mubr.bf16.mxu0 0
      %1599 = vmatmul.mubr.bf16.gmra.mrb[0].mxu0 %v1469
      %v1600 = vpop.f32.mrb[0].mxu0
      %v1601 = vadd.f32 0.0, %v1600
      %v1602 = vpop.f32.mrb[0].mxu0
      %v1603 = vpop.f32.mrb[0].mxu0
      %v1604 = vadd.f32 0.0, %v1603
      %v1605 = vpop.f32.mrb[0].mxu0
      %1606 = vmatprep.mubr.bf16.mxu0 0
      %1607 = vmatmul.mubr.bf16.gmra.mrb[0].mxu0 %v1472
      %v1608 = vpop.f32.mrb[0].mxu0
      %v1609 = vadd.f32 0.0, %v1608
      %v1610 = vpop.f32.mrb[0].mxu0
      %v1611 = vpop.f32.mrb[0].mxu0
      %v1612 = vadd.f32 0.0, %v1611
      %v1613 = vpop.f32.mrb[0].mxu0
      %1614 = vmatprep.mubr.bf16.mxu0 0
      %1615 = vmatmul.mubr.bf16.gmra.mrb[0].mxu0 %v1475
      %v1616 = vpop.f32.mrb[0].mxu0
      %v1617 = vadd.f32 0.0, %v1616
      %v1618 = vpop.f32.mrb[0].mxu0
      %v1619 = vpop.f32.mrb[0].mxu0
      %v1620 = vadd.f32 0.0, %v1619
      %v1621 = vpop.f32.mrb[0].mxu0
      %1622 = vmatprep.mubr.bf16.mxu0 0
      %1623 = vmatmul.mubr.bf16.gmra.mrb[0].mxu0 %v1478
      %v1624 = vpop.f32.mrb[0].mxu0
      %v1625 = vadd.f32 0.0, %v1624
      %v1626 = vpop.f32.mrb[0].mxu0
      %v1627 = vpop.f32.mrb[0].mxu0
      %v1628 = vadd.f32 0.0, %v1627
      %v1629 = vpop.f32.mrb[0].mxu0
      %1630 = vmatprep.mubr.bf16.mxu0 0
      %1631 = vmatmul.mubr.bf16.gmra.mrb[0].mxu0 %v1481
      %v1632 = vpop.f32.mrb[0].mxu0
      %v1633 = vadd.f32 0.0, %v1632
      %v1634 = vpop.f32.mrb[0].mxu0
      %v1635 = vpop.f32.mrb[0].mxu0
      %v1636 = vadd.f32 0.0, %v1635
      %v1637 = vpop.f32.mrb[0].mxu0
      %1638 = vmatprep.mubr.bf16.mxu0 0
      %1639 = vmatmul.mubr.bf16.gmra.mrb[0].mxu0 %v1484
      %v1640 = vpop.f32.mrb[0].mxu0
      %v1641 = vadd.f32 0.0, %v1640
      %v1642 = vpop.f32.mrb[0].mxu0
      %v1643 = vpop.f32.mrb[0].mxu0
      %v1644 = vadd.f32 0.0, %v1643
      %v1645 = vpop.f32.mrb[0].mxu0
      %1646 = vdwg.mxu0
      %v1647 = vadd.f32 %v1127, %v1521
      %v1648 = vadd.f32 %v1130, %v1524
      %v1649 = vadd.f32 %v1135, %v1529
      %v1650 = vadd.f32 %v1138, %v1532
      %v1651 = vadd.f32 %v1143, %v1537
      %v1652 = vadd.f32 %v1146, %v1540
      %v1653 = vadd.f32 %v1151, %v1545
      %v1654 = vadd.f32 %v1154, %v1548
      %v1655 = vadd.f32 %v1159, %v1553
      %v1656 = vadd.f32 %v1162, %v1556
      %v1657 = vadd.f32 %v1167, %v1561
      %v1658 = vadd.f32 %v1170, %v1564
      %v1659 = vadd.f32 %v1175, %v1569
      %v1660 = vadd.f32 %v1178, %v1572
      %v1661 = vadd.f32 %v1183, %v1577
      %v1662 = vadd.f32 %v1186, %v1580
      %v1663 = vadd.f32 %v1191, %v1585
      %v1664 = vadd.f32 %v1194, %v1588
      %v1665 = vadd.f32 %v1199, %v1593
      %v1666 = vadd.f32 %v1202, %v1596
      %v1667 = vadd.f32 %v1207, %v1601
      %v1668 = vadd.f32 %v1210, %v1604
      %v1669 = vadd.f32 %v1215, %v1609
      %v1670 = vadd.f32 %v1218, %v1612
      %v1671 = vadd.f32 %v1223, %v1617
      %v1672 = vadd.f32 %v1226, %v1620
      %v1673 = vadd.f32 %v1231, %v1625
      %v1674 = vadd.f32 %v1234, %v1628
      %v1675 = vadd.f32 %v1239, %v1633
      %v1676 = vadd.f32 %v1242, %v1636
      %v1677 = vadd.f32 %v1247, %v1641
      %v1678 = vadd.f32 %v1250, %v1644
      %v1681 = vunpack.c.l.b16 %v283
      %v1682 = vunpack.c.l.b16 %v284
      %v1683 = vpack.c.b16 %v1682, %v1681
      %v1686 = vunpack.c.l.b16 %v295
      %v1687 = vunpack.c.l.b16 %v296
      %v1688 = vpack.c.b16 %v1687, %v1686
      %v1691 = vsel %vm748, %v1683, 0
      %1693 = vmatprep.subr.bf16.mxu0 0
      %1694 = vmatpush1.bf16.msra.mxu0 %v1688
      %1695 = vmatprep.subr.bf16.mxu0 0
      %1696 = vmatpush1.bf16.msra.mxu0 0
      %1697 = vmatprep.subr.bf16.mxu0 0
      %1698 = vmatpush1.bf16.msra.mxu0 0
      %1699 = vmatprep.subr.bf16.mxu0 0
      %1700 = vmatpush1.bf16.msra.mxu0 0
      %1701 = vmatprep.subr.bf16.mxu0 0
      %1702 = vmatpush1.bf16.msra.mxu0 0
      %1703 = vmatprep.subr.bf16.mxu0 0
      %1704 = vmatpush1.bf16.msra.mxu0 0
      %1705 = vmatprep.subr.bf16.mxu0 0
      %1706 = vmatpush1.bf16.msra.mxu0 0
      %1707 = vmatprep.subr.bf16.mxu0 0
      %1708 = vmatpush1.bf16.msra.mxu0 0
      %1709 = vmatprep.subr.bf16.mxu0 0
      %1710 = vmatpush1.bf16.msra.mxu0 0
      %1711 = vmatprep.subr.bf16.mxu0 0
      %1712 = vmatpush1.bf16.msra.mxu0 0
      %1713 = vmatprep.subr.bf16.mxu0 0
      %1714 = vmatpush1.bf16.msra.mxu0 0
      %1715 = vmatprep.subr.bf16.mxu0 0
      %1716 = vmatpush1.bf16.msra.mxu0 0
      %1717 = vmatprep.subr.bf16.mxu0 0
      %1718 = vmatpush1.bf16.msra.mxu0 0
      %1719 = vmatprep.subr.bf16.mxu0 0
      %1720 = vmatpush1.bf16.msra.mxu0 0
      %1721 = vmatprep.subr.bf16.mxu0 0
      %1722 = vmatpush1.bf16.msra.mxu0 0
      %1723 = vmatprep.subr.bf16.mxu0 0
      %1724 = vmatpush1.bf16.msra.mxu0 0
      %1725 = vmatprep.mubr.bf16.mxu0 0
      %1726 = vmatmul.mubr.bf16.gmra.mrb[0].mxu0 %v1048
      %v1727 = vpop.f32.mrb[0].mxu0
      %v1728 = vadd.f32 0.0, %v1727
      %v1729 = vpop.f32.mrb[0].mxu0
      %v1730 = vpop.f32.mrb[0].mxu0
      %v1731 = vadd.f32 0.0, %v1730
      %v1732 = vpop.f32.mrb[0].mxu0
      %1733 = vmatprep.mubr.bf16.mxu0 0
      %1734 = vmatmul.mubr.bf16.gmra.mrb[0].mxu0 %v1051
      %v1735 = vpop.f32.mrb[0].mxu0
      %v1736 = vadd.f32 0.0, %v1735
      %v1737 = vpop.f32.mrb[0].mxu0
      %v1738 = vpop.f32.mrb[0].mxu0
      %v1739 = vadd.f32 0.0, %v1738
      %v1740 = vpop.f32.mrb[0].mxu0
      %1741 = vmatprep.mubr.bf16.mxu0 0
      %1742 = vmatmul.mubr.bf16.gmra.mrb[0].mxu0 %v1054
      %v1743 = vpop.f32.mrb[0].mxu0
      %v1744 = vadd.f32 0.0, %v1743
      %v1745 = vpop.f32.mrb[0].mxu0
      %v1746 = vpop.f32.mrb[0].mxu0
      %v1747 = vadd.f32 0.0, %v1746
      %v1748 = vpop.f32.mrb[0].mxu0
      %1749 = vmatprep.mubr.bf16.mxu0 0
      %1750 = vmatmul.mubr.bf16.gmra.mrb[0].mxu0 %v1057
      %v1751 = vpop.f32.mrb[0].mxu0
      %v1752 = vadd.f32 0.0, %v1751
      %v1753 = vpop.f32.mrb[0].mxu0
      %v1754 = vpop.f32.mrb[0].mxu0
      %v1755 = vadd.f32 0.0, %v1754
      %v1756 = vpop.f32.mrb[0].mxu0
      %1757 = vmatprep.mubr.bf16.mxu0 0
      %1758 = vmatmul.mubr.bf16.gmra.mrb[0].mxu0 %v1060
      %v1759 = vpop.f32.mrb[0].mxu0
      %v1760 = vadd.f32 0.0, %v1759
      %v1761 = vpop.f32.mrb[0].mxu0
      %v1762 = vpop.f32.mrb[0].mxu0
      %v1763 = vadd.f32 0.0, %v1762
      %v1764 = vpop.f32.mrb[0].mxu0
      %1765 = vmatprep.mubr.bf16.mxu0 0
      %1766 = vmatmul.mubr.bf16.gmra.mrb[0].mxu0 %v1063
      %v1767 = vpop.f32.mrb[0].mxu0
      %v1768 = vadd.f32 0.0, %v1767
      %v1769 = vpop.f32.mrb[0].mxu0
      %v1770 = vpop.f32.mrb[0].mxu0
      %v1771 = vadd.f32 0.0, %v1770
      %v1772 = vpop.f32.mrb[0].mxu0
      %1773 = vmatprep.mubr.bf16.mxu0 0
      %1774 = vmatmul.mubr.bf16.gmra.mrb[0].mxu0 %v1066
      %v1775 = vpop.f32.mrb[0].mxu0
      %v1776 = vadd.f32 0.0, %v1775
      %v1777 = vpop.f32.mrb[0].mxu0
      %v1778 = vpop.f32.mrb[0].mxu0
      %v1779 = vadd.f32 0.0, %v1778
      %v1780 = vpop.f32.mrb[0].mxu0
      %1781 = vmatprep.mubr.bf16.mxu0 0
      %1782 = vmatmul.mubr.bf16.gmra.mrb[0].mxu0 %v1069
      %v1783 = vpop.f32.mrb[0].mxu0
      %v1784 = vadd.f32 0.0, %v1783
      %v1785 = vpop.f32.mrb[0].mxu0
      %v1786 = vpop.f32.mrb[0].mxu0
      %v1787 = vadd.f32 0.0, %v1786
      %v1788 = vpop.f32.mrb[0].mxu0
      %1789 = vmatprep.mubr.bf16.mxu0 0
      %1790 = vmatmul.mubr.bf16.gmra.mrb[0].mxu0 %v1072
      %v1791 = vpop.f32.mrb[0].mxu0
      %v1792 = vadd.f32 0.0, %v1791
      %v1793 = vpop.f32.mrb[0].mxu0
      %v1794 = vpop.f32.mrb[0].mxu0
      %v1795 = vadd.f32 0.0, %v1794
      %v1796 = vpop.f32.mrb[0].mxu0
      %1797 = vmatprep.mubr.bf16.mxu0 0
      %1798 = vmatmul.mubr.bf16.gmra.mrb[0].mxu0 %v1075
      %v1799 = vpop.f32.mrb[0].mxu0
      %v1800 = vadd.f32 0.0, %v1799
      %v1801 = vpop.f32.mrb[0].mxu0
      %v1802 = vpop.f32.mrb[0].mxu0
      %v1803 = vadd.f32 0.0, %v1802
      %v1804 = vpop.f32.mrb[0].mxu0
      %1805 = vmatprep.mubr.bf16.mxu0 0
      %1806 = vmatmul.mubr.bf16.gmra.mrb[0].mxu0 %v1078
      %v1807 = vpop.f32.mrb[0].mxu0
      %v1808 = vadd.f32 0.0, %v1807
      %v1809 = vpop.f32.mrb[0].mxu0
      %v1810 = vpop.f32.mrb[0].mxu0
      %v1811 = vadd.f32 0.0, %v1810
      %v1812 = vpop.f32.mrb[0].mxu0
      %1813 = vmatprep.mubr.bf16.mxu0 0
      %1814 = vmatmul.mubr.bf16.gmra.mrb[0].mxu0 %v1081
      %v1815 = vpop.f32.mrb[0].mxu0
      %v1816 = vadd.f32 0.0, %v1815
      %v1817 = vpop.f32.mrb[0].mxu0
      %v1818 = vpop.f32.mrb[0].mxu0
      %v1819 = vadd.f32 0.0, %v1818
      %v1820 = vpop.f32.mrb[0].mxu0
      %1821 = vmatprep.mubr.bf16.mxu0 0
      %1822 = vmatmul.mubr.bf16.gmra.mrb[0].mxu0 %v1084
      %v1823 = vpop.f32.mrb[0].mxu0
      %v1824 = vadd.f32 0.0, %v1823
      %v1825 = vpop.f32.mrb[0].mxu0
      %v1826 = vpop.f32.mrb[0].mxu0
      %v1827 = vadd.f32 0.0, %v1826
      %v1828 = vpop.f32.mrb[0].mxu0
      %1829 = vmatprep.mubr.bf16.mxu0 0
      %1830 = vmatmul.mubr.bf16.gmra.mrb[0].mxu0 %v1087
      %v1831 = vpop.f32.mrb[0].mxu0
      %v1832 = vadd.f32 0.0, %v1831
      %v1833 = vpop.f32.mrb[0].mxu0
      %v1834 = vpop.f32.mrb[0].mxu0
      %v1835 = vadd.f32 0.0, %v1834
      %v1836 = vpop.f32.mrb[0].mxu0
      %1837 = vmatprep.mubr.bf16.mxu0 0
      %1838 = vmatmul.mubr.bf16.gmra.mrb[0].mxu0 %v1090
      %v1839 = vpop.f32.mrb[0].mxu0
      %v1840 = vadd.f32 0.0, %v1839
      %v1841 = vpop.f32.mrb[0].mxu0
      %v1842 = vpop.f32.mrb[0].mxu0
      %v1843 = vadd.f32 0.0, %v1842
      %v1844 = vpop.f32.mrb[0].mxu0
      %1845 = vmatprep.mubr.bf16.mxu0 0
      %1846 = vmatmul.mubr.bf16.gmra.mrb[0].mxu0 %v1691
      %v1847 = vpop.f32.mrb[0].mxu0
      %v1848 = vadd.f32 0.0, %v1847
      %v1849 = vpop.f32.mrb[0].mxu0
      %v1850 = vpop.f32.mrb[0].mxu0
      %v1851 = vadd.f32 0.0, %v1850
      %v1852 = vpop.f32.mrb[0].mxu0
      %1853 = vdwg.mxu0
      %v1854 = vadd.f32 %v1647, %v1728
      %v1855 = vadd.f32 %v1648, %v1731
      %v1856 = vadd.f32 %v1649, %v1736
      %v1857 = vadd.f32 %v1650, %v1739
      %v1858 = vadd.f32 %v1651, %v1744
      %v1859 = vadd.f32 %v1652, %v1747
      %v1860 = vadd.f32 %v1653, %v1752
      %v1861 = vadd.f32 %v1654, %v1755
      %v1862 = vadd.f32 %v1655, %v1760
      %v1863 = vadd.f32 %v1656, %v1763
      %v1864 = vadd.f32 %v1657, %v1768
      %v1865 = vadd.f32 %v1658, %v1771
      %v1866 = vadd.f32 %v1659, %v1776
      %v1867 = vadd.f32 %v1660, %v1779
      %v1868 = vadd.f32 %v1661, %v1784
      %v1869 = vadd.f32 %v1662, %v1787
      %v1870 = vadd.f32 %v1663, %v1792
      %v1871 = vadd.f32 %v1664, %v1795
      %v1872 = vadd.f32 %v1665, %v1800
      %v1873 = vadd.f32 %v1666, %v1803
      %v1874 = vadd.f32 %v1667, %v1808
      %v1875 = vadd.f32 %v1668, %v1811
      %v1876 = vadd.f32 %v1669, %v1816
      %v1877 = vadd.f32 %v1670, %v1819
      %v1878 = vadd.f32 %v1671, %v1824
      %v1879 = vadd.f32 %v1672, %v1827
      %v1880 = vadd.f32 %v1673, %v1832
      %v1881 = vadd.f32 %v1674, %v1835
      %v1882 = vadd.f32 %v1675, %v1840
      %v1883 = vadd.f32 %v1676, %v1843
      %v1884 = vadd.f32 %v1677, %v1848
      %v1885 = vadd.f32 %v1678, %v1851
      %v1887 = vshrl.u32 %v283, 16
      %v1889 = vrot.slane %v1887, 4
      %v1890 = vshll.u32 %v283, 16
      %v1892 = vrot.slane %v1890, 5
      %v1893 = vor.u32 %v1889, %v1892
      %v1894 = vrot.slane %v1893, 4
      %v1896 = vshll.u32 %v284, 16
      %v1898 = vrot.slane %v1896, 5
      %v1899 = vsel %vm309, %v1894, %v1898
      %v1900 = vshrl.u32 %v284, 16
      %v1902 = vrot.slane %v1900, 4
      %v1903 = vor.u32 %v1902, %v1898
      %v1904 = vrot.slane %v1903, 4
      %v1906 = vshll.u32 %v285, 16
      %v1908 = vrot.slane %v1906, 5
      %v1909 = vsel %vm309, %v1904, %v1908
      %v1910 = vunpack.c.l.b16 %v1899
      %v1911 = vunpack.c.l.b16 %v1909
      %v1912 = vpack.c.b16 %v1911, %v1910
      %v1915 = vunpack.c.l.b16 %v297
      %v1916 = vunpack.c.l.b16 %v298
      %v1917 = vpack.c.b16 %v1916, %v1915
      %v1920 = vsel %vm748, %v1912, 0
      %1922 = vmatprep.subr.bf16.mxu0 0
      %1923 = vmatpush1.bf16.msra.mxu0 %v1917
      %1924 = vmatprep.subr.bf16.mxu0 0
      %1925 = vmatpush1.bf16.msra.mxu0 0
      %1926 = vmatprep.subr.bf16.mxu0 0
      %1927 = vmatpush1.bf16.msra.mxu0 0
      %1928 = vmatprep.subr.bf16.mxu0 0
      %1929 = vmatpush1.bf16.msra.mxu0 0
      %1930 = vmatprep.subr.bf16.mxu0 0
      %1931 = vmatpush1.bf16.msra.mxu0 0
      %1932 = vmatprep.subr.bf16.mxu0 0
      %1933 = vmatpush1.bf16.msra.mxu0 0
      %1934 = vmatprep.subr.bf16.mxu0 0
      %1935 = vmatpush1.bf16.msra.mxu0 0
      %1936 = vmatprep.subr.bf16.mxu0 0
      %1937 = vmatpush1.bf16.msra.mxu0 0
      %1938 = vmatprep.subr.bf16.mxu0 0
      %1939 = vmatpush1.bf16.msra.mxu0 0
      %1940 = vmatprep.subr.bf16.mxu0 0
      %1941 = vmatpush1.bf16.msra.mxu0 0
      %1942 = vmatprep.subr.bf16.mxu0 0
      %1943 = vmatpush1.bf16.msra.mxu0 0
      %1944 = vmatprep.subr.bf16.mxu0 0
      %1945 = vmatpush1.bf16.msra.mxu0 0
      %1946 = vmatprep.subr.bf16.mxu0 0
      %1947 = vmatpush1.bf16.msra.mxu0 0
      %1948 = vmatprep.subr.bf16.mxu0 0
      %1949 = vmatpush1.bf16.msra.mxu0 0
      %1950 = vmatprep.subr.bf16.mxu0 0
      %1951 = vmatpush1.bf16.msra.mxu0 0
      %1952 = vmatprep.subr.bf16.mxu0 0
      %1953 = vmatpush1.bf16.msra.mxu0 0
      %1954 = vmatprep.mubr.bf16.mxu0 0
      %1955 = vmatmul.mubr.bf16.gmra.mrb[0].mxu0 %v753
      %v1956 = vpop.f32.mrb[0].mxu0
      %v1957 = vadd.f32 0.0, %v1956
      %v1958 = vpop.f32.mrb[0].mxu0
      %v1959 = vpop.f32.mrb[0].mxu0
      %v1960 = vadd.f32 0.0, %v1959
      %v1961 = vpop.f32.mrb[0].mxu0
      %1962 = vmatprep.mubr.bf16.mxu0 0
      %1963 = vmatmul.mubr.bf16.gmra.mrb[0].mxu0 %v756
      %v1964 = vpop.f32.mrb[0].mxu0
      %v1965 = vadd.f32 0.0, %v1964
      %v1966 = vpop.f32.mrb[0].mxu0
      %v1967 = vpop.f32.mrb[0].mxu0
      %v1968 = vadd.f32 0.0, %v1967
      %v1969 = vpop.f32.mrb[0].mxu0
      %1970 = vmatprep.mubr.bf16.mxu0 0
      %1971 = vmatmul.mubr.bf16.gmra.mrb[0].mxu0 %v759
      %v1972 = vpop.f32.mrb[0].mxu0
      %v1973 = vadd.f32 0.0, %v1972
      %v1974 = vpop.f32.mrb[0].mxu0
      %v1975 = vpop.f32.mrb[0].mxu0
      %v1976 = vadd.f32 0.0, %v1975
      %v1977 = vpop.f32.mrb[0].mxu0
      %1978 = vmatprep.mubr.bf16.mxu0 0
      %1979 = vmatmul.mubr.bf16.gmra.mrb[0].mxu0 %v762
      %v1980 = vpop.f32.mrb[0].mxu0
      %v1981 = vadd.f32 0.0, %v1980
      %v1982 = vpop.f32.mrb[0].mxu0
      %v1983 = vpop.f32.mrb[0].mxu0
      %v1984 = vadd.f32 0.0, %v1983
      %v1985 = vpop.f32.mrb[0].mxu0
      %1986 = vmatprep.mubr.bf16.mxu0 0
      %1987 = vmatmul.mubr.bf16.gmra.mrb[0].mxu0 %v765
      %v1988 = vpop.f32.mrb[0].mxu0
      %v1989 = vadd.f32 0.0, %v1988
      %v1990 = vpop.f32.mrb[0].mxu0
      %v1991 = vpop.f32.mrb[0].mxu0
      %v1992 = vadd.f32 0.0, %v1991
      %v1993 = vpop.f32.mrb[0].mxu0
      %1994 = vmatprep.mubr.bf16.mxu0 0
      %1995 = vmatmul.mubr.bf16.gmra.mrb[0].mxu0 %v768
      %v1996 = vpop.f32.mrb[0].mxu0
      %v1997 = vadd.f32 0.0, %v1996
      %v1998 = vpop.f32.mrb[0].mxu0
      %v1999 = vpop.f32.mrb[0].mxu0
      %v2000 = vadd.f32 0.0, %v1999
      %v2001 = vpop.f32.mrb[0].mxu0
      %2002 = vmatprep.mubr.bf16.mxu0 0
      %2003 = vmatmul.mubr.bf16.gmra.mrb[0].mxu0 %v771
      %v2004 = vpop.f32.mrb[0].mxu0
      %v2005 = vadd.f32 0.0, %v2004
      %v2006 = vpop.f32.mrb[0].mxu0
      %v2007 = vpop.f32.mrb[0].mxu0
      %v2008 = vadd.f32 0.0, %v2007
      %v2009 = vpop.f32.mrb[0].mxu0
      %2010 = vmatprep.mubr.bf16.mxu0 0
      %2011 = vmatmul.mubr.bf16.gmra.mrb[0].mxu0 %v774
      %v2012 = vpop.f32.mrb[0].mxu0
      %v2013 = vadd.f32 0.0, %v2012
      %v2014 = vpop.f32.mrb[0].mxu0
      %v2015 = vpop.f32.mrb[0].mxu0
      %v2016 = vadd.f32 0.0, %v2015
      %v2017 = vpop.f32.mrb[0].mxu0
      %2018 = vmatprep.mubr.bf16.mxu0 0
      %2019 = vmatmul.mubr.bf16.gmra.mrb[0].mxu0 %v777
      %v2020 = vpop.f32.mrb[0].mxu0
      %v2021 = vadd.f32 0.0, %v2020
      %v2022 = vpop.f32.mrb[0].mxu0
      %v2023 = vpop.f32.mrb[0].mxu0
      %v2024 = vadd.f32 0.0, %v2023
      %v2025 = vpop.f32.mrb[0].mxu0
      %2026 = vmatprep.mubr.bf16.mxu0 0
      %2027 = vmatmul.mubr.bf16.gmra.mrb[0].mxu0 %v780
      %v2028 = vpop.f32.mrb[0].mxu0
      %v2029 = vadd.f32 0.0, %v2028
      %v2030 = vpop.f32.mrb[0].mxu0
      %v2031 = vpop.f32.mrb[0].mxu0
      %v2032 = vadd.f32 0.0, %v2031
      %v2033 = vpop.f32.mrb[0].mxu0
      %2034 = vmatprep.mubr.bf16.mxu0 0
      %2035 = vmatmul.mubr.bf16.gmra.mrb[0].mxu0 %v783
      %v2036 = vpop.f32.mrb[0].mxu0
      %v2037 = vadd.f32 0.0, %v2036
      %v2038 = vpop.f32.mrb[0].mxu0
      %v2039 = vpop.f32.mrb[0].mxu0
      %v2040 = vadd.f32 0.0, %v2039
      %v2041 = vpop.f32.mrb[0].mxu0
      %2042 = vmatprep.mubr.bf16.mxu0 0
      %2043 = vmatmul.mubr.bf16.gmra.mrb[0].mxu0 %v786
      %v2044 = vpop.f32.mrb[0].mxu0
      %v2045 = vadd.f32 0.0, %v2044
      %v2046 = vpop.f32.mrb[0].mxu0
      %v2047 = vpop.f32.mrb[0].mxu0
      %v2048 = vadd.f32 0.0, %v2047
      %v2049 = vpop.f32.mrb[0].mxu0
      %2050 = vmatprep.mubr.bf16.mxu0 0
      %2051 = vmatmul.mubr.bf16.gmra.mrb[0].mxu0 %v789
      %v2052 = vpop.f32.mrb[0].mxu0
      %v2053 = vadd.f32 0.0, %v2052
      %v2054 = vpop.f32.mrb[0].mxu0
      %v2055 = vpop.f32.mrb[0].mxu0
      %v2056 = vadd.f32 0.0, %v2055
      %v2057 = vpop.f32.mrb[0].mxu0
      %2058 = vmatprep.mubr.bf16.mxu0 0
      %2059 = vmatmul.mubr.bf16.gmra.mrb[0].mxu0 %v792
      %v2060 = vpop.f32.mrb[0].mxu0
      %v2061 = vadd.f32 0.0, %v2060
      %v2062 = vpop.f32.mrb[0].mxu0
      %v2063 = vpop.f32.mrb[0].mxu0
      %v2064 = vadd.f32 0.0, %v2063
      %v2065 = vpop.f32.mrb[0].mxu0
      %2066 = vmatprep.mubr.bf16.mxu0 0
      %2067 = vmatmul.mubr.bf16.gmra.mrb[0].mxu0 %v795
      %v2068 = vpop.f32.mrb[0].mxu0
      %v2069 = vadd.f32 0.0, %v2068
      %v2070 = vpop.f32.mrb[0].mxu0
      %v2071 = vpop.f32.mrb[0].mxu0
      %v2072 = vadd.f32 0.0, %v2071
      %v2073 = vpop.f32.mrb[0].mxu0
      %2074 = vmatprep.mubr.bf16.mxu0 0
      %2075 = vmatmul.mubr.bf16.gmra.mrb[0].mxu0 %v1920
      %v2076 = vpop.f32.mrb[0].mxu0
      %v2077 = vadd.f32 0.0, %v2076
      %v2078 = vpop.f32.mrb[0].mxu0
      %v2079 = vpop.f32.mrb[0].mxu0
      %v2080 = vadd.f32 0.0, %v2079
      %v2081 = vpop.f32.mrb[0].mxu0
      %2082 = vdwg.mxu0
      %v2083 = vadd.f32 %v1854, %v1957
      %v2084 = vadd.f32 %v1855, %v1960
      %v2085 = vadd.f32 %v1856, %v1965
      %v2086 = vadd.f32 %v1857, %v1968
      %v2087 = vadd.f32 %v1858, %v1973
      %v2088 = vadd.f32 %v1859, %v1976
      %v2089 = vadd.f32 %v1860, %v1981
      %v2090 = vadd.f32 %v1861, %v1984
      %v2091 = vadd.f32 %v1862, %v1989
      %v2092 = vadd.f32 %v1863, %v1992
      %v2093 = vadd.f32 %v1864, %v1997
      %v2094 = vadd.f32 %v1865, %v2000
      %v2095 = vadd.f32 %v1866, %v2005
      %v2096 = vadd.f32 %v1867, %v2008
      %v2097 = vadd.f32 %v1868, %v2013
      %v2098 = vadd.f32 %v1869, %v2016
      %v2099 = vadd.f32 %v1870, %v2021
      %v2100 = vadd.f32 %v1871, %v2024
      %v2101 = vadd.f32 %v1872, %v2029
      %v2102 = vadd.f32 %v1873, %v2032
      %v2103 = vadd.f32 %v1874, %v2037
      %v2104 = vadd.f32 %v1875, %v2040
      %v2105 = vadd.f32 %v1876, %v2045
      %v2106 = vadd.f32 %v1877, %v2048
      %v2107 = vadd.f32 %v1878, %v2053
      %v2108 = vadd.f32 %v1879, %v2056
      %v2109 = vadd.f32 %v1880, %v2061
      %v2110 = vadd.f32 %v1881, %v2064
      %v2111 = vadd.f32 %v1882, %v2069
      %v2112 = vadd.f32 %v1883, %v2072
      %v2113 = vadd.f32 %v1884, %v2077
      %v2114 = vadd.f32 %v1885, %v2080
      %v2116 = vrot.slane %v283, 5
      %v2117 = vrot.slane %v2116, 4
      %v2118 = vrot.slane %v284, 5
      %v2119 = vsel %vm1271, %v2117, %v2118
      %v2120 = vrot.slane %v2118, 4
      %v2121 = vrot.slane %v285, 5
      %v2122 = vsel %vm1271, %v2120, %v2121
      %v2123 = vunpack.c.l.b16 %v2119
      %v2124 = vunpack.c.l.b16 %v2122
      %v2125 = vpack.c.b16 %v2124, %v2123
      %v2128 = vunpack.c.l.b16 %v299
      %v2129 = vunpack.c.l.b16 %v300
      %v2130 = vpack.c.b16 %v2129, %v2128
      %v2133 = vsel %vm748, %v2125, 0
      %2135 = vmatprep.subr.bf16.mxu0 0
      %2136 = vmatpush1.bf16.msra.mxu0 %v2130
      %2137 = vmatprep.subr.bf16.mxu0 0
      %2138 = vmatpush1.bf16.msra.mxu0 0
      %2139 = vmatprep.subr.bf16.mxu0 0
      %2140 = vmatpush1.bf16.msra.mxu0 0
      %2141 = vmatprep.subr.bf16.mxu0 0
      %2142 = vmatpush1.bf16.msra.mxu0 0
      %2143 = vmatprep.subr.bf16.mxu0 0
      %2144 = vmatpush1.bf16.msra.mxu0 0
      %2145 = vmatprep.subr.bf16.mxu0 0
      %2146 = vmatpush1.bf16.msra.mxu0 0
      %2147 = vmatprep.subr.bf16.mxu0 0
      %2148 = vmatpush1.bf16.msra.mxu0 0
      %2149 = vmatprep.subr.bf16.mxu0 0
      %2150 = vmatpush1.bf16.msra.mxu0 0
      %2151 = vmatprep.subr.bf16.mxu0 0
      %2152 = vmatpush1.bf16.msra.mxu0 0
      %2153 = vmatprep.subr.bf16.mxu0 0
      %2154 = vmatpush1.bf16.msra.mxu0 0
      %2155 = vmatprep.subr.bf16.mxu0 0
      %2156 = vmatpush1.bf16.msra.mxu0 0
      %2157 = vmatprep.subr.bf16.mxu0 0
      %2158 = vmatpush1.bf16.msra.mxu0 0
      %2159 = vmatprep.subr.bf16.mxu0 0
      %2160 = vmatpush1.bf16.msra.mxu0 0
      %2161 = vmatprep.subr.bf16.mxu0 0
      %2162 = vmatpush1.bf16.msra.mxu0 0
      %2163 = vmatprep.subr.bf16.mxu0 0
      %2164 = vmatpush1.bf16.msra.mxu0 0
      %2165 = vmatprep.subr.bf16.mxu0 0
      %2166 = vmatpush1.bf16.msra.mxu0 0
      %2167 = vmatprep.mubr.bf16.mxu0 0
      %2168 = vmatmul.mubr.bf16.gmra.mrb[0].mxu0 %v1442
      %v2169 = vpop.f32.mrb[0].mxu0
      %v2170 = vadd.f32 0.0, %v2169
      %v2171 = vpop.f32.mrb[0].mxu0
      %v2172 = vpop.f32.mrb[0].mxu0
      %v2173 = vadd.f32 0.0, %v2172
      %v2174 = vpop.f32.mrb[0].mxu0
      %2175 = vmatprep.mubr.bf16.mxu0 0
      %2176 = vmatmul.mubr.bf16.gmra.mrb[0].mxu0 %v1445
      %v2177 = vpop.f32.mrb[0].mxu0
      %v2178 = vadd.f32 0.0, %v2177
      %v2179 = vpop.f32.mrb[0].mxu0
      %v2180 = vpop.f32.mrb[0].mxu0
      %v2181 = vadd.f32 0.0, %v2180
      %v2182 = vpop.f32.mrb[0].mxu0
      %2183 = vmatprep.mubr.bf16.mxu0 0
      %2184 = vmatmul.mubr.bf16.gmra.mrb[0].mxu0 %v1448
      %v2185 = vpop.f32.mrb[0].mxu0
      %v2186 = vadd.f32 0.0, %v2185
      %v2187 = vpop.f32.mrb[0].mxu0
      %v2188 = vpop.f32.mrb[0].mxu0
      %v2189 = vadd.f32 0.0, %v2188
      %v2190 = vpop.f32.mrb[0].mxu0
      %2191 = vmatprep.mubr.bf16.mxu0 0
      %2192 = vmatmul.mubr.bf16.gmra.mrb[0].mxu0 %v1451
      %v2193 = vpop.f32.mrb[0].mxu0
      %v2194 = vadd.f32 0.0, %v2193
      %v2195 = vpop.f32.mrb[0].mxu0
      %v2196 = vpop.f32.mrb[0].mxu0
      %v2197 = vadd.f32 0.0, %v2196
      %v2198 = vpop.f32.mrb[0].mxu0
      %2199 = vmatprep.mubr.bf16.mxu0 0
      %2200 = vmatmul.mubr.bf16.gmra.mrb[0].mxu0 %v1454
      %v2201 = vpop.f32.mrb[0].mxu0
      %v2202 = vadd.f32 0.0, %v2201
      %v2203 = vpop.f32.mrb[0].mxu0
      %v2204 = vpop.f32.mrb[0].mxu0
      %v2205 = vadd.f32 0.0, %v2204
      %v2206 = vpop.f32.mrb[0].mxu0
      %2207 = vmatprep.mubr.bf16.mxu0 0
      %2208 = vmatmul.mubr.bf16.gmra.mrb[0].mxu0 %v1457
      %v2209 = vpop.f32.mrb[0].mxu0
      %v2210 = vadd.f32 0.0, %v2209
      %v2211 = vpop.f32.mrb[0].mxu0
      %v2212 = vpop.f32.mrb[0].mxu0
      %v2213 = vadd.f32 0.0, %v2212
      %v2214 = vpop.f32.mrb[0].mxu0
      %2215 = vmatprep.mubr.bf16.mxu0 0
      %2216 = vmatmul.mubr.bf16.gmra.mrb[0].mxu0 %v1460
      %v2217 = vpop.f32.mrb[0].mxu0
      %v2218 = vadd.f32 0.0, %v2217
      %v2219 = vpop.f32.mrb[0].mxu0
      %v2220 = vpop.f32.mrb[0].mxu0
      %v2221 = vadd.f32 0.0, %v2220
      %v2222 = vpop.f32.mrb[0].mxu0
      %2223 = vmatprep.mubr.bf16.mxu0 0
      %2224 = vmatmul.mubr.bf16.gmra.mrb[0].mxu0 %v1463
      %v2225 = vpop.f32.mrb[0].mxu0
      %v2226 = vadd.f32 0.0, %v2225
      %v2227 = vpop.f32.mrb[0].mxu0
      %v2228 = vpop.f32.mrb[0].mxu0
      %v2229 = vadd.f32 0.0, %v2228
      %v2230 = vpop.f32.mrb[0].mxu0
      %2231 = vmatprep.mubr.bf16.mxu0 0
      %2232 = vmatmul.mubr.bf16.gmra.mrb[0].mxu0 %v1466
      %v2233 = vpop.f32.mrb[0].mxu0
      %v2234 = vadd.f32 0.0, %v2233
      %v2235 = vpop.f32.mrb[0].mxu0
      %v2236 = vpop.f32.mrb[0].mxu0
      %v2237 = vadd.f32 0.0, %v2236
      %v2238 = vpop.f32.mrb[0].mxu0
      %2239 = vmatprep.mubr.bf16.mxu0 0
      %2240 = vmatmul.mubr.bf16.gmra.mrb[0].mxu0 %v1469
      %v2241 = vpop.f32.mrb[0].mxu0
      %v2242 = vadd.f32 0.0, %v2241
      %v2243 = vpop.f32.mrb[0].mxu0
      %v2244 = vpop.f32.mrb[0].mxu0
      %v2245 = vadd.f32 0.0, %v2244
      %v2246 = vpop.f32.mrb[0].mxu0
      %2247 = vmatprep.mubr.bf16.mxu0 0
      %2248 = vmatmul.mubr.bf16.gmra.mrb[0].mxu0 %v1472
      %v2249 = vpop.f32.mrb[0].mxu0
      %v2250 = vadd.f32 0.0, %v2249
      %v2251 = vpop.f32.mrb[0].mxu0
      %v2252 = vpop.f32.mrb[0].mxu0
      %v2253 = vadd.f32 0.0, %v2252
      %v2254 = vpop.f32.mrb[0].mxu0
      %2255 = vmatprep.mubr.bf16.mxu0 0
      %2256 = vmatmul.mubr.bf16.gmra.mrb[0].mxu0 %v1475
      %v2257 = vpop.f32.mrb[0].mxu0
      %v2258 = vadd.f32 0.0, %v2257
      %v2259 = vpop.f32.mrb[0].mxu0
      %v2260 = vpop.f32.mrb[0].mxu0
      %v2261 = vadd.f32 0.0, %v2260
      %v2262 = vpop.f32.mrb[0].mxu0
      %2263 = vmatprep.mubr.bf16.mxu0 0
      %2264 = vmatmul.mubr.bf16.gmra.mrb[0].mxu0 %v1478
      %v2265 = vpop.f32.mrb[0].mxu0
      %v2266 = vadd.f32 0.0, %v2265
      %v2267 = vpop.f32.mrb[0].mxu0
      %v2268 = vpop.f32.mrb[0].mxu0
      %v2269 = vadd.f32 0.0, %v2268
      %v2270 = vpop.f32.mrb[0].mxu0
      %2271 = vmatprep.mubr.bf16.mxu0 0
      %2272 = vmatmul.mubr.bf16.gmra.mrb[0].mxu0 %v1481
      %v2273 = vpop.f32.mrb[0].mxu0
      %v2274 = vadd.f32 0.0, %v2273
      %v2275 = vpop.f32.mrb[0].mxu0
      %v2276 = vpop.f32.mrb[0].mxu0
      %v2277 = vadd.f32 0.0, %v2276
      %v2278 = vpop.f32.mrb[0].mxu0
      %2279 = vmatprep.mubr.bf16.mxu0 0
      %2280 = vmatmul.mubr.bf16.gmra.mrb[0].mxu0 %v1484
      %v2281 = vpop.f32.mrb[0].mxu0
      %v2282 = vadd.f32 0.0, %v2281
      %v2283 = vpop.f32.mrb[0].mxu0
      %v2284 = vpop.f32.mrb[0].mxu0
      %v2285 = vadd.f32 0.0, %v2284
      %v2286 = vpop.f32.mrb[0].mxu0
      %2287 = vmatprep.mubr.bf16.mxu0 0
      %2288 = vmatmul.mubr.bf16.gmra.mrb[0].mxu0 %v2133
      %v2289 = vpop.f32.mrb[0].mxu0
      %v2290 = vadd.f32 0.0, %v2289
      %v2291 = vpop.f32.mrb[0].mxu0
      %v2292 = vpop.f32.mrb[0].mxu0
      %v2293 = vadd.f32 0.0, %v2292
      %v2294 = vpop.f32.mrb[0].mxu0
      %2295 = vdwg.mxu0
      %v2296 = vadd.f32 %v2083, %v2170
      %v2297 = vadd.f32 %v2084, %v2173
      %v2298 = vadd.f32 %v2085, %v2178
      %v2299 = vadd.f32 %v2086, %v2181
      %v2300 = vadd.f32 %v2087, %v2186
      %v2301 = vadd.f32 %v2088, %v2189
      %v2302 = vadd.f32 %v2089, %v2194
      %v2303 = vadd.f32 %v2090, %v2197
      %v2304 = vadd.f32 %v2091, %v2202
      %v2305 = vadd.f32 %v2092, %v2205
      %v2306 = vadd.f32 %v2093, %v2210
      %v2307 = vadd.f32 %v2094, %v2213
      %v2308 = vadd.f32 %v2095, %v2218
      %v2309 = vadd.f32 %v2096, %v2221
      %v2310 = vadd.f32 %v2097, %v2226
      %v2311 = vadd.f32 %v2098, %v2229
      %v2312 = vadd.f32 %v2099, %v2234
      %v2313 = vadd.f32 %v2100, %v2237
      %v2314 = vadd.f32 %v2101, %v2242
      %v2315 = vadd.f32 %v2102, %v2245
      %v2316 = vadd.f32 %v2103, %v2250
      %v2317 = vadd.f32 %v2104, %v2253
      %v2318 = vadd.f32 %v2105, %v2258
      %v2319 = vadd.f32 %v2106, %v2261
      %v2320 = vadd.f32 %v2107, %v2266
      %v2321 = vadd.f32 %v2108, %v2269
      %v2322 = vadd.f32 %v2109, %v2274
      %v2323 = vadd.f32 %v2110, %v2277
      %v2324 = vadd.f32 %v2111, %v2282
      %v2325 = vadd.f32 %v2112, %v2285
      %v2326 = vadd.f32 %v2113, %v2290
      %v2327 = vadd.f32 %v2114, %v2293
      %v2330 = vunpack.c.l.b16 %v286
      %v2331 = vunpack.c.l.b16 %v287
      %v2332 = vpack.c.b16 %v2331, %v2330
      %v2335 = vunpack.c.l.b16 %v301
      %v2336 = vunpack.c.l.b16 %v302
      %v2337 = vpack.c.b16 %v2336, %v2335
      %v2340 = vsel %vm748, %v2332, 0
      %2342 = vmatprep.subr.bf16.mxu0 0
      %2343 = vmatpush1.bf16.msra.mxu0 %v2337
      %2344 = vmatprep.subr.bf16.mxu0 0
      %2345 = vmatpush1.bf16.msra.mxu0 0
      %2346 = vmatprep.subr.bf16.mxu0 0
      %2347 = vmatpush1.bf16.msra.mxu0 0
      %2348 = vmatprep.subr.bf16.mxu0 0
      %2349 = vmatpush1.bf16.msra.mxu0 0
      %2350 = vmatprep.subr.bf16.mxu0 0
      %2351 = vmatpush1.bf16.msra.mxu0 0
      %2352 = vmatprep.subr.bf16.mxu0 0
      %2353 = vmatpush1.bf16.msra.mxu0 0
      %2354 = vmatprep.subr.bf16.mxu0 0
      %2355 = vmatpush1.bf16.msra.mxu0 0
      %2356 = vmatprep.subr.bf16.mxu0 0
      %2357 = vmatpush1.bf16.msra.mxu0 0
      %2358 = vmatprep.subr.bf16.mxu0 0
      %2359 = vmatpush1.bf16.msra.mxu0 0
      %2360 = vmatprep.subr.bf16.mxu0 0
      %2361 = vmatpush1.bf16.msra.mxu0 0
      %2362 = vmatprep.subr.bf16.mxu0 0
      %2363 = vmatpush1.bf16.msra.mxu0 0
      %2364 = vmatprep.subr.bf16.mxu0 0
      %2365 = vmatpush1.bf16.msra.mxu0 0
      %2366 = vmatprep.subr.bf16.mxu0 0
      %2367 = vmatpush1.bf16.msra.mxu0 0
      %2368 = vmatprep.subr.bf16.mxu0 0
      %2369 = vmatpush1.bf16.msra.mxu0 0
      %2370 = vmatprep.subr.bf16.mxu0 0
      %2371 = vmatpush1.bf16.msra.mxu0 0
      %2372 = vmatprep.subr.bf16.mxu0 0
      %2373 = vmatpush1.bf16.msra.mxu0 0
      %2374 = vmatprep.mubr.bf16.mxu0 0
      %2375 = vmatmul.mubr.bf16.gmra.mrb[0].mxu0 %v1051
      %v2376 = vpop.f32.mrb[0].mxu0
      %v2377 = vadd.f32 0.0, %v2376
      %v2378 = vpop.f32.mrb[0].mxu0
      %v2379 = vpop.f32.mrb[0].mxu0
      %v2380 = vadd.f32 0.0, %v2379
      %v2381 = vpop.f32.mrb[0].mxu0
      %2382 = vmatprep.mubr.bf16.mxu0 0
      %2383 = vmatmul.mubr.bf16.gmra.mrb[0].mxu0 %v1054
      %v2384 = vpop.f32.mrb[0].mxu0
      %v2385 = vadd.f32 0.0, %v2384
      %v2386 = vpop.f32.mrb[0].mxu0
      %v2387 = vpop.f32.mrb[0].mxu0
      %v2388 = vadd.f32 0.0, %v2387
      %v2389 = vpop.f32.mrb[0].mxu0
      %2390 = vmatprep.mubr.bf16.mxu0 0
      %2391 = vmatmul.mubr.bf16.gmra.mrb[0].mxu0 %v1057
      %v2392 = vpop.f32.mrb[0].mxu0
      %v2393 = vadd.f32 0.0, %v2392
      %v2394 = vpop.f32.mrb[0].mxu0
      %v2395 = vpop.f32.mrb[0].mxu0
      %v2396 = vadd.f32 0.0, %v2395
      %v2397 = vpop.f32.mrb[0].mxu0
      %2398 = vmatprep.mubr.bf16.mxu0 0
      %2399 = vmatmul.mubr.bf16.gmra.mrb[0].mxu0 %v1060
      %v2400 = vpop.f32.mrb[0].mxu0
      %v2401 = vadd.f32 0.0, %v2400
      %v2402 = vpop.f32.mrb[0].mxu0
      %v2403 = vpop.f32.mrb[0].mxu0
      %v2404 = vadd.f32 0.0, %v2403
      %v2405 = vpop.f32.mrb[0].mxu0
      %2406 = vmatprep.mubr.bf16.mxu0 0
      %2407 = vmatmul.mubr.bf16.gmra.mrb[0].mxu0 %v1063
      %v2408 = vpop.f32.mrb[0].mxu0
      %v2409 = vadd.f32 0.0, %v2408
      %v2410 = vpop.f32.mrb[0].mxu0
      %v2411 = vpop.f32.mrb[0].mxu0
      %v2412 = vadd.f32 0.0, %v2411
      %v2413 = vpop.f32.mrb[0].mxu0
      %2414 = vmatprep.mubr.bf16.mxu0 0
      %2415 = vmatmul.mubr.bf16.gmra.mrb[0].mxu0 %v1066
      %v2416 = vpop.f32.mrb[0].mxu0
      %v2417 = vadd.f32 0.0, %v2416
      %v2418 = vpop.f32.mrb[0].mxu0
      %v2419 = vpop.f32.mrb[0].mxu0
      %v2420 = vadd.f32 0.0, %v2419
      %v2421 = vpop.f32.mrb[0].mxu0
      %2422 = vmatprep.mubr.bf16.mxu0 0
      %2423 = vmatmul.mubr.bf16.gmra.mrb[0].mxu0 %v1069
      %v2424 = vpop.f32.mrb[0].mxu0
      %v2425 = vadd.f32 0.0, %v2424
      %v2426 = vpop.f32.mrb[0].mxu0
      %v2427 = vpop.f32.mrb[0].mxu0
      %v2428 = vadd.f32 0.0, %v2427
      %v2429 = vpop.f32.mrb[0].mxu0
      %2430 = vmatprep.mubr.bf16.mxu0 0
      %2431 = vmatmul.mubr.bf16.gmra.mrb[0].mxu0 %v1072
      %v2432 = vpop.f32.mrb[0].mxu0
      %v2433 = vadd.f32 0.0, %v2432
      %v2434 = vpop.f32.mrb[0].mxu0
      %v2435 = vpop.f32.mrb[0].mxu0
      %v2436 = vadd.f32 0.0, %v2435
      %v2437 = vpop.f32.mrb[0].mxu0
      %2438 = vmatprep.mubr.bf16.mxu0 0
      %2439 = vmatmul.mubr.bf16.gmra.mrb[0].mxu0 %v1075
      %v2440 = vpop.f32.mrb[0].mxu0
      %v2441 = vadd.f32 0.0, %v2440
      %v2442 = vpop.f32.mrb[0].mxu0
      %v2443 = vpop.f32.mrb[0].mxu0
      %v2444 = vadd.f32 0.0, %v2443
      %v2445 = vpop.f32.mrb[0].mxu0
      %2446 = vmatprep.mubr.bf16.mxu0 0
      %2447 = vmatmul.mubr.bf16.gmra.mrb[0].mxu0 %v1078
      %v2448 = vpop.f32.mrb[0].mxu0
      %v2449 = vadd.f32 0.0, %v2448
      %v2450 = vpop.f32.mrb[0].mxu0
      %v2451 = vpop.f32.mrb[0].mxu0
      %v2452 = vadd.f32 0.0, %v2451
      %v2453 = vpop.f32.mrb[0].mxu0
      %2454 = vmatprep.mubr.bf16.mxu0 0
      %2455 = vmatmul.mubr.bf16.gmra.mrb[0].mxu0 %v1081
      %v2456 = vpop.f32.mrb[0].mxu0
      %v2457 = vadd.f32 0.0, %v2456
      %v2458 = vpop.f32.mrb[0].mxu0
      %v2459 = vpop.f32.mrb[0].mxu0
      %v2460 = vadd.f32 0.0, %v2459
      %v2461 = vpop.f32.mrb[0].mxu0
      %2462 = vmatprep.mubr.bf16.mxu0 0
      %2463 = vmatmul.mubr.bf16.gmra.mrb[0].mxu0 %v1084
      %v2464 = vpop.f32.mrb[0].mxu0
      %v2465 = vadd.f32 0.0, %v2464
      %v2466 = vpop.f32.mrb[0].mxu0
      %v2467 = vpop.f32.mrb[0].mxu0
      %v2468 = vadd.f32 0.0, %v2467
      %v2469 = vpop.f32.mrb[0].mxu0
      %2470 = vmatprep.mubr.bf16.mxu0 0
      %2471 = vmatmul.mubr.bf16.gmra.mrb[0].mxu0 %v1087
      %v2472 = vpop.f32.mrb[0].mxu0
      %v2473 = vadd.f32 0.0, %v2472
      %v2474 = vpop.f32.mrb[0].mxu0
      %v2475 = vpop.f32.mrb[0].mxu0
      %v2476 = vadd.f32 0.0, %v2475
      %v2477 = vpop.f32.mrb[0].mxu0
      %2478 = vmatprep.mubr.bf16.mxu0 0
      %2479 = vmatmul.mubr.bf16.gmra.mrb[0].mxu0 %v1090
      %v2480 = vpop.f32.mrb[0].mxu0
      %v2481 = vadd.f32 0.0, %v2480
      %v2482 = vpop.f32.mrb[0].mxu0
      %v2483 = vpop.f32.mrb[0].mxu0
      %v2484 = vadd.f32 0.0, %v2483
      %v2485 = vpop.f32.mrb[0].mxu0
      %2486 = vmatprep.mubr.bf16.mxu0 0
      %2487 = vmatmul.mubr.bf16.gmra.mrb[0].mxu0 %v1691
      %v2488 = vpop.f32.mrb[0].mxu0
      %v2489 = vadd.f32 0.0, %v2488
      %v2490 = vpop.f32.mrb[0].mxu0
      %v2491 = vpop.f32.mrb[0].mxu0
      %v2492 = vadd.f32 0.0, %v2491
      %v2493 = vpop.f32.mrb[0].mxu0
      %2494 = vmatprep.mubr.bf16.mxu0 0
      %2495 = vmatmul.mubr.bf16.gmra.mrb[0].mxu0 %v2340
      %v2496 = vpop.f32.mrb[0].mxu0
      %v2497 = vadd.f32 0.0, %v2496
      %v2498 = vpop.f32.mrb[0].mxu0
      %v2499 = vpop.f32.mrb[0].mxu0
      %v2500 = vadd.f32 0.0, %v2499
      %v2501 = vpop.f32.mrb[0].mxu0
      %2502 = vdwg.mxu0
      %v2503 = vadd.f32 %v2296, %v2377
      %v2504 = vadd.f32 %v2297, %v2380
      %v2505 = vadd.f32 %v2298, %v2385
      %v2506 = vadd.f32 %v2299, %v2388
      %v2507 = vadd.f32 %v2300, %v2393
      %v2508 = vadd.f32 %v2301, %v2396
      %v2509 = vadd.f32 %v2302, %v2401
      %v2510 = vadd.f32 %v2303, %v2404
      %v2511 = vadd.f32 %v2304, %v2409
      %v2512 = vadd.f32 %v2305, %v2412
      %v2513 = vadd.f32 %v2306, %v2417
      %v2514 = vadd.f32 %v2307, %v2420
      %v2515 = vadd.f32 %v2308, %v2425
      %v2516 = vadd.f32 %v2309, %v2428
      %v2517 = vadd.f32 %v2310, %v2433
      %v2518 = vadd.f32 %v2311, %v2436
      %v2519 = vadd.f32 %v2312, %v2441
      %v2520 = vadd.f32 %v2313, %v2444
      %v2521 = vadd.f32 %v2314, %v2449
      %v2522 = vadd.f32 %v2315, %v2452
      %v2523 = vadd.f32 %v2316, %v2457
      %v2524 = vadd.f32 %v2317, %v2460
      %v2525 = vadd.f32 %v2318, %v2465
      %v2526 = vadd.f32 %v2319, %v2468
      %v2527 = vadd.f32 %v2320, %v2473
      %v2528 = vadd.f32 %v2321, %v2476
      %v2529 = vadd.f32 %v2322, %v2481
      %v2530 = vadd.f32 %v2323, %v2484
      %v2531 = vadd.f32 %v2324, %v2489
      %v2532 = vadd.f32 %v2325, %v2492
      %v2533 = vadd.f32 %v2326, %v2497
      %v2534 = vadd.f32 %v2327, %v2500
      %v2536 = vshrl.u32 %v286, 16
      %v2538 = vrot.slane %v2536, 4
      %v2539 = vshll.u32 %v286, 16
      %v2541 = vrot.slane %v2539, 5
      %v2542 = vor.u32 %v2538, %v2541
      %v2543 = vrot.slane %v2542, 4
      %v2545 = vshll.u32 %v287, 16
      %v2547 = vrot.slane %v2545, 5
      %v2548 = vsel %vm309, %v2543, %v2547
      %v2549 = vshrl.u32 %v287, 16
      %v2551 = vrot.slane %v2549, 4
      %v2552 = vor.u32 %v2551, %v2547
      %v2553 = vrot.slane %v2552, 4
      %v2555 = vshll.u32 %v288, 16
      %v2557 = vrot.slane %v2555, 5
      %v2558 = vsel %vm309, %v2553, %v2557
      %v2559 = vunpack.c.l.b16 %v2548
      %v2560 = vunpack.c.l.b16 %v2558
      %v2561 = vpack.c.b16 %v2560, %v2559
      %v2564 = vunpack.c.l.b16 %v303
      %v2565 = vunpack.c.l.b16 %v304
      %v2566 = vpack.c.b16 %v2565, %v2564
      %v2569 = vsel %vm748, %v2561, 0
      %2571 = vmatprep.subr.bf16.mxu0 0
      %2572 = vmatpush1.bf16.msra.mxu0 %v2566
      %2573 = vmatprep.subr.bf16.mxu0 0
      %2574 = vmatpush1.bf16.msra.mxu0 0
      %2575 = vmatprep.subr.bf16.mxu0 0
      %2576 = vmatpush1.bf16.msra.mxu0 0
      %2577 = vmatprep.subr.bf16.mxu0 0
      %2578 = vmatpush1.bf16.msra.mxu0 0
      %2579 = vmatprep.subr.bf16.mxu0 0
      %2580 = vmatpush1.bf16.msra.mxu0 0
      %2581 = vmatprep.subr.bf16.mxu0 0
      %2582 = vmatpush1.bf16.msra.mxu0 0
      %2583 = vmatprep.subr.bf16.mxu0 0
      %2584 = vmatpush1.bf16.msra.mxu0 0
      %2585 = vmatprep.subr.bf16.mxu0 0
      %2586 = vmatpush1.bf16.msra.mxu0 0
      %2587 = vmatprep.subr.bf16.mxu0 0
      %2588 = vmatpush1.bf16.msra.mxu0 0
      %2589 = vmatprep.subr.bf16.mxu0 0
      %2590 = vmatpush1.bf16.msra.mxu0 0
      %2591 = vmatprep.subr.bf16.mxu0 0
      %2592 = vmatpush1.bf16.msra.mxu0 0
      %2593 = vmatprep.subr.bf16.mxu0 0
      %2594 = vmatpush1.bf16.msra.mxu0 0
      %2595 = vmatprep.subr.bf16.mxu0 0
      %2596 = vmatpush1.bf16.msra.mxu0 0
      %2597 = vmatprep.subr.bf16.mxu0 0
      %2598 = vmatpush1.bf16.msra.mxu0 0
      %2599 = vmatprep.subr.bf16.mxu0 0
      %2600 = vmatpush1.bf16.msra.mxu0 0
      %2601 = vmatprep.subr.bf16.mxu0 0
      %2602 = vmatpush1.bf16.msra.mxu0 0
      %2603 = vmatprep.mubr.bf16.mxu0 0
      %2604 = vmatmul.mubr.bf16.gmra.mrb[0].mxu0 %v756
      %v2605 = vpop.f32.mrb[0].mxu0
      %v2606 = vadd.f32 0.0, %v2605
      %v2607 = vpop.f32.mrb[0].mxu0
      %v2608 = vpop.f32.mrb[0].mxu0
      %v2609 = vadd.f32 0.0, %v2608
      %v2610 = vpop.f32.mrb[0].mxu0
      %2611 = vmatprep.mubr.bf16.mxu0 0
      %2612 = vmatmul.mubr.bf16.gmra.mrb[0].mxu0 %v759
      %v2613 = vpop.f32.mrb[0].mxu0
      %v2614 = vadd.f32 0.0, %v2613
      %v2615 = vpop.f32.mrb[0].mxu0
      %v2616 = vpop.f32.mrb[0].mxu0
      %v2617 = vadd.f32 0.0, %v2616
      %v2618 = vpop.f32.mrb[0].mxu0
      %2619 = vmatprep.mubr.bf16.mxu0 0
      %2620 = vmatmul.mubr.bf16.gmra.mrb[0].mxu0 %v762
      %v2621 = vpop.f32.mrb[0].mxu0
      %v2622 = vadd.f32 0.0, %v2621
      %v2623 = vpop.f32.mrb[0].mxu0
      %v2624 = vpop.f32.mrb[0].mxu0
      %v2625 = vadd.f32 0.0, %v2624
      %v2626 = vpop.f32.mrb[0].mxu0
      %2627 = vmatprep.mubr.bf16.mxu0 0
      %2628 = vmatmul.mubr.bf16.gmra.mrb[0].mxu0 %v765
      %v2629 = vpop.f32.mrb[0].mxu0
      %v2630 = vadd.f32 0.0, %v2629
      %v2631 = vpop.f32.mrb[0].mxu0
      %v2632 = vpop.f32.mrb[0].mxu0
      %v2633 = vadd.f32 0.0, %v2632
      %v2634 = vpop.f32.mrb[0].mxu0
      %2635 = vmatprep.mubr.bf16.mxu0 0
      %2636 = vmatmul.mubr.bf16.gmra.mrb[0].mxu0 %v768
      %v2637 = vpop.f32.mrb[0].mxu0
      %v2638 = vadd.f32 0.0, %v2637
      %v2639 = vpop.f32.mrb[0].mxu0
      %v2640 = vpop.f32.mrb[0].mxu0
      %v2641 = vadd.f32 0.0, %v2640
      %v2642 = vpop.f32.mrb[0].mxu0
      %2643 = vmatprep.mubr.bf16.mxu0 0
      %2644 = vmatmul.mubr.bf16.gmra.mrb[0].mxu0 %v771
      %v2645 = vpop.f32.mrb[0].mxu0
      %v2646 = vadd.f32 0.0, %v2645
      %v2647 = vpop.f32.mrb[0].mxu0
      %v2648 = vpop.f32.mrb[0].mxu0
      %v2649 = vadd.f32 0.0, %v2648
      %v2650 = vpop.f32.mrb[0].mxu0
      %2651 = vmatprep.mubr.bf16.mxu0 0
      %2652 = vmatmul.mubr.bf16.gmra.mrb[0].mxu0 %v774
      %v2653 = vpop.f32.mrb[0].mxu0
      %v2654 = vadd.f32 0.0, %v2653
      %v2655 = vpop.f32.mrb[0].mxu0
      %v2656 = vpop.f32.mrb[0].mxu0
      %v2657 = vadd.f32 0.0, %v2656
      %v2658 = vpop.f32.mrb[0].mxu0
      %2659 = vmatprep.mubr.bf16.mxu0 0
      %2660 = vmatmul.mubr.bf16.gmra.mrb[0].mxu0 %v777
      %v2661 = vpop.f32.mrb[0].mxu0
      %v2662 = vadd.f32 0.0, %v2661
      %v2663 = vpop.f32.mrb[0].mxu0
      %v2664 = vpop.f32.mrb[0].mxu0
      %v2665 = vadd.f32 0.0, %v2664
      %v2666 = vpop.f32.mrb[0].mxu0
      %2667 = vmatprep.mubr.bf16.mxu0 0
      %2668 = vmatmul.mubr.bf16.gmra.mrb[0].mxu0 %v780
      %v2669 = vpop.f32.mrb[0].mxu0
      %v2670 = vadd.f32 0.0, %v2669
      %v2671 = vpop.f32.mrb[0].mxu0
      %v2672 = vpop.f32.mrb[0].mxu0
      %v2673 = vadd.f32 0.0, %v2672
      %v2674 = vpop.f32.mrb[0].mxu0
      %2675 = vmatprep.mubr.bf16.mxu0 0
      %2676 = vmatmul.mubr.bf16.gmra.mrb[0].mxu0 %v783
      %v2677 = vpop.f32.mrb[0].mxu0
      %v2678 = vadd.f32 0.0, %v2677
      %v2679 = vpop.f32.mrb[0].mxu0
      %v2680 = vpop.f32.mrb[0].mxu0
      %v2681 = vadd.f32 0.0, %v2680
      %v2682 = vpop.f32.mrb[0].mxu0
      %2683 = vmatprep.mubr.bf16.mxu0 0
      %2684 = vmatmul.mubr.bf16.gmra.mrb[0].mxu0 %v786
      %v2685 = vpop.f32.mrb[0].mxu0
      %v2686 = vadd.f32 0.0, %v2685
      %v2687 = vpop.f32.mrb[0].mxu0
      %v2688 = vpop.f32.mrb[0].mxu0
      %v2689 = vadd.f32 0.0, %v2688
      %v2690 = vpop.f32.mrb[0].mxu0
      %2691 = vmatprep.mubr.bf16.mxu0 0
      %2692 = vmatmul.mubr.bf16.gmra.mrb[0].mxu0 %v789
      %v2693 = vpop.f32.mrb[0].mxu0
      %v2694 = vadd.f32 0.0, %v2693
      %v2695 = vpop.f32.mrb[0].mxu0
      %v2696 = vpop.f32.mrb[0].mxu0
      %v2697 = vadd.f32 0.0, %v2696
      %v2698 = vpop.f32.mrb[0].mxu0
      %2699 = vmatprep.mubr.bf16.mxu0 0
      %2700 = vmatmul.mubr.bf16.gmra.mrb[0].mxu0 %v792
      %v2701 = vpop.f32.mrb[0].mxu0
      %v2702 = vadd.f32 0.0, %v2701
      %v2703 = vpop.f32.mrb[0].mxu0
      %v2704 = vpop.f32.mrb[0].mxu0
      %v2705 = vadd.f32 0.0, %v2704
      %v2706 = vpop.f32.mrb[0].mxu0
      %2707 = vmatprep.mubr.bf16.mxu0 0
      %2708 = vmatmul.mubr.bf16.gmra.mrb[0].mxu0 %v795
      %v2709 = vpop.f32.mrb[0].mxu0
      %v2710 = vadd.f32 0.0, %v2709
      %v2711 = vpop.f32.mrb[0].mxu0
      %v2712 = vpop.f32.mrb[0].mxu0
      %v2713 = vadd.f32 0.0, %v2712
      %v2714 = vpop.f32.mrb[0].mxu0
      %2715 = vmatprep.mubr.bf16.mxu0 0
      %2716 = vmatmul.mubr.bf16.gmra.mrb[0].mxu0 %v1920
      %v2717 = vpop.f32.mrb[0].mxu0
      %v2718 = vadd.f32 0.0, %v2717
      %v2719 = vpop.f32.mrb[0].mxu0
      %v2720 = vpop.f32.mrb[0].mxu0
      %v2721 = vadd.f32 0.0, %v2720
      %v2722 = vpop.f32.mrb[0].mxu0
      %2723 = vmatprep.mubr.bf16.mxu0 0
      %2724 = vmatmul.mubr.bf16.gmra.mrb[0].mxu0 %v2569
      %v2725 = vpop.f32.mrb[0].mxu0
      %v2726 = vadd.f32 0.0, %v2725
      %v2727 = vpop.f32.mrb[0].mxu0
      %v2728 = vpop.f32.mrb[0].mxu0
      %v2729 = vadd.f32 0.0, %v2728
      %v2730 = vpop.f32.mrb[0].mxu0
      %2731 = vdwg.mxu0
      %v2732 = vadd.f32 %v2503, %v2606
      %v2733 = vadd.f32 %v2504, %v2609
      %v2734 = vadd.f32 %v2505, %v2614
      %v2735 = vadd.f32 %v2506, %v2617
      %v2736 = vadd.f32 %v2507, %v2622
      %v2737 = vadd.f32 %v2508, %v2625
      %v2738 = vadd.f32 %v2509, %v2630
      %v2739 = vadd.f32 %v2510, %v2633
      %v2740 = vadd.f32 %v2511, %v2638
      %v2741 = vadd.f32 %v2512, %v2641
      %v2742 = vadd.f32 %v2513, %v2646
      %v2743 = vadd.f32 %v2514, %v2649
      %v2744 = vadd.f32 %v2515, %v2654
      %v2745 = vadd.f32 %v2516, %v2657
      %v2746 = vadd.f32 %v2517, %v2662
      %v2747 = vadd.f32 %v2518, %v2665
      %v2748 = vadd.f32 %v2519, %v2670
      %v2749 = vadd.f32 %v2520, %v2673
      %v2750 = vadd.f32 %v2521, %v2678
      %v2751 = vadd.f32 %v2522, %v2681
      %v2752 = vadd.f32 %v2523, %v2686
      %v2753 = vadd.f32 %v2524, %v2689
      %v2754 = vadd.f32 %v2525, %v2694
      %v2755 = vadd.f32 %v2526, %v2697
      %v2756 = vadd.f32 %v2527, %v2702
      %v2757 = vadd.f32 %v2528, %v2705
      %v2758 = vadd.f32 %v2529, %v2710
      %v2759 = vadd.f32 %v2530, %v2713
      %v2760 = vadd.f32 %v2531, %v2718
      %v2761 = vadd.f32 %v2532, %v2721
      %v2762 = vadd.f32 %v2533, %v2726
      %v2763 = vadd.f32 %v2534, %v2729
      %v2765 = vrot.slane %v286, 5
      %v2766 = vrot.slane %v2765, 4
      %v2767 = vrot.slane %v287, 5
      %v2768 = vsel %vm1271, %v2766, %v2767
      %v2769 = vrot.slane %v2767, 4
      %v2770 = vrot.slane %v288, 5
      %v2771 = vsel %vm1271, %v2769, %v2770
      %v2772 = vunpack.c.l.b16 %v2768
      %v2773 = vunpack.c.l.b16 %v2771
      %v2774 = vpack.c.b16 %v2773, %v2772
      %v2777 = vunpack.c.l.b16 %v305
      %v2778 = vunpack.c.l.b16 %v306
      %v2779 = vpack.c.b16 %v2778, %v2777
      %v2782 = vsel %vm748, %v2774, 0
      %2784 = vmatprep.subr.bf16.mxu0 0
      %2785 = vmatpush1.bf16.msra.mxu0 %v2779
      %2786 = vmatprep.subr.bf16.mxu0 0
      %2787 = vmatpush1.bf16.msra.mxu0 0
      %2788 = vmatprep.subr.bf16.mxu0 0
      %2789 = vmatpush1.bf16.msra.mxu0 0
      %2790 = vmatprep.subr.bf16.mxu0 0
      %2791 = vmatpush1.bf16.msra.mxu0 0
      %2792 = vmatprep.subr.bf16.mxu0 0
      %2793 = vmatpush1.bf16.msra.mxu0 0
      %2794 = vmatprep.subr.bf16.mxu0 0
      %2795 = vmatpush1.bf16.msra.mxu0 0
      %2796 = vmatprep.subr.bf16.mxu0 0
      %2797 = vmatpush1.bf16.msra.mxu0 0
      %2798 = vmatprep.subr.bf16.mxu0 0
      %2799 = vmatpush1.bf16.msra.mxu0 0
      %2800 = vmatprep.subr.bf16.mxu0 0
      %2801 = vmatpush1.bf16.msra.mxu0 0
      %2802 = vmatprep.subr.bf16.mxu0 0
      %2803 = vmatpush1.bf16.msra.mxu0 0
      %2804 = vmatprep.subr.bf16.mxu0 0
      %2805 = vmatpush1.bf16.msra.mxu0 0
      %2806 = vmatprep.subr.bf16.mxu0 0
      %2807 = vmatpush1.bf16.msra.mxu0 0
      %2808 = vmatprep.subr.bf16.mxu0 0
      %2809 = vmatpush1.bf16.msra.mxu0 0
      %2810 = vmatprep.subr.bf16.mxu0 0
      %2811 = vmatpush1.bf16.msra.mxu0 0
      %2812 = vmatprep.subr.bf16.mxu0 0
      %2813 = vmatpush1.bf16.msra.mxu0 0
      %2814 = vmatprep.subr.bf16.mxu0 0
      %2815 = vmatpush1.bf16.msra.mxu0 0
      %2816 = vmatprep.mubr.bf16.mxu0 0
      %2817 = vmatmul.mubr.bf16.gmra.mrb[0].mxu0 %v1445
      %v2818 = vpop.f32.mrb[0].mxu0
      %v2819 = vadd.f32 0.0, %v2818
      %v2820 = vpop.f32.mrb[0].mxu0
      %v2821 = vpop.f32.mrb[0].mxu0
      %v2822 = vadd.f32 0.0, %v2821
      %v2823 = vpop.f32.mrb[0].mxu0
      %2824 = vmatprep.mubr.bf16.mxu0 0
      %2825 = vmatmul.mubr.bf16.gmra.mrb[0].mxu0 %v1448
      %v2826 = vpop.f32.mrb[0].mxu0
      %v2827 = vadd.f32 0.0, %v2826
      %v2828 = vpop.f32.mrb[0].mxu0
      %v2829 = vpop.f32.mrb[0].mxu0
      %v2830 = vadd.f32 0.0, %v2829
      %v2831 = vpop.f32.mrb[0].mxu0
      %2832 = vmatprep.mubr.bf16.mxu0 0
      %2833 = vmatmul.mubr.bf16.gmra.mrb[0].mxu0 %v1451
      %v2834 = vpop.f32.mrb[0].mxu0
      %v2835 = vadd.f32 0.0, %v2834
      %v2836 = vpop.f32.mrb[0].mxu0
      %v2837 = vpop.f32.mrb[0].mxu0
      %v2838 = vadd.f32 0.0, %v2837
      %v2839 = vpop.f32.mrb[0].mxu0
      %2840 = vmatprep.mubr.bf16.mxu0 0
      %2841 = vmatmul.mubr.bf16.gmra.mrb[0].mxu0 %v1454
      %v2842 = vpop.f32.mrb[0].mxu0
      %v2843 = vadd.f32 0.0, %v2842
      %v2844 = vpop.f32.mrb[0].mxu0
      %v2845 = vpop.f32.mrb[0].mxu0
      %v2846 = vadd.f32 0.0, %v2845
      %v2847 = vpop.f32.mrb[0].mxu0
      %2848 = vmatprep.mubr.bf16.mxu0 0
      %2849 = vmatmul.mubr.bf16.gmra.mrb[0].mxu0 %v1457
      %v2850 = vpop.f32.mrb[0].mxu0
      %v2851 = vadd.f32 0.0, %v2850
      %v2852 = vpop.f32.mrb[0].mxu0
      %v2853 = vpop.f32.mrb[0].mxu0
      %v2854 = vadd.f32 0.0, %v2853
      %v2855 = vpop.f32.mrb[0].mxu0
      %2856 = vmatprep.mubr.bf16.mxu0 0
      %2857 = vmatmul.mubr.bf16.gmra.mrb[0].mxu0 %v1460
      %v2858 = vpop.f32.mrb[0].mxu0
      %v2859 = vadd.f32 0.0, %v2858
      %v2860 = vpop.f32.mrb[0].mxu0
      %v2861 = vpop.f32.mrb[0].mxu0
      %v2862 = vadd.f32 0.0, %v2861
      %v2863 = vpop.f32.mrb[0].mxu0
      %2864 = vmatprep.mubr.bf16.mxu0 0
      %2865 = vmatmul.mubr.bf16.gmra.mrb[0].mxu0 %v1463
      %v2866 = vpop.f32.mrb[0].mxu0
      %v2867 = vadd.f32 0.0, %v2866
      %v2868 = vpop.f32.mrb[0].mxu0
      %v2869 = vpop.f32.mrb[0].mxu0
      %v2870 = vadd.f32 0.0, %v2869
      %v2871 = vpop.f32.mrb[0].mxu0
      %2872 = vmatprep.mubr.bf16.mxu0 0
      %2873 = vmatmul.mubr.bf16.gmra.mrb[0].mxu0 %v1466
      %v2874 = vpop.f32.mrb[0].mxu0
      %v2875 = vadd.f32 0.0, %v2874
      %v2876 = vpop.f32.mrb[0].mxu0
      %v2877 = vpop.f32.mrb[0].mxu0
      %v2878 = vadd.f32 0.0, %v2877
      %v2879 = vpop.f32.mrb[0].mxu0
      %2880 = vmatprep.mubr.bf16.mxu0 0
      %2881 = vmatmul.mubr.bf16.gmra.mrb[0].mxu0 %v1469
      %v2882 = vpop.f32.mrb[0].mxu0
      %v2883 = vadd.f32 0.0, %v2882
      %v2884 = vpop.f32.mrb[0].mxu0
      %v2885 = vpop.f32.mrb[0].mxu0
      %v2886 = vadd.f32 0.0, %v2885
      %v2887 = vpop.f32.mrb[0].mxu0
      %2888 = vmatprep.mubr.bf16.mxu0 0
      %2889 = vmatmul.mubr.bf16.gmra.mrb[0].mxu0 %v1472
      %v2890 = vpop.f32.mrb[0].mxu0
      %v2891 = vadd.f32 0.0, %v2890
      %v2892 = vpop.f32.mrb[0].mxu0
      %v2893 = vpop.f32.mrb[0].mxu0
      %v2894 = vadd.f32 0.0, %v2893
      %v2895 = vpop.f32.mrb[0].mxu0
      %2896 = vmatprep.mubr.bf16.mxu0 0
      %2897 = vmatmul.mubr.bf16.gmra.mrb[0].mxu0 %v1475
      %v2898 = vpop.f32.mrb[0].mxu0
      %v2899 = vadd.f32 0.0, %v2898
      %v2900 = vpop.f32.mrb[0].mxu0
      %v2901 = vpop.f32.mrb[0].mxu0
      %v2902 = vadd.f32 0.0, %v2901
      %v2903 = vpop.f32.mrb[0].mxu0
      %2904 = vmatprep.mubr.bf16.mxu0 0
      %2905 = vmatmul.mubr.bf16.gmra.mrb[0].mxu0 %v1478
      %v2906 = vpop.f32.mrb[0].mxu0
      %v2907 = vadd.f32 0.0, %v2906
      %v2908 = vpop.f32.mrb[0].mxu0
      %v2909 = vpop.f32.mrb[0].mxu0
      %v2910 = vadd.f32 0.0, %v2909
      %v2911 = vpop.f32.mrb[0].mxu0
      %2912 = vmatprep.mubr.bf16.mxu0 0
      %2913 = vmatmul.mubr.bf16.gmra.mrb[0].mxu0 %v1481
      %v2914 = vpop.f32.mrb[0].mxu0
      %v2915 = vadd.f32 0.0, %v2914
      %v2916 = vpop.f32.mrb[0].mxu0
      %v2917 = vpop.f32.mrb[0].mxu0
      %v2918 = vadd.f32 0.0, %v2917
      %v2919 = vpop.f32.mrb[0].mxu0
      %2920 = vmatprep.mubr.bf16.mxu0 0
      %2921 = vmatmul.mubr.bf16.gmra.mrb[0].mxu0 %v1484
      %v2922 = vpop.f32.mrb[0].mxu0
      %v2923 = vadd.f32 0.0, %v2922
      %v2924 = vpop.f32.mrb[0].mxu0
      %v2925 = vpop.f32.mrb[0].mxu0
      %v2926 = vadd.f32 0.0, %v2925
      %v2927 = vpop.f32.mrb[0].mxu0
      %2928 = vmatprep.mubr.bf16.mxu0 0
      %2929 = vmatmul.mubr.bf16.gmra.mrb[0].mxu0 %v2133
      %v2930 = vpop.f32.mrb[0].mxu0
      %v2931 = vadd.f32 0.0, %v2930
      %v2932 = vpop.f32.mrb[0].mxu0
      %v2933 = vpop.f32.mrb[0].mxu0
      %v2934 = vadd.f32 0.0, %v2933
      %v2935 = vpop.f32.mrb[0].mxu0
      %2936 = vmatprep.mubr.bf16.mxu0 0
      %2937 = vmatmul.mubr.bf16.gmra.mrb[0].mxu0 %v2782
      %v2938 = vpop.f32.mrb[0].mxu0
      %v2939 = vadd.f32 0.0, %v2938
      %v2940 = vpop.f32.mrb[0].mxu0
      %v2941 = vpop.f32.mrb[0].mxu0
      %v2942 = vadd.f32 0.0, %v2941
      %v2943 = vpop.f32.mrb[0].mxu0
      %2944 = vdwg.mxu0
      %v2945 = vadd.f32 %v2732, %v2819
      %v2946 = vadd.f32 %v2733, %v2822
      %v2947 = vadd.f32 %v2734, %v2827
      %v2948 = vadd.f32 %v2735, %v2830
      %v2949 = vadd.f32 %v2736, %v2835
      %v2950 = vadd.f32 %v2737, %v2838
      %v2951 = vadd.f32 %v2738, %v2843
      %v2952 = vadd.f32 %v2739, %v2846
      %v2953 = vadd.f32 %v2740, %v2851
      %v2954 = vadd.f32 %v2741, %v2854
      %v2955 = vadd.f32 %v2742, %v2859
      %v2956 = vadd.f32 %v2743, %v2862
      %v2957 = vadd.f32 %v2744, %v2867
      %v2958 = vadd.f32 %v2745, %v2870
      %v2959 = vadd.f32 %v2746, %v2875
      %v2960 = vadd.f32 %v2747, %v2878
      %v2961 = vadd.f32 %v2748, %v2883
      %v2962 = vadd.f32 %v2749, %v2886
      %v2963 = vadd.f32 %v2750, %v2891
      %v2964 = vadd.f32 %v2751, %v2894
      %v2965 = vadd.f32 %v2752, %v2899
      %v2966 = vadd.f32 %v2753, %v2902
      %v2967 = vadd.f32 %v2754, %v2907
      %v2968 = vadd.f32 %v2755, %v2910
      %v2969 = vadd.f32 %v2756, %v2915
      %v2970 = vadd.f32 %v2757, %v2918
      %v2971 = vadd.f32 %v2758, %v2923
      %v2972 = vadd.f32 %v2759, %v2926
      %v2973 = vadd.f32 %v2760, %v2931
      %v2974 = vadd.f32 %v2761, %v2934
      %v2975 = vadd.f32 %v2762, %v2939
      %v2976 = vadd.f32 %v2763, %v2942
      %v2977 = vld [vmem:[%s2] sm:$0x1]
      %v2979 = vlaneseq
      %v2980 = vshrl.u32 %v2979, 7
      %v2981 = vsub.s32 0, %v2980
      %v2982 = vrot.slane %v2977, %v2981
      %v2984 = vmul.f32 %v2945, %v2982
      %v2985 = vmul.f32 %v2946, %v2982
      %v2986 = vmul.f32 %v2947, %v2982
      %v2987 = vmul.f32 %v2948, %v2982
      %v2988 = vmul.f32 %v2949, %v2982
      %v2989 = vmul.f32 %v2950, %v2982
      %v2990 = vmul.f32 %v2951, %v2982
      %v2991 = vmul.f32 %v2952, %v2982
      %v2992 = vmul.f32 %v2953, %v2982
      %v2993 = vmul.f32 %v2954, %v2982
      %v2994 = vmul.f32 %v2955, %v2982
      %v2995 = vmul.f32 %v2956, %v2982
      %v2996 = vmul.f32 %v2957, %v2982
      %v2997 = vmul.f32 %v2958, %v2982
      %v2998 = vmul.f32 %v2959, %v2982
      %v2999 = vmul.f32 %v2960, %v2982
      %v3000 = vmul.f32 %v2961, %v2982
      %v3001 = vmul.f32 %v2962, %v2982
      %v3002 = vmul.f32 %v2963, %v2982
      %v3003 = vmul.f32 %v2964, %v2982
      %v3004 = vmul.f32 %v2965, %v2982
      %v3005 = vmul.f32 %v2966, %v2982
      %v3006 = vmul.f32 %v2967, %v2982
      %v3007 = vmul.f32 %v2968, %v2982
      %v3008 = vmul.f32 %v2969, %v2982
      %v3009 = vmul.f32 %v2970, %v2982
      %v3010 = vmul.f32 %v2971, %v2982
      %v3011 = vmul.f32 %v2972, %v2982
      %v3012 = vmul.f32 %v2973, %v2982
      %v3013 = vmul.f32 %v2974, %v2982
      %v3014 = vmul.f32 %v2975, %v2982
      %v3015 = vmul.f32 %v2976, %v2982
      %v3016 = vld [vmem:[%s3] sm:$0x1]
      %v3018 = vlaneseq
      %v3019 = vshrl.u32 %v3018, 7
      %v3020 = vsub.s32 0, %v3019
      %v3021 = vrot.slane %v3016, %v3020
      %v3023 = vadd.f32 %v2984, %v3021
      %v3024 = vadd.f32 %v2985, %v3021
      %v3025 = vadd.f32 %v2986, %v3021
      %v3026 = vadd.f32 %v2987, %v3021
      %v3027 = vadd.f32 %v2988, %v3021
      %v3028 = vadd.f32 %v2989, %v3021
      %v3029 = vadd.f32 %v2990, %v3021
      %v3030 = vadd.f32 %v2991, %v3021
      %v3031 = vadd.f32 %v2992, %v3021
      %v3032 = vadd.f32 %v2993, %v3021
      %v3033 = vadd.f32 %v2994, %v3021
      %v3034 = vadd.f32 %v2995, %v3021
      %v3035 = vadd.f32 %v2996, %v3021
      %v3036 = vadd.f32 %v2997, %v3021
      %v3037 = vadd.f32 %v2998, %v3021
      %v3038 = vadd.f32 %v2999, %v3021
      %v3039 = vadd.f32 %v3000, %v3021
      %v3040 = vadd.f32 %v3001, %v3021
      %v3041 = vadd.f32 %v3002, %v3021
      %v3042 = vadd.f32 %v3003, %v3021
      %v3043 = vadd.f32 %v3004, %v3021
      %v3044 = vadd.f32 %v3005, %v3021
      %v3045 = vadd.f32 %v3006, %v3021
      %v3046 = vadd.f32 %v3007, %v3021
      %v3047 = vadd.f32 %v3008, %v3021
      %v3048 = vadd.f32 %v3009, %v3021
      %v3049 = vadd.f32 %v3010, %v3021
      %v3050 = vadd.f32 %v3011, %v3021
      %v3051 = vadd.f32 %v3012, %v3021
      %v3052 = vadd.f32 %v3013, %v3021
      %v3053 = vadd.f32 %v3014, %v3021
      %v3054 = vadd.f32 %v3015, %v3021
      %v3055 = vmax.f32 %v3023, 0.0
      %v3056 = vmax.f32 %v3024, 0.0
      %v3057 = vmax.f32 %v3025, 0.0
      %v3058 = vmax.f32 %v3026, 0.0
      %v3059 = vmax.f32 %v3027, 0.0
      %v3060 = vmax.f32 %v3028, 0.0
      %v3061 = vmax.f32 %v3029, 0.0
      %v3062 = vmax.f32 %v3030, 0.0
      %v3063 = vmax.f32 %v3031, 0.0
      %v3064 = vmax.f32 %v3032, 0.0
      %v3065 = vmax.f32 %v3033, 0.0
      %v3066 = vmax.f32 %v3034, 0.0
      %v3067 = vmax.f32 %v3035, 0.0
      %v3068 = vmax.f32 %v3036, 0.0
      %v3069 = vmax.f32 %v3037, 0.0
      %v3070 = vmax.f32 %v3038, 0.0
      %v3071 = vmax.f32 %v3039, 0.0
      %v3072 = vmax.f32 %v3040, 0.0
      %v3073 = vmax.f32 %v3041, 0.0
      %v3074 = vmax.f32 %v3042, 0.0
      %v3075 = vmax.f32 %v3043, 0.0
      %v3076 = vmax.f32 %v3044, 0.0
      %v3077 = vmax.f32 %v3045, 0.0
      %v3078 = vmax.f32 %v3046, 0.0
      %v3079 = vmax.f32 %v3047, 0.0
      %v3080 = vmax.f32 %v3048, 0.0
      %v3081 = vmax.f32 %v3049, 0.0
      %v3082 = vmax.f32 %v3050, 0.0
      %v3083 = vmax.f32 %v3051, 0.0
      %v3084 = vmax.f32 %v3052, 0.0
      %v3085 = vmax.f32 %v3053, 0.0
      %v3086 = vmax.f32 %v3054, 0.0
      %vm3087 = vcmask 261120
      %3088 = vst.msk [vmem:[%s230] sm:$0xff] %vm3087, %v3055
      %3089 = vst.msk [vmem:[%s230 + $0x8] sm:$0xff] %vm3087, %v3056
      %3090 = vst.msk [vmem:[%s230 + $0x10] sm:$0xff] %vm3087, %v3057
      %3091 = vst.msk [vmem:[%s230 + $0x18] sm:$0xff] %vm3087, %v3058
      %3092 = vst.msk [vmem:[%s230 + $0x20] sm:$0xff] %vm3087, %v3059
      %3093 = vst.msk [vmem:[%s230 + $0x28] sm:$0xff] %vm3087, %v3060
      %3094 = vst.msk [vmem:[%s230 + $0x30] sm:$0xff] %vm3087, %v3061
      %3095 = vst.msk [vmem:[%s230 + $0x38] sm:$0xff] %vm3087, %v3062
      %3096 = vst.msk [vmem:[%s230 + $0x40] sm:$0xff] %vm3087, %v3063
      %3097 = vst.msk [vmem:[%s230 + $0x48] sm:$0xff] %vm3087, %v3064
      %3098 = vst.msk [vmem:[%s230 + $0x50] sm:$0xff] %vm3087, %v3065
      %3099 = vst.msk [vmem:[%s230 + $0x58] sm:$0xff] %vm3087, %v3066
      %3100 = vst.msk [vmem:[%s230 + $0x60] sm:$0xff] %vm3087, %v3067
      %3101 = vst.msk [vmem:[%s230 + $0x68] sm:$0xff] %vm3087, %v3068
      %3102 = vst.msk [vmem:[%s230 + $0x70] sm:$0xff] %vm3087, %v3069
      %3103 = vst.msk [vmem:[%s230 + $0x78] sm:$0xff] %vm3087, %v3070
      %3104 = vst.msk [vmem:[%s230 + $0x80] sm:$0xff] %vm3087, %v3071
      %3105 = vst.msk [vmem:[%s230 + $0x88] sm:$0xff] %vm3087, %v3072
      %3106 = vst.msk [vmem:[%s230 + $0x90] sm:$0xff] %vm3087, %v3073
      %3107 = vst.msk [vmem:[%s230 + $0x98] sm:$0xff] %vm3087, %v3074
      %3108 = vst.msk [vmem:[%s230 + $0xa0] sm:$0xff] %vm3087, %v3075
      %3109 = vst.msk [vmem:[%s230 + $0xa8] sm:$0xff] %vm3087, %v3076
      %3110 = vst.msk [vmem:[%s230 + $0xb0] sm:$0xff] %vm3087, %v3077
      %3111 = vst.msk [vmem:[%s230 + $0xb8] sm:$0xff] %vm3087, %v3078
      %3112 = vst.msk [vmem:[%s230 + $0xc0] sm:$0xff] %vm3087, %v3079
      %3113 = vst.msk [vmem:[%s230 + $0xc8] sm:$0xff] %vm3087, %v3080
      %3114 = vst.msk [vmem:[%s230 + $0xd0] sm:$0xff] %vm3087, %v3081
      %3115 = vst.msk [vmem:[%s230 + $0xd8] sm:$0xff] %vm3087, %v3082
      %3116 = vst.msk [vmem:[%s230 + $0xe0] sm:$0xff] %vm3087, %v3083
      %3117 = vst.msk [vmem:[%s230 + $0xe8] sm:$0xff] %vm3087, %v3084
      %3118 = vst.msk [vmem:[%s230 + $0xf0] sm:$0xff] %vm3087, %v3085
      %3119 = vst.msk [vmem:[%s230 + $0xf8] sm:$0xff] %vm3087, %v3086
      %v3120 = vsel %vm3087, %v3055, 0.0
      %v3121 = vsel %vm3087, %v3056, 0.0
      %v3122 = vadd.f32 %v3120, %v3121
      %v3123 = vsel %vm3087, %v3057, 0.0
      %v3124 = vadd.f32 %v3122, %v3123
      %v3125 = vsel %vm3087, %v3058, 0.0
      %v3126 = vadd.f32 %v3124, %v3125
      %v3127 = vsel %vm3087, %v3059, 0.0
      %v3128 = vadd.f32 %v3126, %v3127
      %v3129 = vsel %vm3087, %v3060, 0.0
      %v3130 = vadd.f32 %v3128, %v3129
      %v3131 = vsel %vm3087, %v3061, 0.0
      %v3132 = vadd.f32 %v3130, %v3131
      %v3133 = vsel %vm3087, %v3062, 0.0
      %v3134 = vadd.f32 %v3132, %v3133
      %v3135 = vsel %vm3087, %v3063, 0.0
      %v3136 = vadd.f32 %v3134, %v3135
      %v3137 = vsel %vm3087, %v3064, 0.0
      %v3138 = vadd.f32 %v3136, %v3137
      %v3139 = vsel %vm3087, %v3065, 0.0
      %v3140 = vadd.f32 %v3138, %v3139
      %v3141 = vsel %vm3087, %v3066, 0.0
      %v3142 = vadd.f32 %v3140, %v3141
      %v3143 = vsel %vm3087, %v3067, 0.0
      %v3144 = vadd.f32 %v3142, %v3143
      %v3145 = vsel %vm3087, %v3068, 0.0
      %v3146 = vadd.f32 %v3144, %v3145
      %v3147 = vsel %vm3087, %v3069, 0.0
      %v3148 = vadd.f32 %v3146, %v3147
      %v3149 = vsel %vm3087, %v3070, 0.0
      %v3150 = vadd.f32 %v3148, %v3149
      %v3151 = vsel %vm3087, %v3071, 0.0
      %v3152 = vadd.f32 %v3150, %v3151
      %v3153 = vsel %vm3087, %v3072, 0.0
      %v3154 = vadd.f32 %v3152, %v3153
      %v3155 = vsel %vm3087, %v3073, 0.0
      %v3156 = vadd.f32 %v3154, %v3155
      %v3157 = vsel %vm3087, %v3074, 0.0
      %v3158 = vadd.f32 %v3156, %v3157
      %v3159 = vsel %vm3087, %v3075, 0.0
      %v3160 = vadd.f32 %v3158, %v3159
      %v3161 = vsel %vm3087, %v3076, 0.0
      %v3162 = vadd.f32 %v3160, %v3161
      %v3163 = vsel %vm3087, %v3077, 0.0
      %v3164 = vadd.f32 %v3162, %v3163
      %v3165 = vsel %vm3087, %v3078, 0.0
      %v3166 = vadd.f32 %v3164, %v3165
      %v3167 = vsel %vm3087, %v3079, 0.0
      %v3168 = vadd.f32 %v3166, %v3167
      %v3169 = vsel %vm3087, %v3080, 0.0
      %v3170 = vadd.f32 %v3168, %v3169
      %v3171 = vsel %vm3087, %v3081, 0.0
      %v3172 = vadd.f32 %v3170, %v3171
      %v3173 = vsel %vm3087, %v3082, 0.0
      %v3174 = vadd.f32 %v3172, %v3173
      %v3175 = vsel %vm3087, %v3083, 0.0
      %v3176 = vadd.f32 %v3174, %v3175
      %v3177 = vsel %vm3087, %v3084, 0.0
      %v3178 = vadd.f32 %v3176, %v3177
      %v3179 = vsel %vm3087, %v3085, 0.0
      %v3180 = vadd.f32 %v3178, %v3179
      %v3181 = vsel %vm3087, %v3086, 0.0
      %v3182 = vadd.f32 %v3180, %v3181
      %v3183 = vrot.slane %v3182, 4
      %v3184 = vadd.f32 %v3182, %v3183
      %v3185 = vrot.slane %v3184, 2
      %v3186 = vadd.f32 %v3184, %v3185
      %v3187 = vrot.slane %v3186, 1
      %v3188 = vadd.f32 %v3186, %v3187
      %vm3189 = vcmask 253952
      %3190 = vst.msk [vmem:[%s233] sm:$0x1] %vm3189, %v3188
      %p3191 = scmp.lt.s32.totalorder %s17, 1
      %s3192 = scalar_select %p3191, %s17, 1
      %s3193 = smul.addr %s3192, 32
      %s3194 = smul.addr %s3193, 8
      %s3195 = scalar_lea.vmem %s4, %s3194
      %p3196 = scmp.lt.s32.totalorder %s17, 1
      %s3197 = scalar_select %p3196, %s17, 1
      %s3198 = scalar_lea.vmem %s5, %s3197
      // Predicated region
      $region37: #{attention_refinement_forward.2} parent=35 // pred_check
        %p3199 = pneg %p124
      $region38: #{attention_refinement_forward.2} parent=35 // pred_check_branch
        %3201 = sbr.rel (%p3199) target = $region40
      $region39: #{attention_refinement_forward.2} parent=35 // pred_region
        _
      $region40: #{attention_refinement_forward.2} parent=35 // pred_fallthru
        _
      // Predicated region
      $region41: #{attention_refinement_forward.2} parent=35 // pred_check
        %p3202 = pneg %p150
      $region42: #{attention_refinement_forward.2} parent=35 // pred_check_branch
        %3204 = sbr.rel (%p3202) target = $region44
      $region43: #{attention_refinement_forward.2} parent=35 // pred_region
        _
      $region44: #{attention_refinement_forward.2} parent=35 // pred_fallthru
        _
    $region36: #{attention_refinement_forward.2} parent=5 // pred_fallthru
      _
    %p3205 = scmp.le.s32.totalorder 2, %s12
    // Predicated region
    $region45: #{attention_refinement_forward.2} parent=5 // pred_check
      %p3206 = pneg %p3205
    $region46: #{attention_refinement_forward.2} parent=5 // pred_check_branch
      %3208 = sbr.rel (%p3206) target = $region48
    $region47: #{attention_refinement_forward.2} parent=5 // pred_region
      %s3209 = ssub.s32 %s12, 2
      // Predicated region
      $region49: #{attention_refinement_forward.2} parent=47 // pred_check
        %p3210 = pneg %p130
      $region50: #{attention_refinement_forward.2} parent=47 // pred_check_branch
        %3212 = sbr.rel (%p3210) target = $region52
      $region51: #{attention_refinement_forward.2} parent=47 // pred_region
        %p3213 = scmp.lt.s32.totalorder %s18, 1
        %s3214 = scalar_select %p3213, %s18, 1
        %s3215 = smul.addr %s3214, 32
        %s3216 = smul.addr %s3215, 8
        %s3217 = scalar_lea.vmem %s4, %s3216
      $region52: #{attention_refinement_forward.2} parent=47 // pred_fallthru
        _
      // Predicated region
      $region53: #{attention_refinement_forward.2} parent=47 // pred_check
        %p3218 = pneg %p156
      $region54: #{attention_refinement_forward.2} parent=47 // pred_check_branch
        %3220 = sbr.rel (%p3218) target = $region56
      $region55: #{attention_refinement_forward.2} parent=47 // pred_region
        %p3221 = scmp.lt.s32.totalorder %s18, 1
        %s3222 = scalar_select %p3221, %s18, 1
        %s3223 = scalar_lea.vmem %s5, %s3222
      $region56: #{attention_refinement_forward.2} parent=47 // pred_fallthru
        _
    $region48: #{attention_refinement_forward.2} parent=5 // pred_fallthru
      _
  $region6: #{attention_refinement_forward.2} parent=0 // loop_footer
    %s16 = sadd.s32 1, %s12
  $region7: #{attention_refinement_forward.2} parent=0 // loop_footer_branch
    %11 = sbr.rel target = $region3
  $region8: #{attention_refinement_forward.2} parent=0 // loop_exit
    _

</llo_original>
